<compile_context>
chip_gen: v7x
topology: tpu7x:2x2x1
jax: 0.10.0
libtpu: 0.0.40
codegen_flags: <defaults>
</compile_context>

<pallas_src>
import jax
import jax.numpy as jnp
from jax.experimental import pallas as pl
from jax.experimental.pallas import tpu as pltpu

# ----------------------- small, deterministic config -----------------------
B = 2              # batch size
S = 8              # max sentence length
LC = 5             # max chars per word
WORD_VOCAB = 50
CHAR_VOCAB = 20
WORD_EMB = 32      # args.word_emb_dim
CHAR_EMB = 16
CHAR_HID = 16      # args.char_hidden_dim
HIDDEN = 32        # args.hidden_dim (bilstm: per-direction = HIDDEN // 2)
H_DIR = HIDDEN // 2                 # 16
GATES = 4 * 2 * H_DIR               # 128 = 4 gates x 2 directions (one vreg of lanes)
D_IN = WORD_EMB + CHAR_HID          # 48 = BiLSTMCRF input size
L_TAGS = 6         # data.llabelset_size (bottom layer tagset)
H_TAGS = 4         # data.hlabelset_size (high layer tagset)
TAG_PAD = 128      # lane-dense padded tag dimension for kernel outputs

_VMEM = pl.BlockSpec(memory_space=pltpu.MemorySpace.VMEM)


# --------------------------- in-kernel BiLSTM body ---------------------------
def _bilstm_tagger(x_bf, maskp, wihf, wihb, bias, whh, woutf, woutb, bout):
    """Fused fwd+bwd LSTM recurrence + hidden2tag, fully unrolled over S.

    x_bf       : (S*B, D) bf16, seq-major flattened input
    maskp      : (S*B, 2*H_DIR) f32, per-step packed [fwd mask | bwd mask(rev)]
    wihf/wihb  : (D, 128) bf16, input->gate weights in packed gate-column layout
    whh        : (2*H_DIR, 128) bf16, block-structured hidden->gate weights
    woutf/woutb: (H_DIR, TAG_PAD) bf16 hidden2tag weights (lane padded)
    bias/bout  : f32 biases; pad lanes of bout are -1e9
    returns (S*B, TAG_PAD) f32 logits.
    """
    H2 = 2 * H_DIR
    # Hoisted input projection: one matmul per direction, outside the loop.
    gx_f = jnp.dot(x_bf, wihf, preferred_element_type=jnp.float32) + bias
    gx_b = jnp.dot(x_bf, wihb, preferred_element_type=jnp.float32)

    h = jnp.zeros((B, H2), jnp.float32)   # packed [h_fwd | h_bwd]
    c = jnp.zeros((B, H2), jnp.float32)
    h_hist = []
    for t in range(S):                    # static unroll: fwd step t, bwd step S-1-t
        tb = S - 1 - t
        g = (gx_f[t * B:(t + 1) * B]
             + gx_b[tb * B:(tb + 1) * B]
             + jnp.dot(h.astype(jnp.bfloat16), whh,
                       preferred_element_type=jnp.float32))        # (B, 128)
        i_g = jax.nn.sigmoid(g[:, 0 * H2:1 * H2])
        f_g = jax.nn.sigmoid(g[:, 1 * H2:2 * H2])
        g_g = jnp.tanh(g[:, 2 * H2:3 * H2])
        o_g = jax.nn.sigmoid(g[:, 3 * H2:4 * H2])
        c_new = f_g * c + i_g * g_g
        h_new = o_g * jnp.tanh(c_new)
        m = maskp[t * B:(t + 1) * B]      # (B, 32) packed masks
        h = m * h_new + (1.0 - m) * h     # emulate pack_padded_sequence freeze
        c = m * c_new + (1.0 - m) * c
        h_hist.append(h)

    # History -> dense slabs once, after the recurrence (no per-step stores).
    hf = jnp.concatenate(h_hist, axis=0)[:, :H_DIR].astype(jnp.bfloat16)
    hb = jnp.concatenate(h_hist[::-1], axis=0)[:, H_DIR:].astype(jnp.bfloat16)
    return (jnp.dot(hf, woutf, preferred_element_type=jnp.float32)
            + jnp.dot(hb, woutb, preferred_element_type=jnp.float32) + bout)


# ------------------------------ fused kernel --------------------------------
def b2h_fused_kernel(wrep_ref, maskp_ref,
                     b_wihf_ref, b_wihb_ref, b_bias_ref, b_whh_ref,
                     b_woutf_ref, b_woutb_ref, b_bout_ref,
                     i_wx_ref, i_wy_ref, i_b_ref,
                     h_wihf_ref, h_wihb_ref, h_bias_ref, h_whh_ref,
                     h_woutf_ref, h_woutb_ref, h_bout_ref,
                     blog_ref, hlog_ref):
    wrep_bf = wrep_ref[...].astype(jnp.bfloat16)   # (S*B, D_IN)
    maskp = maskp_ref[...]                         # (S*B, 2*H_DIR)

    # bottom-layer tagger (B_ner)
    b_logits = _bilstm_tagger(wrep_bf, maskp,
                              b_wihf_ref[...], b_wihb_ref[...], b_bias_ref[...],
                              b_whh_ref[...], b_woutf_ref[...], b_woutb_ref[...],
                              b_bout_ref[...])
    blog_ref[...] = b_logits

    # B2HInterUnit
    # TODO(synk): exact B2HInterUnit definition is not in the reference file;
    # implemented as relu(word_represent @ Wx + bottom_logits @ Wy + b).
    low = jnp.dot(wrep_bf, i_wx_ref[...], preferred_element_type=jnp.float32)
    low = low + jnp.dot(b_logits.astype(jnp.bfloat16), i_wy_ref[...],
                        preferred_element_type=jnp.float32)
    low = jnp.maximum(low + i_b_ref[...], 0.0)     # (S*B, D_IN)

    # high-layer tagger (H_ner)
    h_logits = _bilstm_tagger(low.astype(jnp.bfloat16), maskp,
                              h_wihf_ref[...], h_wihb_ref[...], h_bias_ref[...],
                              h_whh_ref[...], h_woutf_ref[...], h_woutb_ref[...],
                              h_bout_ref[...])
    hlog_ref[...] = h_logits


# ------------------------------- forward ------------------------------------
def b2h_forward(word_inputs, word_seq_lengths, char_inputs, char_seq_lengths,
                char_seq_recover, mask, kp):
    """B2H.forward: returns (B2HB_tag_seqs, B2HH_tag_seqs)."""
    del word_seq_lengths, char_seq_lengths, char_seq_recover   # handled via `mask`
    b, s = word_inputs.shape

    # WordRep: word emb + (simplified) char feature — tiny gathers/matmuls left
    # to XLA so they fuse into the production of the single kernel input.
    # TODO(synk): char extractor simplified to mean-pool + linear projection
    # (original uses a char BiLSTM/CNN over character sequences).
    w_emb = jnp.take(kp['word_emb'], word_inputs, axis=0)            # (B,S,We)
    c_emb = jnp.take(kp['char_emb'], char_inputs, axis=0)            # (B,S,LC,Ce)
    c_mean = jnp.mean(c_emb, axis=2)                                 # (B,S,Ce)
    c_hid = jnp.dot(c_mean, kp['char_w']) + kp['char_b']             # (B,S,Ch)
    wrep = jnp.concatenate([w_emb, c_hid], axis=-1)                  # (B,S,D_IN)
    wrep_flat = jnp.transpose(wrep, (1, 0, 2)).reshape(s * b, D_IN).astype(jnp.float32)

    # packed per-step masks: [fwd mask(t) x H_DIR | bwd mask(S-1-t) x H_DIR]
    m_sb = jnp.transpose(mask.astype(jnp.float32), (1, 0))           # (S,B)
    m_f = jnp.repeat(m_sb[:, :, None], H_DIR, axis=-1)
    m_b = jnp.repeat(m_sb[::-1, :, None], H_DIR, axis=-1)
    maskp = jnp.concatenate([m_f, m_b], axis=-1).reshape(s * b, 2 * H_DIR)

    bp, ip, hp = kp['b_ner'], kp['inter'], kp['h_ner']
    b_logits, h_logits = pl.pallas_call(
        b2h_fused_kernel,
        out_shape=(jax.ShapeDtypeStruct((s * b, TAG_PAD), jnp.float32),
                   jax.ShapeDtypeStruct((s * b, TAG_PAD), jnp.float32)),
        in_specs=[_VMEM] * 19,
        out_specs=(_VMEM, _VMEM),
    )(wrep_flat, maskp,
      bp['wihf'], bp['wihb'], bp['bias'], bp['whh'],
      bp['woutf'], bp['woutb'], bp['bout'],
      ip['wx'], ip['wy'], ip['b'],
      hp['wihf'], hp['wihb'], hp['bias'], hp['whh'],
      hp['woutf'], hp['woutb'], hp['bout'])

    b_logits = jnp.transpose(b_logits.reshape(s, b, TAG_PAD), (1, 0, 2))   # (B,S,128)
    h_logits = jnp.transpose(h_logits.reshape(s, b, TAG_PAD), (1, 0, 2))
    mask_i = mask.astype(jnp.int32)
    # TODO(synk): CRF Viterbi decode not implemented; greedy argmax decode used.
    b_tags = jnp.argmax(b_logits, axis=-1).astype(jnp.int32) * mask_i
    h_tags = jnp.argmax(h_logits, axis=-1).astype(jnp.int32) * mask_i
    return b_tags, h_tags


# --------------------------- parameter construction --------------------------
def make_bilstm_params(key, in_dim, tagset):
    """PyTorch-like per-direction layout (for clarity / checkpoint porting)."""
    ks = jax.random.split(key, 8)
    n = lambda k, shp: (0.1 * jax.random.normal(k, shp)).astype(jnp.float32)
    return dict(
        w_ih_f=n(ks[0], (in_dim, 4 * H_DIR)), w_hh_f=n(ks[1], (H_DIR, 4 * H_DIR)),
        b_f=n(ks[2], (1, 4 * H_DIR)),          # = b_ih + b_hh of the fwd direction
        w_ih_b=n(ks[3], (in_dim, 4 * H_DIR)), w_hh_b=n(ks[4], (H_DIR, 4 * H_DIR)),
        b_b=n(ks[5], (1, 4 * H_DIR)),
        w_out=n(ks[6], (2 * H_DIR, tagset)), b_out=n(ks[7], (1, tagset)),
    )


def pack_bilstm_params(p):
    """Repack per-direction LSTM weights into the fused 128-lane gate layout
    [i_f i_b | f_f f_b | g_f g_b | o_f o_b] (16 lanes each) + lane-padded h2t."""
    in_dim = p['w_ih_f'].shape[0]
    tagset = p['w_out'].shape[1]
    wihf = jnp.zeros((in_dim, GATES), jnp.float32)
    wihb = jnp.zeros((in_dim, GATES), jnp.float32)
    whh = jnp.zeros((2 * H_DIR, GATES), jnp.float32)
    bias = jnp.zeros((1, GATES), jnp.float32)
    for k in range(4):                               # gates i, f, g, o
        src = slice(k * H_DIR, (k + 1) * H_DIR)
        fwd = slice(k * 2 * H_DIR, k * 2 * H_DIR + H_DIR)
        bwd = slice(k * 2 * H_DIR + H_DIR, (k + 1) * 2 * H_DIR)
        wihf = wihf.at[:, fwd].set(p['w_ih_f'][:, src])
        wihb = wihb.at[:, bwd].set(p['w_ih_b'][:, src])
        whh = whh.at[:H_DIR, fwd].set(p['w_hh_f'][:, src])
        whh = whh.at[H_DIR:, bwd].set(p['w_hh_b'][:, src])
        bias = bias.at[:, fwd].set(p['b_f'][:, src])
        bias = bias.at[:, bwd].set(p['b_b'][:, src])
    woutf = jnp.zeros((H_DIR, TAG_PAD), jnp.float32).at[:, :tagset].set(p['w_out'][:H_DIR])
    woutb = jnp.zeros((H_DIR, TAG_PAD), jnp.float32).at[:, :tagset].set(p['w_out'][H_DIR:])
    # pad lanes get -1e9 bias so argmax over the lane-dense slab stays in-range
    bout = jnp.full((1, TAG_PAD), -1e9, jnp.float32).at[:, :tagset].set(p['b_out'])
    bf = jnp.bfloat16
    return dict(wihf=wihf.astype(bf), wihb=wihb.astype(bf), bias=bias,
                whh=whh.astype(bf), woutf=woutf.astype(bf), woutb=woutb.astype(bf),
                bout=bout)


def make_params(key):
    ks = jax.random.split(key, 8)
    n = lambda k, shp: (0.1 * jax.random.normal(k, shp)).astype(jnp.float32)
    return dict(
        word_emb=n(ks[0], (WORD_VOCAB, WORD_EMB)),
        char_emb=n(ks[1], (CHAR_VOCAB, CHAR_EMB)),
        char_w=n(ks[2], (CHAR_EMB, CHAR_HID)),
        char_b=n(ks[3], (1, CHAR_HID)),
        inter=dict(wx=n(ks[4], (D_IN, D_IN)),
                   wy=n(ks[5], (L_TAGS, D_IN)),
                   b=jnp.zeros((1, D_IN), jnp.float32)),
        b_ner=make_bilstm_params(ks[6], D_IN, L_TAGS),
        h_ner=make_bilstm_params(ks[7], D_IN, H_TAGS),
    )


def pack_params(p):
    bf = jnp.bfloat16
    wy = jnp.zeros((TAG_PAD, D_IN), jnp.float32).at[:L_TAGS].set(p['inter']['wy'])
    return dict(
        word_emb=p['word_emb'], char_emb=p['char_emb'],
        char_w=p['char_w'], char_b=p['char_b'],
        inter=dict(wx=p['inter']['wx'].astype(bf), wy=wy.astype(bf),
                   b=p['inter']['b']),
        b_ner=pack_bilstm_params(p['b_ner']),
        h_ner=pack_bilstm_params(p['h_ner']),
    )


# ---------------------------------- main -------------------------------------
if __name__ == "__main__":
    root = jax.random.PRNGKey(0)
    k_w, k_c, k_p = jax.random.split(root, 3)

    word_inputs = jax.random.randint(k_w, (B, S), 1, WORD_VOCAB, dtype=jnp.int32)
    char_inputs = jax.random.randint(k_c, (B, S, LC), 1, CHAR_VOCAB, dtype=jnp.int32)
    word_seq_lengths = jnp.array([S, S - 2], dtype=jnp.int32)
    char_seq_lengths = jnp.full((B, S), LC, dtype=jnp.int32)
    char_seq_recover = jnp.arange(B * S, dtype=jnp.int32)
    mask = (jnp.arange(S)[None, :] < word_seq_lengths[:, None]).astype(jnp.float32)

    params = make_params(k_p)
    kparams = pack_params(params)

    fwd = jax.jit(lambda wi, wl, ci, cl, cr, m:
                  b2h_forward(wi, wl, ci, cl, cr, m, kparams))
    b_tags, h_tags = fwd(word_inputs, word_seq_lengths, char_inputs,
                         char_seq_lengths, char_seq_recover, mask)
    jax.block_until_ready((b_tags, h_tags))

    assert b_tags.shape == (B, S) and h_tags.shape == (B, S)
    assert int(jnp.max(b_tags)) < L_TAGS and int(jnp.max(h_tags)) < H_TAGS
    print("KERNEL_OK")
</pallas_src>

<mosaic_0001>
module attributes {stable_mosaic.version = 11 : i64} {
  func.func @b2h_fused_kernel(%arg0: memref<16x48xf32, #tpu.memory_space<vmem>>, %arg1: memref<16x32xf32, #tpu.memory_space<vmem>>, %arg2: memref<48x128xbf16, #tpu.memory_space<vmem>>, %arg3: memref<48x128xbf16, #tpu.memory_space<vmem>>, %arg4: memref<1x128xf32, #tpu.memory_space<vmem>>, %arg5: memref<32x128xbf16, #tpu.memory_space<vmem>>, %arg6: memref<16x128xbf16, #tpu.memory_space<vmem>>, %arg7: memref<16x128xbf16, #tpu.memory_space<vmem>>, %arg8: memref<1x128xf32, #tpu.memory_space<vmem>>, %arg9: memref<48x48xbf16, #tpu.memory_space<vmem>>, %arg10: memref<128x48xbf16, #tpu.memory_space<vmem>>, %arg11: memref<1x48xf32, #tpu.memory_space<vmem>>, %arg12: memref<48x128xbf16, #tpu.memory_space<vmem>>, %arg13: memref<48x128xbf16, #tpu.memory_space<vmem>>, %arg14: memref<1x128xf32, #tpu.memory_space<vmem>>, %arg15: memref<32x128xbf16, #tpu.memory_space<vmem>>, %arg16: memref<16x128xbf16, #tpu.memory_space<vmem>>, %arg17: memref<16x128xbf16, #tpu.memory_space<vmem>>, %arg18: memref<1x128xf32, #tpu.memory_space<vmem>>, %arg19: memref<16x128xf32, #tpu.memory_space<vmem>>, %arg20: memref<16x128xf32, #tpu.memory_space<vmem>>) attributes {dimension_semantics = [], scalar_prefetch = 0 : i64, scratch_operands = 0 : i64, tpu.core_type = #tpu.core_type<tc>} {
    %c0 = arith.constant 0 : index
    %c0_0 = arith.constant 0 : index
    %0 = vector.load %arg0[%c0, %c0_0] : memref<16x48xf32, #tpu.memory_space<vmem>>, vector<16x48xf32>
    %1 = arith.truncf %0 : vector<16x48xf32> to vector<16x48xbf16>
    %c0_1 = arith.constant 0 : index
    %c0_2 = arith.constant 0 : index
    %2 = vector.load %arg1[%c0_1, %c0_2] : memref<16x32xf32, #tpu.memory_space<vmem>>, vector<16x32xf32>
    %c0_3 = arith.constant 0 : index
    %c0_4 = arith.constant 0 : index
    %3 = vector.load %arg2[%c0_3, %c0_4] : memref<48x128xbf16, #tpu.memory_space<vmem>>, vector<48x128xbf16>
    %c0_5 = arith.constant 0 : index
    %c0_6 = arith.constant 0 : index
    %4 = vector.load %arg3[%c0_5, %c0_6] : memref<48x128xbf16, #tpu.memory_space<vmem>>, vector<48x128xbf16>
    %c0_7 = arith.constant 0 : index
    %c0_8 = arith.constant 0 : index
    %5 = vector.load %arg4[%c0_7, %c0_8] : memref<1x128xf32, #tpu.memory_space<vmem>>, vector<1x128xf32>
    %c0_9 = arith.constant 0 : index
    %c0_10 = arith.constant 0 : index
    %6 = vector.load %arg5[%c0_9, %c0_10] : memref<32x128xbf16, #tpu.memory_space<vmem>>, vector<32x128xbf16>
    %c0_11 = arith.constant 0 : index
    %c0_12 = arith.constant 0 : index
    %7 = vector.load %arg6[%c0_11, %c0_12] : memref<16x128xbf16, #tpu.memory_space<vmem>>, vector<16x128xbf16>
    %c0_13 = arith.constant 0 : index
    %c0_14 = arith.constant 0 : index
    %8 = vector.load %arg7[%c0_13, %c0_14] : memref<16x128xbf16, #tpu.memory_space<vmem>>, vector<16x128xbf16>
    %c0_15 = arith.constant 0 : index
    %c0_16 = arith.constant 0 : index
    %9 = vector.load %arg8[%c0_15, %c0_16] : memref<1x128xf32, #tpu.memory_space<vmem>>, vector<1x128xf32>
    %cst = arith.constant dense<0.000000e+00> : vector<16x128xf32>
    %10 = tpu.matmul %1, %3, %cst {dimension_numbers = #tpu.dot_dimension_numbers<[1], [0], [0], [1], [0, 0, 1, 1], [], []>} : vector<16x48xbf16>, vector<48x128xbf16>, vector<16x128xf32> -> vector<16x128xf32>
    %11 = vector.broadcast %5 : vector<1x128xf32> to vector<16x128xf32>
    %12 = arith.addf %10, %11 : vector<16x128xf32>
    %cst_17 = arith.constant dense<0.000000e+00> : vector<16x128xf32>
    %13 = tpu.matmul %1, %4, %cst_17 {dimension_numbers = #tpu.dot_dimension_numbers<[1], [0], [0], [1], [0, 0, 1, 1], [], []>} : vector<16x48xbf16>, vector<48x128xbf16>, vector<16x128xf32> -> vector<16x128xf32>
    %cst_18 = arith.constant 0.000000e+00 : f32
    %14 = vector.broadcast %cst_18 : f32 to vector<2x32xf32>
    %cst_19 = arith.constant 0.000000e+00 : f32
    %15 = vector.broadcast %cst_19 : f32 to vector<2x32xf32>
    %16 = vector.extract_strided_slice %12 {offsets = [0, 0], sizes = [2, 128], strides = [1, 1]} : vector<16x128xf32> to vector<2x128xf32>
    %17 = vector.extract_strided_slice %13 {offsets = [14, 0], sizes = [2, 128], strides = [1, 1]} : vector<16x128xf32> to vector<2x128xf32>
    %18 = arith.addf %16, %17 : vector<2x128xf32>
    %19 = arith.truncf %14 : vector<2x32xf32> to vector<2x32xbf16>
    %cst_20 = arith.constant dense<0.000000e+00> : vector<2x128xf32>
    %20 = tpu.matmul %19, %6, %cst_20 {dimension_numbers = #tpu.dot_dimension_numbers<[1], [0], [0], [1], [0, 0, 1, 1], [], []>} : vector<2x32xbf16>, vector<32x128xbf16>, vector<2x128xf32> -> vector<2x128xf32>
    %21 = arith.addf %18, %20 : vector<2x128xf32>
    %22 = vector.extract_strided_slice %21 {offsets = [0, 0], sizes = [2, 32], strides = [1, 1]} : vector<2x128xf32> to vector<2x32xf32>
    %23 = arith.negf %22 : vector<2x32xf32>
    %24 = math.exp %23 : vector<2x32xf32>
    %cst_21 = arith.constant 1.000000e+00 : f32
    %25 = vector.broadcast %cst_21 : f32 to vector<2x32xf32>
    %26 = arith.addf %25, %24 : vector<2x32xf32>
    %27 = arith.divf %25, %26 : vector<2x32xf32>
    %28 = vector.extract_strided_slice %21 {offsets = [0, 32], sizes = [2, 32], strides = [1, 1]} : vector<2x128xf32> to vector<2x32xf32>
    %29 = arith.negf %28 : vector<2x32xf32>
    %30 = math.exp %29 : vector<2x32xf32>
    %cst_22 = arith.constant 1.000000e+00 : f32
    %31 = vector.broadcast %cst_22 : f32 to vector<2x32xf32>
    %32 = arith.addf %31, %30 : vector<2x32xf32>
    %33 = arith.divf %31, %32 : vector<2x32xf32>
    %34 = vector.extract_strided_slice %21 {offsets = [0, 64], sizes = [2, 32], strides = [1, 1]} : vector<2x128xf32> to vector<2x32xf32>
    %35 = math.tanh %34 : vector<2x32xf32>
    %36 = vector.extract_strided_slice %21 {offsets = [0, 96], sizes = [2, 32], strides = [1, 1]} : vector<2x128xf32> to vector<2x32xf32>
    %37 = arith.negf %36 : vector<2x32xf32>
    %38 = math.exp %37 : vector<2x32xf32>
    %cst_23 = arith.constant 1.000000e+00 : f32
    %39 = vector.broadcast %cst_23 : f32 to vector<2x32xf32>
    %40 = arith.addf %39, %38 : vector<2x32xf32>
    %41 = arith.divf %39, %40 : vector<2x32xf32>
    %42 = arith.mulf %33, %15 : vector<2x32xf32>
    %43 = arith.mulf %27, %35 : vector<2x32xf32>
    %44 = arith.addf %42, %43 : vector<2x32xf32>
    %45 = math.tanh %44 : vector<2x32xf32>
    %46 = arith.mulf %41, %45 : vector<2x32xf32>
    %47 = vector.extract_strided_slice %2 {offsets = [0, 0], sizes = [2, 32], strides = [1, 1]} : vector<16x32xf32> to vector<2x32xf32>
    %48 = arith.mulf %47, %46 : vector<2x32xf32>
    %cst_24 = arith.constant 1.000000e+00 : f32
    %49 = vector.broadcast %cst_24 : f32 to vector<2x32xf32>
    %50 = arith.subf %49, %47 : vector<2x32xf32>
    %51 = arith.mulf %50, %14 : vector<2x32xf32>
    %52 = arith.addf %48, %51 : vector<2x32xf32>
    %53 = arith.mulf %47, %44 : vector<2x32xf32>
    %cst_25 = arith.constant 1.000000e+00 : f32
    %54 = vector.broadcast %cst_25 : f32 to vector<2x32xf32>
    %55 = arith.subf %54, %47 : vector<2x32xf32>
    %56 = arith.mulf %55, %15 : vector<2x32xf32>
    %57 = arith.addf %53, %56 : vector<2x32xf32>
    %58 = vector.extract_strided_slice %12 {offsets = [2, 0], sizes = [2, 128], strides = [1, 1]} : vector<16x128xf32> to vector<2x128xf32>
    %59 = vector.extract_strided_slice %13 {offsets = [12, 0], sizes = [2, 128], strides = [1, 1]} : vector<16x128xf32> to vector<2x128xf32>
    %60 = arith.addf %58, %59 : vector<2x128xf32>
    %61 = arith.truncf %52 : vector<2x32xf32> to vector<2x32xbf16>
    %cst_26 = arith.constant dense<0.000000e+00> : vector<2x128xf32>
    %62 = tpu.matmul %61, %6, %cst_26 {dimension_numbers = #tpu.dot_dimension_numbers<[1], [0], [0], [1], [0, 0, 1, 1], [], []>} : vector<2x32xbf16>, vector<32x128xbf16>, vector<2x128xf32> -> vector<2x128xf32>
    %63 = arith.addf %60, %62 : vector<2x128xf32>
    %64 = vector.extract_strided_slice %63 {offsets = [0, 0], sizes = [2, 32], strides = [1, 1]} : vector<2x128xf32> to vector<2x32xf32>
    %65 = arith.negf %64 : vector<2x32xf32>
    %66 = math.exp %65 : vector<2x32xf32>
    %cst_27 = arith.constant 1.000000e+00 : f32
    %67 = vector.broadcast %cst_27 : f32 to vector<2x32xf32>
    %68 = arith.addf %67, %66 : vector<2x32xf32>
    %69 = arith.divf %67, %68 : vector<2x32xf32>
    %70 = vector.extract_strided_slice %63 {offsets = [0, 32], sizes = [2, 32], strides = [1, 1]} : vector<2x128xf32> to vector<2x32xf32>
    %71 = arith.negf %70 : vector<2x32xf32>
    %72 = math.exp %71 : vector<2x32xf32>
    %cst_28 = arith.constant 1.000000e+00 : f32
    %73 = vector.broadcast %cst_28 : f32 to vector<2x32xf32>
    %74 = arith.addf %73, %72 : vector<2x32xf32>
    %75 = arith.divf %73, %74 : vector<2x32xf32>
    %76 = vector.extract_strided_slice %63 {offsets = [0, 64], sizes = [2, 32], strides = [1, 1]} : vector<2x128xf32> to vector<2x32xf32>
    %77 = math.tanh %76 : vector<2x32xf32>
    %78 = vector.extract_strided_slice %63 {offsets = [0, 96], sizes = [2, 32], strides = [1, 1]} : vector<2x128xf32> to vector<2x32xf32>
    %79 = arith.negf %78 : vector<2x32xf32>
    %80 = math.exp %79 : vector<2x32xf32>
    %cst_29 = arith.constant 1.000000e+00 : f32
    %81 = vector.broadcast %cst_29 : f32 to vector<2x32xf32>
    %82 = arith.addf %81, %80 : vector<2x32xf32>
    %83 = arith.divf %81, %82 : vector<2x32xf32>
    %84 = arith.mulf %75, %57 : vector<2x32xf32>
    %85 = arith.mulf %69, %77 : vector<2x32xf32>
    %86 = arith.addf %84, %85 : vector<2x32xf32>
    %87 = math.tanh %86 : vector<2x32xf32>
    %88 = arith.mulf %83, %87 : vector<2x32xf32>
    %89 = vector.extract_strided_slice %2 {offsets = [2, 0], sizes = [2, 32], strides = [1, 1]} : vector<16x32xf32> to vector<2x32xf32>
    %90 = arith.mulf %89, %88 : vector<2x32xf32>
    %cst_30 = arith.constant 1.000000e+00 : f32
    %91 = vector.broadcast %cst_30 : f32 to vector<2x32xf32>
    %92 = arith.subf %91, %89 : vector<2x32xf32>
    %93 = arith.mulf %92, %52 : vector<2x32xf32>
    %94 = arith.addf %90, %93 : vector<2x32xf32>
    %95 = arith.mulf %89, %86 : vector<2x32xf32>
    %cst_31 = arith.constant 1.000000e+00 : f32
    %96 = vector.broadcast %cst_31 : f32 to vector<2x32xf32>
    %97 = arith.subf %96, %89 : vector<2x32xf32>
    %98 = arith.mulf %97, %57 : vector<2x32xf32>
    %99 = arith.addf %95, %98 : vector<2x32xf32>
    %100 = vector.extract_strided_slice %12 {offsets = [4, 0], sizes = [2, 128], strides = [1, 1]} : vector<16x128xf32> to vector<2x128xf32>
    %101 = vector.extract_strided_slice %13 {offsets = [10, 0], sizes = [2, 128], strides = [1, 1]} : vector<16x128xf32> to vector<2x128xf32>
    %102 = arith.addf %100, %101 : vector<2x128xf32>
    %103 = arith.truncf %94 : vector<2x32xf32> to vector<2x32xbf16>
    %cst_32 = arith.constant dense<0.000000e+00> : vector<2x128xf32>
    %104 = tpu.matmul %103, %6, %cst_32 {dimension_numbers = #tpu.dot_dimension_numbers<[1], [0], [0], [1], [0, 0, 1, 1], [], []>} : vector<2x32xbf16>, vector<32x128xbf16>, vector<2x128xf32> -> vector<2x128xf32>
    %105 = arith.addf %102, %104 : vector<2x128xf32>
    %106 = vector.extract_strided_slice %105 {offsets = [0, 0], sizes = [2, 32], strides = [1, 1]} : vector<2x128xf32> to vector<2x32xf32>
    %107 = arith.negf %106 : vector<2x32xf32>
    %108 = math.exp %107 : vector<2x32xf32>
    %cst_33 = arith.constant 1.000000e+00 : f32
    %109 = vector.broadcast %cst_33 : f32 to vector<2x32xf32>
    %110 = arith.addf %109, %108 : vector<2x32xf32>
    %111 = arith.divf %109, %110 : vector<2x32xf32>
    %112 = vector.extract_strided_slice %105 {offsets = [0, 32], sizes = [2, 32], strides = [1, 1]} : vector<2x128xf32> to vector<2x32xf32>
    %113 = arith.negf %112 : vector<2x32xf32>
    %114 = math.exp %113 : vector<2x32xf32>
    %cst_34 = arith.constant 1.000000e+00 : f32
    %115 = vector.broadcast %cst_34 : f32 to vector<2x32xf32>
    %116 = arith.addf %115, %114 : vector<2x32xf32>
    %117 = arith.divf %115, %116 : vector<2x32xf32>
    %118 = vector.extract_strided_slice %105 {offsets = [0, 64], sizes = [2, 32], strides = [1, 1]} : vector<2x128xf32> to vector<2x32xf32>
    %119 = math.tanh %118 : vector<2x32xf32>
    %120 = vector.extract_strided_slice %105 {offsets = [0, 96], sizes = [2, 32], strides = [1, 1]} : vector<2x128xf32> to vector<2x32xf32>
    %121 = arith.negf %120 : vector<2x32xf32>
    %122 = math.exp %121 : vector<2x32xf32>
    %cst_35 = arith.constant 1.000000e+00 : f32
    %123 = vector.broadcast %cst_35 : f32 to vector<2x32xf32>
    %124 = arith.addf %123, %122 : vector<2x32xf32>
    %125 = arith.divf %123, %124 : vector<2x32xf32>
    %126 = arith.mulf %117, %99 : vector<2x32xf32>
    %127 = arith.mulf %111, %119 : vector<2x32xf32>
    %128 = arith.addf %126, %127 : vector<2x32xf32>
    %129 = math.tanh %128 : vector<2x32xf32>
    %130 = arith.mulf %125, %129 : vector<2x32xf32>
    %131 = vector.extract_strided_slice %2 {offsets = [4, 0], sizes = [2, 32], strides = [1, 1]} : vector<16x32xf32> to vector<2x32xf32>
    %132 = arith.mulf %131, %130 : vector<2x32xf32>
    %cst_36 = arith.constant 1.000000e+00 : f32
    %133 = vector.broadcast %cst_36 : f32 to vector<2x32xf32>
    %134 = arith.subf %133, %131 : vector<2x32xf32>
    %135 = arith.mulf %134, %94 : vector<2x32xf32>
    %136 = arith.addf %132, %135 : vector<2x32xf32>
    %137 = arith.mulf %131, %128 : vector<2x32xf32>
    %cst_37 = arith.constant 1.000000e+00 : f32
    %138 = vector.broadcast %cst_37 : f32 to vector<2x32xf32>
    %139 = arith.subf %138, %131 : vector<2x32xf32>
    %140 = arith.mulf %139, %99 : vector<2x32xf32>
    %141 = arith.addf %137, %140 : vector<2x32xf32>
    %142 = vector.extract_strided_slice %12 {offsets = [6, 0], sizes = [2, 128], strides = [1, 1]} : vector<16x128xf32> to vector<2x128xf32>
    %143 = vector.extract_strided_slice %13 {offsets = [8, 0], sizes = [2, 128], strides = [1, 1]} : vector<16x128xf32> to vector<2x128xf32>
    %144 = arith.addf %142, %143 : vector<2x128xf32>
    %145 = arith.truncf %136 : vector<2x32xf32> to vector<2x32xbf16>
    %cst_38 = arith.constant dense<0.000000e+00> : vector<2x128xf32>
    %146 = tpu.matmul %145, %6, %cst_38 {dimension_numbers = #tpu.dot_dimension_numbers<[1], [0], [0], [1], [0, 0, 1, 1], [], []>} : vector<2x32xbf16>, vector<32x128xbf16>, vector<2x128xf32> -> vector<2x128xf32>
    %147 = arith.addf %144, %146 : vector<2x128xf32>
    %148 = vector.extract_strided_slice %147 {offsets = [0, 0], sizes = [2, 32], strides = [1, 1]} : vector<2x128xf32> to vector<2x32xf32>
    %149 = arith.negf %148 : vector<2x32xf32>
    %150 = math.exp %149 : vector<2x32xf32>
    %cst_39 = arith.constant 1.000000e+00 : f32
    %151 = vector.broadcast %cst_39 : f32 to vector<2x32xf32>
    %152 = arith.addf %151, %150 : vector<2x32xf32>
    %153 = arith.divf %151, %152 : vector<2x32xf32>
    %154 = vector.extract_strided_slice %147 {offsets = [0, 32], sizes = [2, 32], strides = [1, 1]} : vector<2x128xf32> to vector<2x32xf32>
    %155 = arith.negf %154 : vector<2x32xf32>
    %156 = math.exp %155 : vector<2x32xf32>
    %cst_40 = arith.constant 1.000000e+00 : f32
    %157 = vector.broadcast %cst_40 : f32 to vector<2x32xf32>
    %158 = arith.addf %157, %156 : vector<2x32xf32>
    %159 = arith.divf %157, %158 : vector<2x32xf32>
    %160 = vector.extract_strided_slice %147 {offsets = [0, 64], sizes = [2, 32], strides = [1, 1]} : vector<2x128xf32> to vector<2x32xf32>
    %161 = math.tanh %160 : vector<2x32xf32>
    %162 = vector.extract_strided_slice %147 {offsets = [0, 96], sizes = [2, 32], strides = [1, 1]} : vector<2x128xf32> to vector<2x32xf32>
    %163 = arith.negf %162 : vector<2x32xf32>
    %164 = math.exp %163 : vector<2x32xf32>
    %cst_41 = arith.constant 1.000000e+00 : f32
    %165 = vector.broadcast %cst_41 : f32 to vector<2x32xf32>
    %166 = arith.addf %165, %164 : vector<2x32xf32>
    %167 = arith.divf %165, %166 : vector<2x32xf32>
    %168 = arith.mulf %159, %141 : vector<2x32xf32>
    %169 = arith.mulf %153, %161 : vector<2x32xf32>
    %170 = arith.addf %168, %169 : vector<2x32xf32>
    %171 = math.tanh %170 : vector<2x32xf32>
    %172 = arith.mulf %167, %171 : vector<2x32xf32>
    %173 = vector.extract_strided_slice %2 {offsets = [6, 0], sizes = [2, 32], strides = [1, 1]} : vector<16x32xf32> to vector<2x32xf32>
    %174 = arith.mulf %173, %172 : vector<2x32xf32>
    %cst_42 = arith.constant 1.000000e+00 : f32
    %175 = vector.broadcast %cst_42 : f32 to vector<2x32xf32>
    %176 = arith.subf %175, %173 : vector<2x32xf32>
    %177 = arith.mulf %176, %136 : vector<2x32xf32>
    %178 = arith.addf %174, %177 : vector<2x32xf32>
    %179 = arith.mulf %173, %170 : vector<2x32xf32>
    %cst_43 = arith.constant 1.000000e+00 : f32
    %180 = vector.broadcast %cst_43 : f32 to vector<2x32xf32>
    %181 = arith.subf %180, %173 : vector<2x32xf32>
    %182 = arith.mulf %181, %141 : vector<2x32xf32>
    %183 = arith.addf %179, %182 : vector<2x32xf32>
    %184 = vector.extract_strided_slice %12 {offsets = [8, 0], sizes = [2, 128], strides = [1, 1]} : vector<16x128xf32> to vector<2x128xf32>
    %185 = vector.extract_strided_slice %13 {offsets = [6, 0], sizes = [2, 128], strides = [1, 1]} : vector<16x128xf32> to vector<2x128xf32>
    %186 = arith.addf %184, %185 : vector<2x128xf32>
    %187 = arith.truncf %178 : vector<2x32xf32> to vector<2x32xbf16>
    %cst_44 = arith.constant dense<0.000000e+00> : vector<2x128xf32>
    %188 = tpu.matmul %187, %6, %cst_44 {dimension_numbers = #tpu.dot_dimension_numbers<[1], [0], [0], [1], [0, 0, 1, 1], [], []>} : vector<2x32xbf16>, vector<32x128xbf16>, vector<2x128xf32> -> vector<2x128xf32>
    %189 = arith.addf %186, %188 : vector<2x128xf32>
    %190 = vector.extract_strided_slice %189 {offsets = [0, 0], sizes = [2, 32], strides = [1, 1]} : vector<2x128xf32> to vector<2x32xf32>
    %191 = arith.negf %190 : vector<2x32xf32>
    %192 = math.exp %191 : vector<2x32xf32>
    %cst_45 = arith.constant 1.000000e+00 : f32
    %193 = vector.broadcast %cst_45 : f32 to vector<2x32xf32>
    %194 = arith.addf %193, %192 : vector<2x32xf32>
    %195 = arith.divf %193, %194 : vector<2x32xf32>
    %196 = vector.extract_strided_slice %189 {offsets = [0, 32], sizes = [2, 32], strides = [1, 1]} : vector<2x128xf32> to vector<2x32xf32>
    %197 = arith.negf %196 : vector<2x32xf32>
    %198 = math.exp %197 : vector<2x32xf32>
    %cst_46 = arith.constant 1.000000e+00 : f32
    %199 = vector.broadcast %cst_46 : f32 to vector<2x32xf32>
    %200 = arith.addf %199, %198 : vector<2x32xf32>
    %201 = arith.divf %199, %200 : vector<2x32xf32>
    %202 = vector.extract_strided_slice %189 {offsets = [0, 64], sizes = [2, 32], strides = [1, 1]} : vector<2x128xf32> to vector<2x32xf32>
    %203 = math.tanh %202 : vector<2x32xf32>
    %204 = vector.extract_strided_slice %189 {offsets = [0, 96], sizes = [2, 32], strides = [1, 1]} : vector<2x128xf32> to vector<2x32xf32>
    %205 = arith.negf %204 : vector<2x32xf32>
    %206 = math.exp %205 : vector<2x32xf32>
    %cst_47 = arith.constant 1.000000e+00 : f32
    %207 = vector.broadcast %cst_47 : f32 to vector<2x32xf32>
    %208 = arith.addf %207, %206 : vector<2x32xf32>
    %209 = arith.divf %207, %208 : vector<2x32xf32>
    %210 = arith.mulf %201, %183 : vector<2x32xf32>
    %211 = arith.mulf %195, %203 : vector<2x32xf32>
    %212 = arith.addf %210, %211 : vector<2x32xf32>
    %213 = math.tanh %212 : vector<2x32xf32>
    %214 = arith.mulf %209, %213 : vector<2x32xf32>
    %215 = vector.extract_strided_slice %2 {offsets = [8, 0], sizes = [2, 32], strides = [1, 1]} : vector<16x32xf32> to vector<2x32xf32>
    %216 = arith.mulf %215, %214 : vector<2x32xf32>
    %cst_48 = arith.constant 1.000000e+00 : f32
    %217 = vector.broadcast %cst_48 : f32 to vector<2x32xf32>
    %218 = arith.subf %217, %215 : vector<2x32xf32>
    %219 = arith.mulf %218, %178 : vector<2x32xf32>
    %220 = arith.addf %216, %219 : vector<2x32xf32>
    %221 = arith.mulf %215, %212 : vector<2x32xf32>
    %cst_49 = arith.constant 1.000000e+00 : f32
    %222 = vector.broadcast %cst_49 : f32 to vector<2x32xf32>
    %223 = arith.subf %222, %215 : vector<2x32xf32>
    %224 = arith.mulf %223, %183 : vector<2x32xf32>
    %225 = arith.addf %221, %224 : vector<2x32xf32>
    %226 = vector.extract_strided_slice %12 {offsets = [10, 0], sizes = [2, 128], strides = [1, 1]} : vector<16x128xf32> to vector<2x128xf32>
    %227 = vector.extract_strided_slice %13 {offsets = [4, 0], sizes = [2, 128], strides = [1, 1]} : vector<16x128xf32> to vector<2x128xf32>
    %228 = arith.addf %226, %227 : vector<2x128xf32>
    %229 = arith.truncf %220 : vector<2x32xf32> to vector<2x32xbf16>
    %cst_50 = arith.constant dense<0.000000e+00> : vector<2x128xf32>
    %230 = tpu.matmul %229, %6, %cst_50 {dimension_numbers = #tpu.dot_dimension_numbers<[1], [0], [0], [1], [0, 0, 1, 1], [], []>} : vector<2x32xbf16>, vector<32x128xbf16>, vector<2x128xf32> -> vector<2x128xf32>
    %231 = arith.addf %228, %230 : vector<2x128xf32>
    %232 = vector.extract_strided_slice %231 {offsets = [0, 0], sizes = [2, 32], strides = [1, 1]} : vector<2x128xf32> to vector<2x32xf32>
    %233 = arith.negf %232 : vector<2x32xf32>
    %234 = math.exp %233 : vector<2x32xf32>
    %cst_51 = arith.constant 1.000000e+00 : f32
    %235 = vector.broadcast %cst_51 : f32 to vector<2x32xf32>
    %236 = arith.addf %235, %234 : vector<2x32xf32>
    %237 = arith.divf %235, %236 : vector<2x32xf32>
    %238 = vector.extract_strided_slice %231 {offsets = [0, 32], sizes = [2, 32], strides = [1, 1]} : vector<2x128xf32> to vector<2x32xf32>
    %239 = arith.negf %238 : vector<2x32xf32>
    %240 = math.exp %239 : vector<2x32xf32>
    %cst_52 = arith.constant 1.000000e+00 : f32
    %241 = vector.broadcast %cst_52 : f32 to vector<2x32xf32>
    %242 = arith.addf %241, %240 : vector<2x32xf32>
    %243 = arith.divf %241, %242 : vector<2x32xf32>
    %244 = vector.extract_strided_slice %231 {offsets = [0, 64], sizes = [2, 32], strides = [1, 1]} : vector<2x128xf32> to vector<2x32xf32>
    %245 = math.tanh %244 : vector<2x32xf32>
    %246 = vector.extract_strided_slice %231 {offsets = [0, 96], sizes = [2, 32], strides = [1, 1]} : vector<2x128xf32> to vector<2x32xf32>
    %247 = arith.negf %246 : vector<2x32xf32>
    %248 = math.exp %247 : vector<2x32xf32>
    %cst_53 = arith.constant 1.000000e+00 : f32
    %249 = vector.broadcast %cst_53 : f32 to vector<2x32xf32>
    %250 = arith.addf %249, %248 : vector<2x32xf32>
    %251 = arith.divf %249, %250 : vector<2x32xf32>
    %252 = arith.mulf %243, %225 : vector<2x32xf32>
    %253 = arith.mulf %237, %245 : vector<2x32xf32>
    %254 = arith.addf %252, %253 : vector<2x32xf32>
    %255 = math.tanh %254 : vector<2x32xf32>
    %256 = arith.mulf %251, %255 : vector<2x32xf32>
    %257 = vector.extract_strided_slice %2 {offsets = [10, 0], sizes = [2, 32], strides = [1, 1]} : vector<16x32xf32> to vector<2x32xf32>
    %258 = arith.mulf %257, %256 : vector<2x32xf32>
    %cst_54 = arith.constant 1.000000e+00 : f32
    %259 = vector.broadcast %cst_54 : f32 to vector<2x32xf32>
    %260 = arith.subf %259, %257 : vector<2x32xf32>
    %261 = arith.mulf %260, %220 : vector<2x32xf32>
    %262 = arith.addf %258, %261 : vector<2x32xf32>
    %263 = arith.mulf %257, %254 : vector<2x32xf32>
    %cst_55 = arith.constant 1.000000e+00 : f32
    %264 = vector.broadcast %cst_55 : f32 to vector<2x32xf32>
    %265 = arith.subf %264, %257 : vector<2x32xf32>
    %266 = arith.mulf %265, %225 : vector<2x32xf32>
    %267 = arith.addf %263, %266 : vector<2x32xf32>
    %268 = vector.extract_strided_slice %12 {offsets = [12, 0], sizes = [2, 128], strides = [1, 1]} : vector<16x128xf32> to vector<2x128xf32>
    %269 = vector.extract_strided_slice %13 {offsets = [2, 0], sizes = [2, 128], strides = [1, 1]} : vector<16x128xf32> to vector<2x128xf32>
    %270 = arith.addf %268, %269 : vector<2x128xf32>
    %271 = arith.truncf %262 : vector<2x32xf32> to vector<2x32xbf16>
    %cst_56 = arith.constant dense<0.000000e+00> : vector<2x128xf32>
    %272 = tpu.matmul %271, %6, %cst_56 {dimension_numbers = #tpu.dot_dimension_numbers<[1], [0], [0], [1], [0, 0, 1, 1], [], []>} : vector<2x32xbf16>, vector<32x128xbf16>, vector<2x128xf32> -> vector<2x128xf32>
    %273 = arith.addf %270, %272 : vector<2x128xf32>
    %274 = vector.extract_strided_slice %273 {offsets = [0, 0], sizes = [2, 32], strides = [1, 1]} : vector<2x128xf32> to vector<2x32xf32>
    %275 = arith.negf %274 : vector<2x32xf32>
    %276 = math.exp %275 : vector<2x32xf32>
    %cst_57 = arith.constant 1.000000e+00 : f32
    %277 = vector.broadcast %cst_57 : f32 to vector<2x32xf32>
    %278 = arith.addf %277, %276 : vector<2x32xf32>
    %279 = arith.divf %277, %278 : vector<2x32xf32>
    %280 = vector.extract_strided_slice %273 {offsets = [0, 32], sizes = [2, 32], strides = [1, 1]} : vector<2x128xf32> to vector<2x32xf32>
    %281 = arith.negf %280 : vector<2x32xf32>
    %282 = math.exp %281 : vector<2x32xf32>
    %cst_58 = arith.constant 1.000000e+00 : f32
    %283 = vector.broadcast %cst_58 : f32 to vector<2x32xf32>
    %284 = arith.addf %283, %282 : vector<2x32xf32>
    %285 = arith.divf %283, %284 : vector<2x32xf32>
    %286 = vector.extract_strided_slice %273 {offsets = [0, 64], sizes = [2, 32], strides = [1, 1]} : vector<2x128xf32> to vector<2x32xf32>
    %287 = math.tanh %286 : vector<2x32xf32>
    %288 = vector.extract_strided_slice %273 {offsets = [0, 96], sizes = [2, 32], strides = [1, 1]} : vector<2x128xf32> to vector<2x32xf32>
    %289 = arith.negf %288 : vector<2x32xf32>
    %290 = math.exp %289 : vector<2x32xf32>
    %cst_59 = arith.constant 1.000000e+00 : f32
    %291 = vector.broadcast %cst_59 : f32 to vector<2x32xf32>
    %292 = arith.addf %291, %290 : vector<2x32xf32>
    %293 = arith.divf %291, %292 : vector<2x32xf32>
    %294 = arith.mulf %285, %267 : vector<2x32xf32>
    %295 = arith.mulf %279, %287 : vector<2x32xf32>
    %296 = arith.addf %294, %295 : vector<2x32xf32>
    %297 = math.tanh %296 : vector<2x32xf32>
    %298 = arith.mulf %293, %297 : vector<2x32xf32>
    %299 = vector.extract_strided_slice %2 {offsets = [12, 0], sizes = [2, 32], strides = [1, 1]} : vector<16x32xf32> to vector<2x32xf32>
    %300 = arith.mulf %299, %298 : vector<2x32xf32>
    %cst_60 = arith.constant 1.000000e+00 : f32
    %301 = vector.broadcast %cst_60 : f32 to vector<2x32xf32>
    %302 = arith.subf %301, %299 : vector<2x32xf32>
    %303 = arith.mulf %302, %262 : vector<2x32xf32>
    %304 = arith.addf %300, %303 : vector<2x32xf32>
    %305 = arith.mulf %299, %296 : vector<2x32xf32>
    %cst_61 = arith.constant 1.000000e+00 : f32
    %306 = vector.broadcast %cst_61 : f32 to vector<2x32xf32>
    %307 = arith.subf %306, %299 : vector<2x32xf32>
    %308 = arith.mulf %307, %267 : vector<2x32xf32>
    %309 = arith.addf %305, %308 : vector<2x32xf32>
    %310 = vector.extract_strided_slice %12 {offsets = [14, 0], sizes = [2, 128], strides = [1, 1]} : vector<16x128xf32> to vector<2x128xf32>
    %311 = vector.extract_strided_slice %13 {offsets = [0, 0], sizes = [2, 128], strides = [1, 1]} : vector<16x128xf32> to vector<2x128xf32>
    %312 = arith.addf %310, %311 : vector<2x128xf32>
    %313 = arith.truncf %304 : vector<2x32xf32> to vector<2x32xbf16>
    %cst_62 = arith.constant dense<0.000000e+00> : vector<2x128xf32>
    %314 = tpu.matmul %313, %6, %cst_62 {dimension_numbers = #tpu.dot_dimension_numbers<[1], [0], [0], [1], [0, 0, 1, 1], [], []>} : vector<2x32xbf16>, vector<32x128xbf16>, vector<2x128xf32> -> vector<2x128xf32>
    %315 = arith.addf %312, %314 : vector<2x128xf32>
    %316 = vector.extract_strided_slice %315 {offsets = [0, 0], sizes = [2, 32], strides = [1, 1]} : vector<2x128xf32> to vector<2x32xf32>
    %317 = arith.negf %316 : vector<2x32xf32>
    %318 = math.exp %317 : vector<2x32xf32>
    %cst_63 = arith.constant 1.000000e+00 : f32
    %319 = vector.broadcast %cst_63 : f32 to vector<2x32xf32>
    %320 = arith.addf %319, %318 : vector<2x32xf32>
    %321 = arith.divf %319, %320 : vector<2x32xf32>
    %322 = vector.extract_strided_slice %315 {offsets = [0, 32], sizes = [2, 32], strides = [1, 1]} : vector<2x128xf32> to vector<2x32xf32>
    %323 = arith.negf %322 : vector<2x32xf32>
    %324 = math.exp %323 : vector<2x32xf32>
    %cst_64 = arith.constant 1.000000e+00 : f32
    %325 = vector.broadcast %cst_64 : f32 to vector<2x32xf32>
    %326 = arith.addf %325, %324 : vector<2x32xf32>
    %327 = arith.divf %325, %326 : vector<2x32xf32>
    %328 = vector.extract_strided_slice %315 {offsets = [0, 64], sizes = [2, 32], strides = [1, 1]} : vector<2x128xf32> to vector<2x32xf32>
    %329 = math.tanh %328 : vector<2x32xf32>
    %330 = vector.extract_strided_slice %315 {offsets = [0, 96], sizes = [2, 32], strides = [1, 1]} : vector<2x128xf32> to vector<2x32xf32>
    %331 = arith.negf %330 : vector<2x32xf32>
    %332 = math.exp %331 : vector<2x32xf32>
    %cst_65 = arith.constant 1.000000e+00 : f32
    %333 = vector.broadcast %cst_65 : f32 to vector<2x32xf32>
    %334 = arith.addf %333, %332 : vector<2x32xf32>
    %335 = arith.divf %333, %334 : vector<2x32xf32>
    %336 = arith.mulf %327, %309 : vector<2x32xf32>
    %337 = arith.mulf %321, %329 : vector<2x32xf32>
    %338 = arith.addf %336, %337 : vector<2x32xf32>
    %339 = math.tanh %338 : vector<2x32xf32>
    %340 = arith.mulf %335, %339 : vector<2x32xf32>
    %341 = vector.extract_strided_slice %2 {offsets = [14, 0], sizes = [2, 32], strides = [1, 1]} : vector<16x32xf32> to vector<2x32xf32>
    %342 = arith.mulf %341, %340 : vector<2x32xf32>
    %cst_66 = arith.constant 1.000000e+00 : f32
    %343 = vector.broadcast %cst_66 : f32 to vector<2x32xf32>
    %344 = arith.subf %343, %341 : vector<2x32xf32>
    %345 = arith.mulf %344, %304 : vector<2x32xf32>
    %346 = arith.addf %342, %345 : vector<2x32xf32>
    %347 = tpu.concatenate %52, %94, %136, %178, %220, %262, %304, %346 in 0 : vector<2x32xf32>, vector<2x32xf32>, vector<2x32xf32>, vector<2x32xf32>, vector<2x32xf32>, vector<2x32xf32>, vector<2x32xf32>, vector<2x32xf32> -> vector<16x32xf32>
    %348 = vector.extract_strided_slice %347 {offsets = [0, 0], sizes = [16, 16], strides = [1, 1]} : vector<16x32xf32> to vector<16x16xf32>
    %349 = arith.truncf %348 : vector<16x16xf32> to vector<16x16xbf16>
    %350 = tpu.concatenate %346, %304, %262, %220, %178, %136, %94, %52 in 0 : vector<2x32xf32>, vector<2x32xf32>, vector<2x32xf32>, vector<2x32xf32>, vector<2x32xf32>, vector<2x32xf32>, vector<2x32xf32>, vector<2x32xf32> -> vector<16x32xf32>
    %351 = vector.extract_strided_slice %350 {offsets = [0, 16], sizes = [16, 16], strides = [1, 1]} : vector<16x32xf32> to vector<16x16xf32>
    %352 = arith.truncf %351 : vector<16x16xf32> to vector<16x16xbf16>
    %cst_67 = arith.constant dense<0.000000e+00> : vector<16x128xf32>
    %353 = tpu.matmul %349, %7, %cst_67 {dimension_numbers = #tpu.dot_dimension_numbers<[1], [0], [0], [1], [0, 0, 1, 1], [], []>} : vector<16x16xbf16>, vector<16x128xbf16>, vector<16x128xf32> -> vector<16x128xf32>
    %cst_68 = arith.constant dense<0.000000e+00> : vector<16x128xf32>
    %354 = tpu.matmul %352, %8, %cst_68 {dimension_numbers = #tpu.dot_dimension_numbers<[1], [0], [0], [1], [0, 0, 1, 1], [], []>} : vector<16x16xbf16>, vector<16x128xbf16>, vector<16x128xf32> -> vector<16x128xf32>
    %355 = arith.addf %353, %354 : vector<16x128xf32>
    %356 = vector.broadcast %9 : vector<1x128xf32> to vector<16x128xf32>
    %357 = arith.addf %355, %356 : vector<16x128xf32>
    %c0_69 = arith.constant 0 : index
    %c0_70 = arith.constant 0 : index
    %358 = vector.load %arg19[%c0_69, %c0_70] : memref<16x128xf32, #tpu.memory_space<vmem>>, vector<16x128xf32>
    tpu.vector_store %arg19[%c0_69, %c0_70], %357 {strides = array<i32>} : memref<16x128xf32, #tpu.memory_space<vmem>>, vector<16x128xf32>,
    %c0_71 = arith.constant 0 : index
    %c0_72 = arith.constant 0 : index
    %359 = vector.load %arg9[%c0_71, %c0_72] : memref<48x48xbf16, #tpu.memory_space<vmem>>, vector<48x48xbf16>
    %cst_73 = arith.constant dense<0.000000e+00> : vector<16x48xf32>
    %360 = tpu.matmul %1, %359, %cst_73 {dimension_numbers = #tpu.dot_dimension_numbers<[1], [0], [0], [1], [0, 0, 1, 1], [], []>} : vector<16x48xbf16>, vector<48x48xbf16>, vector<16x48xf32> -> vector<16x48xf32>
    %361 = arith.truncf %357 : vector<16x128xf32> to vector<16x128xbf16>
    %c0_74 = arith.constant 0 : index
    %c0_75 = arith.constant 0 : index
    %362 = vector.load %arg10[%c0_74, %c0_75] : memref<128x48xbf16, #tpu.memory_space<vmem>>, vector<128x48xbf16>
    %cst_76 = arith.constant dense<0.000000e+00> : vector<16x48xf32>
    %363 = tpu.matmul %361, %362, %cst_76 {dimension_numbers = #tpu.dot_dimension_numbers<[1], [0], [0], [1], [0, 0, 1, 1], [], []>} : vector<16x128xbf16>, vector<128x48xbf16>, vector<16x48xf32> -> vector<16x48xf32>
    %364 = arith.addf %360, %363 : vector<16x48xf32>
    %c0_77 = arith.constant 0 : index
    %c0_78 = arith.constant 0 : index
    %365 = vector.load %arg11[%c0_77, %c0_78] : memref<1x48xf32, #tpu.memory_space<vmem>>, vector<1x48xf32>
    %366 = vector.broadcast %365 : vector<1x48xf32> to vector<16x48xf32>
    %367 = arith.addf %364, %366 : vector<16x48xf32>
    %cst_79 = arith.constant 0.000000e+00 : f32
    %368 = vector.broadcast %cst_79 : f32 to vector<16x48xf32>
    %369 = arith.maximumf %367, %368 : vector<16x48xf32>
    %370 = arith.truncf %369 : vector<16x48xf32> to vector<16x48xbf16>
    %c0_80 = arith.constant 0 : index
    %c0_81 = arith.constant 0 : index
    %371 = vector.load %arg12[%c0_80, %c0_81] : memref<48x128xbf16, #tpu.memory_space<vmem>>, vector<48x128xbf16>
    %c0_82 = arith.constant 0 : index
    %c0_83 = arith.constant 0 : index
    %372 = vector.load %arg13[%c0_82, %c0_83] : memref<48x128xbf16, #tpu.memory_space<vmem>>, vector<48x128xbf16>
    %c0_84 = arith.constant 0 : index
    %c0_85 = arith.constant 0 : index
    %373 = vector.load %arg14[%c0_84, %c0_85] : memref<1x128xf32, #tpu.memory_space<vmem>>, vector<1x128xf32>
    %c0_86 = arith.constant 0 : index
    %c0_87 = arith.constant 0 : index
    %374 = vector.load %arg15[%c0_86, %c0_87] : memref<32x128xbf16, #tpu.memory_space<vmem>>, vector<32x128xbf16>
    %c0_88 = arith.constant 0 : index
    %c0_89 = arith.constant 0 : index
    %375 = vector.load %arg16[%c0_88, %c0_89] : memref<16x128xbf16, #tpu.memory_space<vmem>>, vector<16x128xbf16>
    %c0_90 = arith.constant 0 : index
    %c0_91 = arith.constant 0 : index
    %376 = vector.load %arg17[%c0_90, %c0_91] : memref<16x128xbf16, #tpu.memory_space<vmem>>, vector<16x128xbf16>
    %c0_92 = arith.constant 0 : index
    %c0_93 = arith.constant 0 : index
    %377 = vector.load %arg18[%c0_92, %c0_93] : memref<1x128xf32, #tpu.memory_space<vmem>>, vector<1x128xf32>
    %cst_94 = arith.constant dense<0.000000e+00> : vector<16x128xf32>
    %378 = tpu.matmul %370, %371, %cst_94 {dimension_numbers = #tpu.dot_dimension_numbers<[1], [0], [0], [1], [0, 0, 1, 1], [], []>} : vector<16x48xbf16>, vector<48x128xbf16>, vector<16x128xf32> -> vector<16x128xf32>
    %379 = vector.broadcast %373 : vector<1x128xf32> to vector<16x128xf32>
    %380 = arith.addf %378, %379 : vector<16x128xf32>
    %cst_95 = arith.constant dense<0.000000e+00> : vector<16x128xf32>
    %381 = tpu.matmul %370, %372, %cst_95 {dimension_numbers = #tpu.dot_dimension_numbers<[1], [0], [0], [1], [0, 0, 1, 1], [], []>} : vector<16x48xbf16>, vector<48x128xbf16>, vector<16x128xf32> -> vector<16x128xf32>
    %cst_96 = arith.constant 0.000000e+00 : f32
    %382 = vector.broadcast %cst_96 : f32 to vector<2x32xf32>
    %cst_97 = arith.constant 0.000000e+00 : f32
    %383 = vector.broadcast %cst_97 : f32 to vector<2x32xf32>
    %384 = vector.extract_strided_slice %380 {offsets = [0, 0], sizes = [2, 128], strides = [1, 1]} : vector<16x128xf32> to vector<2x128xf32>
    %385 = vector.extract_strided_slice %381 {offsets = [14, 0], sizes = [2, 128], strides = [1, 1]} : vector<16x128xf32> to vector<2x128xf32>
    %386 = arith.addf %384, %385 : vector<2x128xf32>
    %387 = arith.truncf %382 : vector<2x32xf32> to vector<2x32xbf16>
    %cst_98 = arith.constant dense<0.000000e+00> : vector<2x128xf32>
    %388 = tpu.matmul %387, %374, %cst_98 {dimension_numbers = #tpu.dot_dimension_numbers<[1], [0], [0], [1], [0, 0, 1, 1], [], []>} : vector<2x32xbf16>, vector<32x128xbf16>, vector<2x128xf32> -> vector<2x128xf32>
    %389 = arith.addf %386, %388 : vector<2x128xf32>
    %390 = vector.extract_strided_slice %389 {offsets = [0, 0], sizes = [2, 32], strides = [1, 1]} : vector<2x128xf32> to vector<2x32xf32>
    %391 = arith.negf %390 : vector<2x32xf32>
    %392 = math.exp %391 : vector<2x32xf32>
    %cst_99 = arith.constant 1.000000e+00 : f32
    %393 = vector.broadcast %cst_99 : f32 to vector<2x32xf32>
    %394 = arith.addf %393, %392 : vector<2x32xf32>
    %395 = arith.divf %393, %394 : vector<2x32xf32>
    %396 = vector.extract_strided_slice %389 {offsets = [0, 32], sizes = [2, 32], strides = [1, 1]} : vector<2x128xf32> to vector<2x32xf32>
    %397 = arith.negf %396 : vector<2x32xf32>
    %398 = math.exp %397 : vector<2x32xf32>
    %cst_100 = arith.constant 1.000000e+00 : f32
    %399 = vector.broadcast %cst_100 : f32 to vector<2x32xf32>
    %400 = arith.addf %399, %398 : vector<2x32xf32>
    %401 = arith.divf %399, %400 : vector<2x32xf32>
    %402 = vector.extract_strided_slice %389 {offsets = [0, 64], sizes = [2, 32], strides = [1, 1]} : vector<2x128xf32> to vector<2x32xf32>
    %403 = math.tanh %402 : vector<2x32xf32>
    %404 = vector.extract_strided_slice %389 {offsets = [0, 96], sizes = [2, 32], strides = [1, 1]} : vector<2x128xf32> to vector<2x32xf32>
    %405 = arith.negf %404 : vector<2x32xf32>
    %406 = math.exp %405 : vector<2x32xf32>
    %cst_101 = arith.constant 1.000000e+00 : f32
    %407 = vector.broadcast %cst_101 : f32 to vector<2x32xf32>
    %408 = arith.addf %407, %406 : vector<2x32xf32>
    %409 = arith.divf %407, %408 : vector<2x32xf32>
    %410 = arith.mulf %401, %383 : vector<2x32xf32>
    %411 = arith.mulf %395, %403 : vector<2x32xf32>
    %412 = arith.addf %410, %411 : vector<2x32xf32>
    %413 = math.tanh %412 : vector<2x32xf32>
    %414 = arith.mulf %409, %413 : vector<2x32xf32>
    %415 = vector.extract_strided_slice %2 {offsets = [0, 0], sizes = [2, 32], strides = [1, 1]} : vector<16x32xf32> to vector<2x32xf32>
    %416 = arith.mulf %415, %414 : vector<2x32xf32>
    %cst_102 = arith.constant 1.000000e+00 : f32
    %417 = vector.broadcast %cst_102 : f32 to vector<2x32xf32>
    %418 = arith.subf %417, %415 : vector<2x32xf32>
    %419 = arith.mulf %418, %382 : vector<2x32xf32>
    %420 = arith.addf %416, %419 : vector<2x32xf32>
    %421 = arith.mulf %415, %412 : vector<2x32xf32>
    %cst_103 = arith.constant 1.000000e+00 : f32
    %422 = vector.broadcast %cst_103 : f32 to vector<2x32xf32>
    %423 = arith.subf %422, %415 : vector<2x32xf32>
    %424 = arith.mulf %423, %383 : vector<2x32xf32>
    %425 = arith.addf %421, %424 : vector<2x32xf32>
    %426 = vector.extract_strided_slice %380 {offsets = [2, 0], sizes = [2, 128], strides = [1, 1]} : vector<16x128xf32> to vector<2x128xf32>
    %427 = vector.extract_strided_slice %381 {offsets = [12, 0], sizes = [2, 128], strides = [1, 1]} : vector<16x128xf32> to vector<2x128xf32>
    %428 = arith.addf %426, %427 : vector<2x128xf32>
    %429 = arith.truncf %420 : vector<2x32xf32> to vector<2x32xbf16>
    %cst_104 = arith.constant dense<0.000000e+00> : vector<2x128xf32>
    %430 = tpu.matmul %429, %374, %cst_104 {dimension_numbers = #tpu.dot_dimension_numbers<[1], [0], [0], [1], [0, 0, 1, 1], [], []>} : vector<2x32xbf16>, vector<32x128xbf16>, vector<2x128xf32> -> vector<2x128xf32>
    %431 = arith.addf %428, %430 : vector<2x128xf32>
    %432 = vector.extract_strided_slice %431 {offsets = [0, 0], sizes = [2, 32], strides = [1, 1]} : vector<2x128xf32> to vector<2x32xf32>
    %433 = arith.negf %432 : vector<2x32xf32>
    %434 = math.exp %433 : vector<2x32xf32>
    %cst_105 = arith.constant 1.000000e+00 : f32
    %435 = vector.broadcast %cst_105 : f32 to vector<2x32xf32>
    %436 = arith.addf %435, %434 : vector<2x32xf32>
    %437 = arith.divf %435, %436 : vector<2x32xf32>
    %438 = vector.extract_strided_slice %431 {offsets = [0, 32], sizes = [2, 32], strides = [1, 1]} : vector<2x128xf32> to vector<2x32xf32>
    %439 = arith.negf %438 : vector<2x32xf32>
    %440 = math.exp %439 : vector<2x32xf32>
    %cst_106 = arith.constant 1.000000e+00 : f32
    %441 = vector.broadcast %cst_106 : f32 to vector<2x32xf32>
    %442 = arith.addf %441, %440 : vector<2x32xf32>
    %443 = arith.divf %441, %442 : vector<2x32xf32>
    %444 = vector.extract_strided_slice %431 {offsets = [0, 64], sizes = [2, 32], strides = [1, 1]} : vector<2x128xf32> to vector<2x32xf32>
    %445 = math.tanh %444 : vector<2x32xf32>
    %446 = vector.extract_strided_slice %431 {offsets = [0, 96], sizes = [2, 32], strides = [1, 1]} : vector<2x128xf32> to vector<2x32xf32>
    %447 = arith.negf %446 : vector<2x32xf32>
    %448 = math.exp %447 : vector<2x32xf32>
    %cst_107 = arith.constant 1.000000e+00 : f32
    %449 = vector.broadcast %cst_107 : f32 to vector<2x32xf32>
    %450 = arith.addf %449, %448 : vector<2x32xf32>
    %451 = arith.divf %449, %450 : vector<2x32xf32>
    %452 = arith.mulf %443, %425 : vector<2x32xf32>
    %453 = arith.mulf %437, %445 : vector<2x32xf32>
    %454 = arith.addf %452, %453 : vector<2x32xf32>
    %455 = math.tanh %454 : vector<2x32xf32>
    %456 = arith.mulf %451, %455 : vector<2x32xf32>
    %457 = vector.extract_strided_slice %2 {offsets = [2, 0], sizes = [2, 32], strides = [1, 1]} : vector<16x32xf32> to vector<2x32xf32>
    %458 = arith.mulf %457, %456 : vector<2x32xf32>
    %cst_108 = arith.constant 1.000000e+00 : f32
    %459 = vector.broadcast %cst_108 : f32 to vector<2x32xf32>
    %460 = arith.subf %459, %457 : vector<2x32xf32>
    %461 = arith.mulf %460, %420 : vector<2x32xf32>
    %462 = arith.addf %458, %461 : vector<2x32xf32>
    %463 = arith.mulf %457, %454 : vector<2x32xf32>
    %cst_109 = arith.constant 1.000000e+00 : f32
    %464 = vector.broadcast %cst_109 : f32 to vector<2x32xf32>
    %465 = arith.subf %464, %457 : vector<2x32xf32>
    %466 = arith.mulf %465, %425 : vector<2x32xf32>
    %467 = arith.addf %463, %466 : vector<2x32xf32>
    %468 = vector.extract_strided_slice %380 {offsets = [4, 0], sizes = [2, 128], strides = [1, 1]} : vector<16x128xf32> to vector<2x128xf32>
    %469 = vector.extract_strided_slice %381 {offsets = [10, 0], sizes = [2, 128], strides = [1, 1]} : vector<16x128xf32> to vector<2x128xf32>
    %470 = arith.addf %468, %469 : vector<2x128xf32>
    %471 = arith.truncf %462 : vector<2x32xf32> to vector<2x32xbf16>
    %cst_110 = arith.constant dense<0.000000e+00> : vector<2x128xf32>
    %472 = tpu.matmul %471, %374, %cst_110 {dimension_numbers = #tpu.dot_dimension_numbers<[1], [0], [0], [1], [0, 0, 1, 1], [], []>} : vector<2x32xbf16>, vector<32x128xbf16>, vector<2x128xf32> -> vector<2x128xf32>
    %473 = arith.addf %470, %472 : vector<2x128xf32>
    %474 = vector.extract_strided_slice %473 {offsets = [0, 0], sizes = [2, 32], strides = [1, 1]} : vector<2x128xf32> to vector<2x32xf32>
    %475 = arith.negf %474 : vector<2x32xf32>
    %476 = math.exp %475 : vector<2x32xf32>
    %cst_111 = arith.constant 1.000000e+00 : f32
    %477 = vector.broadcast %cst_111 : f32 to vector<2x32xf32>
    %478 = arith.addf %477, %476 : vector<2x32xf32>
    %479 = arith.divf %477, %478 : vector<2x32xf32>
    %480 = vector.extract_strided_slice %473 {offsets = [0, 32], sizes = [2, 32], strides = [1, 1]} : vector<2x128xf32> to vector<2x32xf32>
    %481 = arith.negf %480 : vector<2x32xf32>
    %482 = math.exp %481 : vector<2x32xf32>
    %cst_112 = arith.constant 1.000000e+00 : f32
    %483 = vector.broadcast %cst_112 : f32 to vector<2x32xf32>
    %484 = arith.addf %483, %482 : vector<2x32xf32>
    %485 = arith.divf %483, %484 : vector<2x32xf32>
    %486 = vector.extract_strided_slice %473 {offsets = [0, 64], sizes = [2, 32], strides = [1, 1]} : vector<2x128xf32> to vector<2x32xf32>
    %487 = math.tanh %486 : vector<2x32xf32>
    %488 = vector.extract_strided_slice %473 {offsets = [0, 96], sizes = [2, 32], strides = [1, 1]} : vector<2x128xf32> to vector<2x32xf32>
    %489 = arith.negf %488 : vector<2x32xf32>
    %490 = math.exp %489 : vector<2x32xf32>
    %cst_113 = arith.constant 1.000000e+00 : f32
    %491 = vector.broadcast %cst_113 : f32 to vector<2x32xf32>
    %492 = arith.addf %491, %490 : vector<2x32xf32>
    %493 = arith.divf %491, %492 : vector<2x32xf32>
    %494 = arith.mulf %485, %467 : vector<2x32xf32>
    %495 = arith.mulf %479, %487 : vector<2x32xf32>
    %496 = arith.addf %494, %495 : vector<2x32xf32>
    %497 = math.tanh %496 : vector<2x32xf32>
    %498 = arith.mulf %493, %497 : vector<2x32xf32>
    %499 = vector.extract_strided_slice %2 {offsets = [4, 0], sizes = [2, 32], strides = [1, 1]} : vector<16x32xf32> to vector<2x32xf32>
    %500 = arith.mulf %499, %498 : vector<2x32xf32>
    %cst_114 = arith.constant 1.000000e+00 : f32
    %501 = vector.broadcast %cst_114 : f32 to vector<2x32xf32>
    %502 = arith.subf %501, %499 : vector<2x32xf32>
    %503 = arith.mulf %502, %462 : vector<2x32xf32>
    %504 = arith.addf %500, %503 : vector<2x32xf32>
    %505 = arith.mulf %499, %496 : vector<2x32xf32>
    %cst_115 = arith.constant 1.000000e+00 : f32
    %506 = vector.broadcast %cst_115 : f32 to vector<2x32xf32>
    %507 = arith.subf %506, %499 : vector<2x32xf32>
    %508 = arith.mulf %507, %467 : vector<2x32xf32>
    %509 = arith.addf %505, %508 : vector<2x32xf32>
    %510 = vector.extract_strided_slice %380 {offsets = [6, 0], sizes = [2, 128], strides = [1, 1]} : vector<16x128xf32> to vector<2x128xf32>
    %511 = vector.extract_strided_slice %381 {offsets = [8, 0], sizes = [2, 128], strides = [1, 1]} : vector<16x128xf32> to vector<2x128xf32>
    %512 = arith.addf %510, %511 : vector<2x128xf32>
    %513 = arith.truncf %504 : vector<2x32xf32> to vector<2x32xbf16>
    %cst_116 = arith.constant dense<0.000000e+00> : vector<2x128xf32>
    %514 = tpu.matmul %513, %374, %cst_116 {dimension_numbers = #tpu.dot_dimension_numbers<[1], [0], [0], [1], [0, 0, 1, 1], [], []>} : vector<2x32xbf16>, vector<32x128xbf16>, vector<2x128xf32> -> vector<2x128xf32>
    %515 = arith.addf %512, %514 : vector<2x128xf32>
    %516 = vector.extract_strided_slice %515 {offsets = [0, 0], sizes = [2, 32], strides = [1, 1]} : vector<2x128xf32> to vector<2x32xf32>
    %517 = arith.negf %516 : vector<2x32xf32>
    %518 = math.exp %517 : vector<2x32xf32>
    %cst_117 = arith.constant 1.000000e+00 : f32
    %519 = vector.broadcast %cst_117 : f32 to vector<2x32xf32>
    %520 = arith.addf %519, %518 : vector<2x32xf32>
    %521 = arith.divf %519, %520 : vector<2x32xf32>
    %522 = vector.extract_strided_slice %515 {offsets = [0, 32], sizes = [2, 32], strides = [1, 1]} : vector<2x128xf32> to vector<2x32xf32>
    %523 = arith.negf %522 : vector<2x32xf32>
    %524 = math.exp %523 : vector<2x32xf32>
    %cst_118 = arith.constant 1.000000e+00 : f32
    %525 = vector.broadcast %cst_118 : f32 to vector<2x32xf32>
    %526 = arith.addf %525, %524 : vector<2x32xf32>
    %527 = arith.divf %525, %526 : vector<2x32xf32>
    %528 = vector.extract_strided_slice %515 {offsets = [0, 64], sizes = [2, 32], strides = [1, 1]} : vector<2x128xf32> to vector<2x32xf32>
    %529 = math.tanh %528 : vector<2x32xf32>
    %530 = vector.extract_strided_slice %515 {offsets = [0, 96], sizes = [2, 32], strides = [1, 1]} : vector<2x128xf32> to vector<2x32xf32>
    %531 = arith.negf %530 : vector<2x32xf32>
    %532 = math.exp %531 : vector<2x32xf32>
    %cst_119 = arith.constant 1.000000e+00 : f32
    %533 = vector.broadcast %cst_119 : f32 to vector<2x32xf32>
    %534 = arith.addf %533, %532 : vector<2x32xf32>
    %535 = arith.divf %533, %534 : vector<2x32xf32>
    %536 = arith.mulf %527, %509 : vector<2x32xf32>
    %537 = arith.mulf %521, %529 : vector<2x32xf32>
    %538 = arith.addf %536, %537 : vector<2x32xf32>
    %539 = math.tanh %538 : vector<2x32xf32>
    %540 = arith.mulf %535, %539 : vector<2x32xf32>
    %541 = vector.extract_strided_slice %2 {offsets = [6, 0], sizes = [2, 32], strides = [1, 1]} : vector<16x32xf32> to vector<2x32xf32>
    %542 = arith.mulf %541, %540 : vector<2x32xf32>
    %cst_120 = arith.constant 1.000000e+00 : f32
    %543 = vector.broadcast %cst_120 : f32 to vector<2x32xf32>
    %544 = arith.subf %543, %541 : vector<2x32xf32>
    %545 = arith.mulf %544, %504 : vector<2x32xf32>
    %546 = arith.addf %542, %545 : vector<2x32xf32>
    %547 = arith.mulf %541, %538 : vector<2x32xf32>
    %cst_121 = arith.constant 1.000000e+00 : f32
    %548 = vector.broadcast %cst_121 : f32 to vector<2x32xf32>
    %549 = arith.subf %548, %541 : vector<2x32xf32>
    %550 = arith.mulf %549, %509 : vector<2x32xf32>
    %551 = arith.addf %547, %550 : vector<2x32xf32>
    %552 = vector.extract_strided_slice %380 {offsets = [8, 0], sizes = [2, 128], strides = [1, 1]} : vector<16x128xf32> to vector<2x128xf32>
    %553 = vector.extract_strided_slice %381 {offsets = [6, 0], sizes = [2, 128], strides = [1, 1]} : vector<16x128xf32> to vector<2x128xf32>
    %554 = arith.addf %552, %553 : vector<2x128xf32>
    %555 = arith.truncf %546 : vector<2x32xf32> to vector<2x32xbf16>
    %cst_122 = arith.constant dense<0.000000e+00> : vector<2x128xf32>
    %556 = tpu.matmul %555, %374, %cst_122 {dimension_numbers = #tpu.dot_dimension_numbers<[1], [0], [0], [1], [0, 0, 1, 1], [], []>} : vector<2x32xbf16>, vector<32x128xbf16>, vector<2x128xf32> -> vector<2x128xf32>
    %557 = arith.addf %554, %556 : vector<2x128xf32>
    %558 = vector.extract_strided_slice %557 {offsets = [0, 0], sizes = [2, 32], strides = [1, 1]} : vector<2x128xf32> to vector<2x32xf32>
    %559 = arith.negf %558 : vector<2x32xf32>
    %560 = math.exp %559 : vector<2x32xf32>
    %cst_123 = arith.constant 1.000000e+00 : f32
    %561 = vector.broadcast %cst_123 : f32 to vector<2x32xf32>
    %562 = arith.addf %561, %560 : vector<2x32xf32>
    %563 = arith.divf %561, %562 : vector<2x32xf32>
    %564 = vector.extract_strided_slice %557 {offsets = [0, 32], sizes = [2, 32], strides = [1, 1]} : vector<2x128xf32> to vector<2x32xf32>
    %565 = arith.negf %564 : vector<2x32xf32>
    %566 = math.exp %565 : vector<2x32xf32>
    %cst_124 = arith.constant 1.000000e+00 : f32
    %567 = vector.broadcast %cst_124 : f32 to vector<2x32xf32>
    %568 = arith.addf %567, %566 : vector<2x32xf32>
    %569 = arith.divf %567, %568 : vector<2x32xf32>
    %570 = vector.extract_strided_slice %557 {offsets = [0, 64], sizes = [2, 32], strides = [1, 1]} : vector<2x128xf32> to vector<2x32xf32>
    %571 = math.tanh %570 : vector<2x32xf32>
    %572 = vector.extract_strided_slice %557 {offsets = [0, 96], sizes = [2, 32], strides = [1, 1]} : vector<2x128xf32> to vector<2x32xf32>
    %573 = arith.negf %572 : vector<2x32xf32>
    %574 = math.exp %573 : vector<2x32xf32>
    %cst_125 = arith.constant 1.000000e+00 : f32
    %575 = vector.broadcast %cst_125 : f32 to vector<2x32xf32>
    %576 = arith.addf %575, %574 : vector<2x32xf32>
    %577 = arith.divf %575, %576 : vector<2x32xf32>
    %578 = arith.mulf %569, %551 : vector<2x32xf32>
    %579 = arith.mulf %563, %571 : vector<2x32xf32>
    %580 = arith.addf %578, %579 : vector<2x32xf32>
    %581 = math.tanh %580 : vector<2x32xf32>
    %582 = arith.mulf %577, %581 : vector<2x32xf32>
    %583 = vector.extract_strided_slice %2 {offsets = [8, 0], sizes = [2, 32], strides = [1, 1]} : vector<16x32xf32> to vector<2x32xf32>
    %584 = arith.mulf %583, %582 : vector<2x32xf32>
    %cst_126 = arith.constant 1.000000e+00 : f32
    %585 = vector.broadcast %cst_126 : f32 to vector<2x32xf32>
    %586 = arith.subf %585, %583 : vector<2x32xf32>
    %587 = arith.mulf %586, %546 : vector<2x32xf32>
    %588 = arith.addf %584, %587 : vector<2x32xf32>
    %589 = arith.mulf %583, %580 : vector<2x32xf32>
    %cst_127 = arith.constant 1.000000e+00 : f32
    %590 = vector.broadcast %cst_127 : f32 to vector<2x32xf32>
    %591 = arith.subf %590, %583 : vector<2x32xf32>
    %592 = arith.mulf %591, %551 : vector<2x32xf32>
    %593 = arith.addf %589, %592 : vector<2x32xf32>
    %594 = vector.extract_strided_slice %380 {offsets = [10, 0], sizes = [2, 128], strides = [1, 1]} : vector<16x128xf32> to vector<2x128xf32>
    %595 = vector.extract_strided_slice %381 {offsets = [4, 0], sizes = [2, 128], strides = [1, 1]} : vector<16x128xf32> to vector<2x128xf32>
    %596 = arith.addf %594, %595 : vector<2x128xf32>
    %597 = arith.truncf %588 : vector<2x32xf32> to vector<2x32xbf16>
    %cst_128 = arith.constant dense<0.000000e+00> : vector<2x128xf32>
    %598 = tpu.matmul %597, %374, %cst_128 {dimension_numbers = #tpu.dot_dimension_numbers<[1], [0], [0], [1], [0, 0, 1, 1], [], []>} : vector<2x32xbf16>, vector<32x128xbf16>, vector<2x128xf32> -> vector<2x128xf32>
    %599 = arith.addf %596, %598 : vector<2x128xf32>
    %600 = vector.extract_strided_slice %599 {offsets = [0, 0], sizes = [2, 32], strides = [1, 1]} : vector<2x128xf32> to vector<2x32xf32>
    %601 = arith.negf %600 : vector<2x32xf32>
    %602 = math.exp %601 : vector<2x32xf32>
    %cst_129 = arith.constant 1.000000e+00 : f32
    %603 = vector.broadcast %cst_129 : f32 to vector<2x32xf32>
    %604 = arith.addf %603, %602 : vector<2x32xf32>
    %605 = arith.divf %603, %604 : vector<2x32xf32>
    %606 = vector.extract_strided_slice %599 {offsets = [0, 32], sizes = [2, 32], strides = [1, 1]} : vector<2x128xf32> to vector<2x32xf32>
    %607 = arith.negf %606 : vector<2x32xf32>
    %608 = math.exp %607 : vector<2x32xf32>
    %cst_130 = arith.constant 1.000000e+00 : f32
    %609 = vector.broadcast %cst_130 : f32 to vector<2x32xf32>
    %610 = arith.addf %609, %608 : vector<2x32xf32>
    %611 = arith.divf %609, %610 : vector<2x32xf32>
    %612 = vector.extract_strided_slice %599 {offsets = [0, 64], sizes = [2, 32], strides = [1, 1]} : vector<2x128xf32> to vector<2x32xf32>
    %613 = math.tanh %612 : vector<2x32xf32>
    %614 = vector.extract_strided_slice %599 {offsets = [0, 96], sizes = [2, 32], strides = [1, 1]} : vector<2x128xf32> to vector<2x32xf32>
    %615 = arith.negf %614 : vector<2x32xf32>
    %616 = math.exp %615 : vector<2x32xf32>
    %cst_131 = arith.constant 1.000000e+00 : f32
    %617 = vector.broadcast %cst_131 : f32 to vector<2x32xf32>
    %618 = arith.addf %617, %616 : vector<2x32xf32>
    %619 = arith.divf %617, %618 : vector<2x32xf32>
    %620 = arith.mulf %611, %593 : vector<2x32xf32>
    %621 = arith.mulf %605, %613 : vector<2x32xf32>
    %622 = arith.addf %620, %621 : vector<2x32xf32>
    %623 = math.tanh %622 : vector<2x32xf32>
    %624 = arith.mulf %619, %623 : vector<2x32xf32>
    %625 = vector.extract_strided_slice %2 {offsets = [10, 0], sizes = [2, 32], strides = [1, 1]} : vector<16x32xf32> to vector<2x32xf32>
    %626 = arith.mulf %625, %624 : vector<2x32xf32>
    %cst_132 = arith.constant 1.000000e+00 : f32
    %627 = vector.broadcast %cst_132 : f32 to vector<2x32xf32>
    %628 = arith.subf %627, %625 : vector<2x32xf32>
    %629 = arith.mulf %628, %588 : vector<2x32xf32>
    %630 = arith.addf %626, %629 : vector<2x32xf32>
    %631 = arith.mulf %625, %622 : vector<2x32xf32>
    %cst_133 = arith.constant 1.000000e+00 : f32
    %632 = vector.broadcast %cst_133 : f32 to vector<2x32xf32>
    %633 = arith.subf %632, %625 : vector<2x32xf32>
    %634 = arith.mulf %633, %593 : vector<2x32xf32>
    %635 = arith.addf %631, %634 : vector<2x32xf32>
    %636 = vector.extract_strided_slice %380 {offsets = [12, 0], sizes = [2, 128], strides = [1, 1]} : vector<16x128xf32> to vector<2x128xf32>
    %637 = vector.extract_strided_slice %381 {offsets = [2, 0], sizes = [2, 128], strides = [1, 1]} : vector<16x128xf32> to vector<2x128xf32>
    %638 = arith.addf %636, %637 : vector<2x128xf32>
    %639 = arith.truncf %630 : vector<2x32xf32> to vector<2x32xbf16>
    %cst_134 = arith.constant dense<0.000000e+00> : vector<2x128xf32>
    %640 = tpu.matmul %639, %374, %cst_134 {dimension_numbers = #tpu.dot_dimension_numbers<[1], [0], [0], [1], [0, 0, 1, 1], [], []>} : vector<2x32xbf16>, vector<32x128xbf16>, vector<2x128xf32> -> vector<2x128xf32>
    %641 = arith.addf %638, %640 : vector<2x128xf32>
    %642 = vector.extract_strided_slice %641 {offsets = [0, 0], sizes = [2, 32], strides = [1, 1]} : vector<2x128xf32> to vector<2x32xf32>
    %643 = arith.negf %642 : vector<2x32xf32>
    %644 = math.exp %643 : vector<2x32xf32>
    %cst_135 = arith.constant 1.000000e+00 : f32
    %645 = vector.broadcast %cst_135 : f32 to vector<2x32xf32>
    %646 = arith.addf %645, %644 : vector<2x32xf32>
    %647 = arith.divf %645, %646 : vector<2x32xf32>
    %648 = vector.extract_strided_slice %641 {offsets = [0, 32], sizes = [2, 32], strides = [1, 1]} : vector<2x128xf32> to vector<2x32xf32>
    %649 = arith.negf %648 : vector<2x32xf32>
    %650 = math.exp %649 : vector<2x32xf32>
    %cst_136 = arith.constant 1.000000e+00 : f32
    %651 = vector.broadcast %cst_136 : f32 to vector<2x32xf32>
    %652 = arith.addf %651, %650 : vector<2x32xf32>
    %653 = arith.divf %651, %652 : vector<2x32xf32>
    %654 = vector.extract_strided_slice %641 {offsets = [0, 64], sizes = [2, 32], strides = [1, 1]} : vector<2x128xf32> to vector<2x32xf32>
    %655 = math.tanh %654 : vector<2x32xf32>
    %656 = vector.extract_strided_slice %641 {offsets = [0, 96], sizes = [2, 32], strides = [1, 1]} : vector<2x128xf32> to vector<2x32xf32>
    %657 = arith.negf %656 : vector<2x32xf32>
    %658 = math.exp %657 : vector<2x32xf32>
    %cst_137 = arith.constant 1.000000e+00 : f32
    %659 = vector.broadcast %cst_137 : f32 to vector<2x32xf32>
    %660 = arith.addf %659, %658 : vector<2x32xf32>
    %661 = arith.divf %659, %660 : vector<2x32xf32>
    %662 = arith.mulf %653, %635 : vector<2x32xf32>
    %663 = arith.mulf %647, %655 : vector<2x32xf32>
    %664 = arith.addf %662, %663 : vector<2x32xf32>
    %665 = math.tanh %664 : vector<2x32xf32>
    %666 = arith.mulf %661, %665 : vector<2x32xf32>
    %667 = vector.extract_strided_slice %2 {offsets = [12, 0], sizes = [2, 32], strides = [1, 1]} : vector<16x32xf32> to vector<2x32xf32>
    %668 = arith.mulf %667, %666 : vector<2x32xf32>
    %cst_138 = arith.constant 1.000000e+00 : f32
    %669 = vector.broadcast %cst_138 : f32 to vector<2x32xf32>
    %670 = arith.subf %669, %667 : vector<2x32xf32>
    %671 = arith.mulf %670, %630 : vector<2x32xf32>
    %672 = arith.addf %668, %671 : vector<2x32xf32>
    %673 = arith.mulf %667, %664 : vector<2x32xf32>
    %cst_139 = arith.constant 1.000000e+00 : f32
    %674 = vector.broadcast %cst_139 : f32 to vector<2x32xf32>
    %675 = arith.subf %674, %667 : vector<2x32xf32>
    %676 = arith.mulf %675, %635 : vector<2x32xf32>
    %677 = arith.addf %673, %676 : vector<2x32xf32>
    %678 = vector.extract_strided_slice %380 {offsets = [14, 0], sizes = [2, 128], strides = [1, 1]} : vector<16x128xf32> to vector<2x128xf32>
    %679 = vector.extract_strided_slice %381 {offsets = [0, 0], sizes = [2, 128], strides = [1, 1]} : vector<16x128xf32> to vector<2x128xf32>
    %680 = arith.addf %678, %679 : vector<2x128xf32>
    %681 = arith.truncf %672 : vector<2x32xf32> to vector<2x32xbf16>
    %cst_140 = arith.constant dense<0.000000e+00> : vector<2x128xf32>
    %682 = tpu.matmul %681, %374, %cst_140 {dimension_numbers = #tpu.dot_dimension_numbers<[1], [0], [0], [1], [0, 0, 1, 1], [], []>} : vector<2x32xbf16>, vector<32x128xbf16>, vector<2x128xf32> -> vector<2x128xf32>
    %683 = arith.addf %680, %682 : vector<2x128xf32>
    %684 = vector.extract_strided_slice %683 {offsets = [0, 0], sizes = [2, 32], strides = [1, 1]} : vector<2x128xf32> to vector<2x32xf32>
    %685 = arith.negf %684 : vector<2x32xf32>
    %686 = math.exp %685 : vector<2x32xf32>
    %cst_141 = arith.constant 1.000000e+00 : f32
    %687 = vector.broadcast %cst_141 : f32 to vector<2x32xf32>
    %688 = arith.addf %687, %686 : vector<2x32xf32>
    %689 = arith.divf %687, %688 : vector<2x32xf32>
    %690 = vector.extract_strided_slice %683 {offsets = [0, 32], sizes = [2, 32], strides = [1, 1]} : vector<2x128xf32> to vector<2x32xf32>
    %691 = arith.negf %690 : vector<2x32xf32>
    %692 = math.exp %691 : vector<2x32xf32>
    %cst_142 = arith.constant 1.000000e+00 : f32
    %693 = vector.broadcast %cst_142 : f32 to vector<2x32xf32>
    %694 = arith.addf %693, %692 : vector<2x32xf32>
    %695 = arith.divf %693, %694 : vector<2x32xf32>
    %696 = vector.extract_strided_slice %683 {offsets = [0, 64], sizes = [2, 32], strides = [1, 1]} : vector<2x128xf32> to vector<2x32xf32>
    %697 = math.tanh %696 : vector<2x32xf32>
    %698 = vector.extract_strided_slice %683 {offsets = [0, 96], sizes = [2, 32], strides = [1, 1]} : vector<2x128xf32> to vector<2x32xf32>
    %699 = arith.negf %698 : vector<2x32xf32>
    %700 = math.exp %699 : vector<2x32xf32>
    %cst_143 = arith.constant 1.000000e+00 : f32
    %701 = vector.broadcast %cst_143 : f32 to vector<2x32xf32>
    %702 = arith.addf %701, %700 : vector<2x32xf32>
    %703 = arith.divf %701, %702 : vector<2x32xf32>
    %704 = arith.mulf %695, %677 : vector<2x32xf32>
    %705 = arith.mulf %689, %697 : vector<2x32xf32>
    %706 = arith.addf %704, %705 : vector<2x32xf32>
    %707 = math.tanh %706 : vector<2x32xf32>
    %708 = arith.mulf %703, %707 : vector<2x32xf32>
    %709 = vector.extract_strided_slice %2 {offsets = [14, 0], sizes = [2, 32], strides = [1, 1]} : vector<16x32xf32> to vector<2x32xf32>
    %710 = arith.mulf %709, %708 : vector<2x32xf32>
    %cst_144 = arith.constant 1.000000e+00 : f32
    %711 = vector.broadcast %cst_144 : f32 to vector<2x32xf32>
    %712 = arith.subf %711, %709 : vector<2x32xf32>
    %713 = arith.mulf %712, %672 : vector<2x32xf32>
    %714 = arith.addf %710, %713 : vector<2x32xf32>
    %715 = tpu.concatenate %420, %462, %504, %546, %588, %630, %672, %714 in 0 : vector<2x32xf32>, vector<2x32xf32>, vector<2x32xf32>, vector<2x32xf32>, vector<2x32xf32>, vector<2x32xf32>, vector<2x32xf32>, vector<2x32xf32> -> vector<16x32xf32>
    %716 = vector.extract_strided_slice %715 {offsets = [0, 0], sizes = [16, 16], strides = [1, 1]} : vector<16x32xf32> to vector<16x16xf32>
    %717 = arith.truncf %716 : vector<16x16xf32> to vector<16x16xbf16>
    %718 = tpu.concatenate %714, %672, %630, %588, %546, %504, %462, %420 in 0 : vector<2x32xf32>, vector<2x32xf32>, vector<2x32xf32>, vector<2x32xf32>, vector<2x32xf32>, vector<2x32xf32>, vector<2x32xf32>, vector<2x32xf32> -> vector<16x32xf32>
    %719 = vector.extract_strided_slice %718 {offsets = [0, 16], sizes = [16, 16], strides = [1, 1]} : vector<16x32xf32> to vector<16x16xf32>
    %720 = arith.truncf %719 : vector<16x16xf32> to vector<16x16xbf16>
    %cst_145 = arith.constant dense<0.000000e+00> : vector<16x128xf32>
    %721 = tpu.matmul %717, %375, %cst_145 {dimension_numbers = #tpu.dot_dimension_numbers<[1], [0], [0], [1], [0, 0, 1, 1], [], []>} : vector<16x16xbf16>, vector<16x128xbf16>, vector<16x128xf32> -> vector<16x128xf32>
    %cst_146 = arith.constant dense<0.000000e+00> : vector<16x128xf32>
    %722 = tpu.matmul %720, %376, %cst_146 {dimension_numbers = #tpu.dot_dimension_numbers<[1], [0], [0], [1], [0, 0, 1, 1], [], []>} : vector<16x16xbf16>, vector<16x128xbf16>, vector<16x128xf32> -> vector<16x128xf32>
    %723 = arith.addf %721, %722 : vector<16x128xf32>
    %724 = vector.broadcast %377 : vector<1x128xf32> to vector<16x128xf32>
    %725 = arith.addf %723, %724 : vector<16x128xf32>
    %c0_147 = arith.constant 0 : index
    %c0_148 = arith.constant 0 : index
    %726 = vector.load %arg20[%c0_147, %c0_148] : memref<16x128xf32, #tpu.memory_space<vmem>>, vector<16x128xf32>
    tpu.vector_store %arg20[%c0_147, %c0_148], %725 {strides = array<i32>} : memref<16x128xf32, #tpu.memory_space<vmem>>, vector<16x128xf32>,
    return
  }
}

</mosaic_0001>

<llo_original>
// kernel: _lambda_.1
$region0: #{_lambda_.1}
  #allocation0 [shape = 'u32[]', space=smem, size = 0x4, offset = 0x4, fixed_abs, tag = 'smem constant byte address 0x4 - core index']
  #allocation1 [shape = 'u32[144,128]{1,0:T(1,128)}', space=vmem, size = 0x12000, scoped, tag = 'internal scratch']
  %s0 = inlined_call_operand.vmem [shape: f32[16,48], index: 0, kind: input, shape index: {}]
  %s1 = inlined_call_operand.vmem [shape: f32[16,32], index: 1, kind: input, shape index: {}]
  %s2 = inlined_call_operand.vmem [shape: bf16[48,128], index: 2, kind: input, shape index: {}]
  %s3 = inlined_call_operand.vmem [shape: bf16[48,128], index: 3, kind: input, shape index: {}]
  %s4 = inlined_call_operand.vmem [shape: f32[1,128], index: 4, kind: input, shape index: {}]
  %s5 = inlined_call_operand.vmem [shape: bf16[32,128], index: 5, kind: input, shape index: {}]
  %s6 = inlined_call_operand.vmem [shape: bf16[16,128], index: 6, kind: input, shape index: {}]
  %s7 = inlined_call_operand.vmem [shape: bf16[16,128], index: 7, kind: input, shape index: {}]
  %s8 = inlined_call_operand.vmem [shape: f32[1,128], index: 8, kind: input, shape index: {}]
  %s9 = inlined_call_operand.vmem [shape: bf16[48,48], index: 9, kind: input, shape index: {}]
  %s10 = inlined_call_operand.vmem [shape: bf16[128,48], index: 10, kind: input, shape index: {}]
  %s11 = inlined_call_operand.vmem [shape: f32[1,48], index: 11, kind: input, shape index: {}]
  %s12 = inlined_call_operand.vmem [shape: bf16[48,128], index: 12, kind: input, shape index: {}]
  %s13 = inlined_call_operand.vmem [shape: bf16[48,128], index: 13, kind: input, shape index: {}]
  %s14 = inlined_call_operand.vmem [shape: f32[1,128], index: 14, kind: input, shape index: {}]
  %s15 = inlined_call_operand.vmem [shape: bf16[32,128], index: 15, kind: input, shape index: {}]
  %s16 = inlined_call_operand.vmem [shape: bf16[16,128], index: 16, kind: input, shape index: {}]
  %s17 = inlined_call_operand.vmem [shape: bf16[16,128], index: 17, kind: input, shape index: {}]
  %s18 = inlined_call_operand.vmem [shape: f32[1,128], index: 18, kind: input, shape index: {}]
  %s19 = inlined_call_operand.vmem [shape: f32[16,128], index: 19, kind: output, shape index: {0}]
  %s20 = inlined_call_operand.vmem [shape: f32[16,128], index: 20, kind: output, shape index: {1}]
  %21 = xla_tuple %s19, %s20
  %s22 = sld [smem:[#allocation0]]
  $region94: #{_lambda_.1} parent=0
    _
  %s24 = ssub.s32 1, %s22
  %s25 = scalar_select 0, %s24, %s22
  // Predicated region
  $region2: #{_lambda_.1} parent=0 // pred_check
    _
  $region3: #{_lambda_.1} parent=0 // pred_check_branch
    %27 = sbr.rel (0) target = $region5
  $region4: #{_lambda_.1} parent=0 // pred_region
    _
  $region5: #{_lambda_.1} parent=0 // pred_fallthru
    _
  // Predicated region
  $region6: #{_lambda_.1} parent=0 // pred_check
    _
  $region7: #{_lambda_.1} parent=0 // pred_check_branch
    %29 = sbr.rel (0) target = $region9
  $region8: #{_lambda_.1} parent=0 // pred_region
    _
  $region9: #{_lambda_.1} parent=0 // pred_fallthru
    _
  // Predicated region
  $region10: #{_lambda_.1} parent=0 // pred_check
    _
  $region11: #{_lambda_.1} parent=0 // pred_check_branch
    %31 = sbr.rel (0) target = $region13
  $region12: #{_lambda_.1} parent=0 // pred_region
    _
  $region13: #{_lambda_.1} parent=0 // pred_fallthru
    _
  // Predicated region
  $region14: #{_lambda_.1} parent=0 // pred_check
    _
  $region15: #{_lambda_.1} parent=0 // pred_check_branch
    %33 = sbr.rel (0) target = $region17
  $region16: #{_lambda_.1} parent=0 // pred_region
    _
  $region17: #{_lambda_.1} parent=0 // pred_fallthru
    _
  // Predicated region
  $region18: #{_lambda_.1} parent=0 // pred_check
    _
  $region19: #{_lambda_.1} parent=0 // pred_check_branch
    %35 = sbr.rel (0) target = $region21
  $region20: #{_lambda_.1} parent=0 // pred_region
    _
  $region21: #{_lambda_.1} parent=0 // pred_fallthru
    _
  // Predicated region
  $region22: #{_lambda_.1} parent=0 // pred_check
    _
  $region23: #{_lambda_.1} parent=0 // pred_check_branch
    %37 = sbr.rel (0) target = $region25
  $region24: #{_lambda_.1} parent=0 // pred_region
    _
  $region25: #{_lambda_.1} parent=0 // pred_fallthru
    _
  // Predicated region
  $region26: #{_lambda_.1} parent=0 // pred_check
    _
  $region27: #{_lambda_.1} parent=0 // pred_check_branch
    %39 = sbr.rel (0) target = $region29
  $region28: #{_lambda_.1} parent=0 // pred_region
    _
  $region29: #{_lambda_.1} parent=0 // pred_fallthru
    _
  // Predicated region
  $region30: #{_lambda_.1} parent=0 // pred_check
    _
  $region31: #{_lambda_.1} parent=0 // pred_check_branch
    %41 = sbr.rel (0) target = $region33
  $region32: #{_lambda_.1} parent=0 // pred_region
    _
  $region33: #{_lambda_.1} parent=0 // pred_fallthru
    _
  // Predicated region
  $region34: #{_lambda_.1} parent=0 // pred_check
    _
  $region35: #{_lambda_.1} parent=0 // pred_check_branch
    %43 = sbr.rel (0) target = $region37
  $region36: #{_lambda_.1} parent=0 // pred_region
    _
  $region37: #{_lambda_.1} parent=0 // pred_fallthru
    _
  // Predicated region
  $region38: #{_lambda_.1} parent=0 // pred_check
    _
  $region39: #{_lambda_.1} parent=0 // pred_check_branch
    %45 = sbr.rel (0) target = $region41
  $region40: #{_lambda_.1} parent=0 // pred_region
    _
  $region41: #{_lambda_.1} parent=0 // pred_fallthru
    _
  // Predicated region
  $region42: #{_lambda_.1} parent=0 // pred_check
    _
  $region43: #{_lambda_.1} parent=0 // pred_check_branch
    %47 = sbr.rel (0) target = $region45
  $region44: #{_lambda_.1} parent=0 // pred_region
    _
  $region45: #{_lambda_.1} parent=0 // pred_fallthru
    _
  // Predicated region
  $region46: #{_lambda_.1} parent=0 // pred_check
    _
  $region47: #{_lambda_.1} parent=0 // pred_check_branch
    %49 = sbr.rel (0) target = $region49
  $region48: #{_lambda_.1} parent=0 // pred_region
    _
  $region49: #{_lambda_.1} parent=0 // pred_fallthru
    _
  // Predicated region
  $region50: #{_lambda_.1} parent=0 // pred_check
    _
  $region51: #{_lambda_.1} parent=0 // pred_check_branch
    %51 = sbr.rel (0) target = $region53
  $region52: #{_lambda_.1} parent=0 // pred_region
    _
  $region53: #{_lambda_.1} parent=0 // pred_fallthru
    _
  // Predicated region
  $region54: #{_lambda_.1} parent=0 // pred_check
    _
  $region55: #{_lambda_.1} parent=0 // pred_check_branch
    %53 = sbr.rel (0) target = $region57
  $region56: #{_lambda_.1} parent=0 // pred_region
    _
  $region57: #{_lambda_.1} parent=0 // pred_fallthru
    _
  // Predicated region
  $region58: #{_lambda_.1} parent=0 // pred_check
    _
  $region59: #{_lambda_.1} parent=0 // pred_check_branch
    %55 = sbr.rel (0) target = $region61
  $region60: #{_lambda_.1} parent=0 // pred_region
    _
  $region61: #{_lambda_.1} parent=0 // pred_fallthru
    _
  // Predicated region
  $region62: #{_lambda_.1} parent=0 // pred_check
    _
  $region63: #{_lambda_.1} parent=0 // pred_check_branch
    %57 = sbr.rel (0) target = $region65
  $region64: #{_lambda_.1} parent=0 // pred_region
    _
  $region65: #{_lambda_.1} parent=0 // pred_fallthru
    _
  // Predicated region
  $region66: #{_lambda_.1} parent=0 // pred_check
    _
  $region67: #{_lambda_.1} parent=0 // pred_check_branch
    %59 = sbr.rel (0) target = $region69
  $region68: #{_lambda_.1} parent=0 // pred_region
    _
  $region69: #{_lambda_.1} parent=0 // pred_fallthru
    _
  // Predicated region
  $region70: #{_lambda_.1} parent=0 // pred_check
    _
  $region71: #{_lambda_.1} parent=0 // pred_check_branch
    %61 = sbr.rel (0) target = $region73
  $region72: #{_lambda_.1} parent=0 // pred_region
    _
  $region73: #{_lambda_.1} parent=0 // pred_fallthru
    _
  // Predicated region
  $region74: #{_lambda_.1} parent=0 // pred_check
    _
  $region75: #{_lambda_.1} parent=0 // pred_check_branch
    %63 = sbr.rel (0) target = $region77
  $region76: #{_lambda_.1} parent=0 // pred_region
    _
  $region77: #{_lambda_.1} parent=0 // pred_fallthru
    _
  %v65 = vld [vmem:[%s0] sm:$0xff]
  %v66 = vld [vmem:[%s0 + $0x8] sm:$0xff]
  %v67 = vpack.c.bf16 %v66, %v65
  %v68 = vld [vmem:[%s1] sm:$0xff]
  %v69 = vld [vmem:[%s1 + $0x8] sm:$0xff]
  %v70 = vld [vmem:[%s2] sm:$0xf]
  %v71 = vld [vmem:[%s2 + $0x4] sm:$0xf]
  %v72 = vld [vmem:[%s2 + $0x8] sm:$0xf]
  %v73 = vld [vmem:[%s2 + $0xc] sm:$0xf]
  %v74 = vld [vmem:[%s2 + $0x10] sm:$0xf]
  %v75 = vld [vmem:[%s2 + $0x14] sm:$0xf]
  %v76 = vld [vmem:[%s3] sm:$0xf]
  %v77 = vld [vmem:[%s3 + $0x4] sm:$0xf]
  %v78 = vld [vmem:[%s3 + $0x8] sm:$0xf]
  %v79 = vld [vmem:[%s3 + $0xc] sm:$0xf]
  %v80 = vld [vmem:[%s3 + $0x10] sm:$0xf]
  %v81 = vld [vmem:[%s3 + $0x14] sm:$0xf]
  %v82 = vld [vmem:[%s4] sm:$0x1]
  %v83 = vld [vmem:[%s5] sm:$0xf]
  %v84 = vld [vmem:[%s5 + $0x4] sm:$0xf]
  %v85 = vld [vmem:[%s5 + $0x8] sm:$0xf]
  %v86 = vld [vmem:[%s5 + $0xc] sm:$0xf]
  %v87 = vld [vmem:[%s6] sm:$0xf]
  %v88 = vld [vmem:[%s6 + $0x4] sm:$0xf]
  %v89 = vld [vmem:[%s7] sm:$0xf]
  %v90 = vld [vmem:[%s7 + $0x4] sm:$0xf]
  %v91 = vld [vmem:[%s8] sm:$0x1]
  %v93 = vlaneseq
  %v94 = vshrl.u32 %v93, 7
  %v95 = vsub.s32 0, %v94
  %v96 = vrot.slane %v82, %v95
  %v104 = vunpack.c.l.b16 %v70
  %v105 = vunpack.c.l.b16 %v71
  %v106 = vunpack.c.l.b16 %v72
  %v107 = vunpack.c.l.b16 %v73
  %v108 = vunpack.c.l.b16 %v74
  %v109 = vunpack.c.l.b16 %v75
  %v110 = vpack.c.b16 %v105, %v104
  %v111 = vpack.c.b16 %v107, %v106
  %v112 = vpack.c.b16 %v109, %v108
  %vm116 = vcmask 392192
  %v118 = vsel %vm116, %v67, 0
  %120 = vmatprep.subr.bf16.mxu0 0
  %121 = vmatpush1.bf16.msra.mxu0 %v110
  %122 = vmatprep.subr.bf16.mxu0 0
  %123 = vmatpush1.bf16.msra.mxu0 %v111
  %124 = vmatprep.subr.bf16.mxu0 0
  %125 = vmatpush1.bf16.msra.mxu0 %v112
  %126 = vmatprep.subr.bf16.mxu0 0
  %127 = vmatpush1.bf16.msra.mxu0 0
  %128 = vmatprep.subr.bf16.mxu0 0
  %129 = vmatpush1.bf16.msra.mxu0 0
  %130 = vmatprep.subr.bf16.mxu0 0
  %131 = vmatpush1.bf16.msra.mxu0 0
  %132 = vmatprep.subr.bf16.mxu0 0
  %133 = vmatpush1.bf16.msra.mxu0 0
  %134 = vmatprep.subr.bf16.mxu0 0
  %135 = vmatpush1.bf16.msra.mxu0 0
  %136 = vmatprep.subr.bf16.mxu0 0
  %137 = vmatpush1.bf16.msra.mxu0 0
  %138 = vmatprep.subr.bf16.mxu0 0
  %139 = vmatpush1.bf16.msra.mxu0 0
  %140 = vmatprep.subr.bf16.mxu0 0
  %141 = vmatpush1.bf16.msra.mxu0 0
  %142 = vmatprep.subr.bf16.mxu0 0
  %143 = vmatpush1.bf16.msra.mxu0 0
  %144 = vmatprep.subr.bf16.mxu0 0
  %145 = vmatpush1.bf16.msra.mxu0 0
  %146 = vmatprep.subr.bf16.mxu0 0
  %147 = vmatpush1.bf16.msra.mxu0 0
  %148 = vmatprep.subr.bf16.mxu0 0
  %149 = vmatpush1.bf16.msra.mxu0 0
  %150 = vmatprep.subr.bf16.mxu0 0
  %151 = vmatpush1.bf16.msra.mxu0 0
  %152 = vmatprep.mubr.bf16.mxu0 0
  %153 = vmatmul.mubr.bf16.gmra.mrb[0].mxu0 %v118
  %v154 = vpop.f32.mrb[0].mxu0
  %v155 = vadd.f32 %v96, %v154
  %v156 = vpop.f32.mrb[0].mxu0
  %v157 = vpop.f32.mrb[0].mxu0
  %v158 = vadd.f32 %v96, %v157
  %v159 = vpop.f32.mrb[0].mxu0
  %160 = vdwg.mxu0
  %v167 = vunpack.c.l.b16 %v76
  %v168 = vunpack.c.l.b16 %v77
  %v169 = vunpack.c.l.b16 %v78
  %v170 = vunpack.c.l.b16 %v79
  %v171 = vunpack.c.l.b16 %v80
  %v172 = vunpack.c.l.b16 %v81
  %v173 = vpack.c.b16 %v168, %v167
  %v174 = vpack.c.b16 %v170, %v169
  %v175 = vpack.c.b16 %v172, %v171
  %179 = vmatprep.subr.bf16.mxu0 0
  %180 = vmatpush1.bf16.msra.mxu0 %v173
  %181 = vmatprep.subr.bf16.mxu0 0
  %182 = vmatpush1.bf16.msra.mxu0 %v174
  %183 = vmatprep.subr.bf16.mxu0 0
  %184 = vmatpush1.bf16.msra.mxu0 %v175
  %185 = vmatprep.subr.bf16.mxu0 0
  %186 = vmatpush1.bf16.msra.mxu0 0
  %187 = vmatprep.subr.bf16.mxu0 0
  %188 = vmatpush1.bf16.msra.mxu0 0
  %189 = vmatprep.subr.bf16.mxu0 0
  %190 = vmatpush1.bf16.msra.mxu0 0
  %191 = vmatprep.subr.bf16.mxu0 0
  %192 = vmatpush1.bf16.msra.mxu0 0
  %193 = vmatprep.subr.bf16.mxu0 0
  %194 = vmatpush1.bf16.msra.mxu0 0
  %195 = vmatprep.subr.bf16.mxu0 0
  %196 = vmatpush1.bf16.msra.mxu0 0
  %197 = vmatprep.subr.bf16.mxu0 0
  %198 = vmatpush1.bf16.msra.mxu0 0
  %199 = vmatprep.subr.bf16.mxu0 0
  %200 = vmatpush1.bf16.msra.mxu0 0
  %201 = vmatprep.subr.bf16.mxu0 0
  %202 = vmatpush1.bf16.msra.mxu0 0
  %203 = vmatprep.subr.bf16.mxu0 0
  %204 = vmatpush1.bf16.msra.mxu0 0
  %205 = vmatprep.subr.bf16.mxu0 0
  %206 = vmatpush1.bf16.msra.mxu0 0
  %207 = vmatprep.subr.bf16.mxu0 0
  %208 = vmatpush1.bf16.msra.mxu0 0
  %209 = vmatprep.subr.bf16.mxu0 0
  %210 = vmatpush1.bf16.msra.mxu0 0
  %211 = vmatprep.mubr.bf16.mxu0 0
  %212 = vmatmul.mubr.bf16.gmra.mrb[0].mxu0 %v118
  %v213 = vpop.f32.mrb[0].mxu0
  %v214 = vadd.f32 0.0, %v213
  %v215 = vpop.f32.mrb[0].mxu0
  %v216 = vpop.f32.mrb[0].mxu0
  %v217 = vadd.f32 0.0, %v216
  %v218 = vpop.f32.mrb[0].mxu0
  %219 = vdwg.mxu0
  %v221 = vrot.slane %v217, 6
  %v223 = vadd.f32 %v155, %v221
  %v228 = vunpack.c.l.b16 %v83
  %v229 = vunpack.c.l.b16 %v84
  %v230 = vunpack.c.l.b16 %v85
  %v231 = vunpack.c.l.b16 %v86
  %v232 = vpack.c.b16 %v229, %v228
  %v233 = vpack.c.b16 %v231, %v230
  %vm236 = vcmask 261120
  %v238 = vsel %vm236, 0, 0
  %240 = vmatprep.subr.bf16.mxu0 0
  %241 = vmatpush1.bf16.msra.mxu0 %v232
  %242 = vmatprep.subr.bf16.mxu0 0
  %243 = vmatpush1.bf16.msra.mxu0 %v233
  %244 = vmatprep.subr.bf16.mxu0 0
  %245 = vmatpush1.bf16.msra.mxu0 0
  %246 = vmatprep.subr.bf16.mxu0 0
  %247 = vmatpush1.bf16.msra.mxu0 0
  %248 = vmatprep.subr.bf16.mxu0 0
  %249 = vmatpush1.bf16.msra.mxu0 0
  %250 = vmatprep.subr.bf16.mxu0 0
  %251 = vmatpush1.bf16.msra.mxu0 0
  %252 = vmatprep.subr.bf16.mxu0 0
  %253 = vmatpush1.bf16.msra.mxu0 0
  %254 = vmatprep.subr.bf16.mxu0 0
  %255 = vmatpush1.bf16.msra.mxu0 0
  %256 = vmatprep.subr.bf16.mxu0 0
  %257 = vmatpush1.bf16.msra.mxu0 0
  %258 = vmatprep.subr.bf16.mxu0 0
  %259 = vmatpush1.bf16.msra.mxu0 0
  %260 = vmatprep.subr.bf16.mxu0 0
  %261 = vmatpush1.bf16.msra.mxu0 0
  %262 = vmatprep.subr.bf16.mxu0 0
  %263 = vmatpush1.bf16.msra.mxu0 0
  %264 = vmatprep.subr.bf16.mxu0 0
  %265 = vmatpush1.bf16.msra.mxu0 0
  %266 = vmatprep.subr.bf16.mxu0 0
  %267 = vmatpush1.bf16.msra.mxu0 0
  %268 = vmatprep.subr.bf16.mxu0 0
  %269 = vmatpush1.bf16.msra.mxu0 0
  %270 = vmatprep.subr.bf16.mxu0 0
  %271 = vmatpush1.bf16.msra.mxu0 0
  %272 = vmatprep.mubr.bf16.mxu0 0
  %273 = vmatmul.mubr.bf16.gmra.mrb[0].mxu0 %v238
  %v274 = vpop.f32.mrb[0].mxu0
  %v275 = vadd.f32 0.0, %v274
  %v276 = vpop.f32.mrb[0].mxu0
  %v277 = vpop.f32.mrb[0].mxu0
  %v278 = vpop.f32.mrb[0].mxu0
  %279 = vdwg.mxu0
  %v280 = vadd.f32 %v223, %v275
  %v281 = vxor.u32 %v280, 2147483648
  %v282 = vmul.f32 %v281, 1.442695
  %v283 = vpow.pop %v282
  %v284 = vadd.f32 %v283, 1.0
  %v285 = vrcp.pop %v284
  %v286 = vmul.f32 1.0, %v285
  %v287 = vtanh.pop %v280
  %v288 = vmul.f32 %v286, 0.0
  %290 = vrot.lane.b32.xlu0 %v287, 64
  %v291 = vpop.permute.xlu0 %290
  %v293 = vmul.f32 %v286, %v291
  %295 = vrot.lane.b32.xlu0 %v293, 32
  %v296 = vpop.permute.xlu0 %295
  %v298 = vadd.f32 %v288, %v296
  %v299 = vtanh.pop %v298
  %301 = vrot.lane.b32.xlu0 %v299, 64
  %v302 = vpop.permute.xlu0 %301
  %v304 = vmul.f32 %v286, %v302
  %306 = vrot.lane.b32.xlu0 %v304, 32
  %v307 = vpop.permute.xlu0 %306
  %v309 = vmul.f32 %v68, %v307
  %v310 = vsub.f32 1.0, %v68
  %v311 = vmul.f32 %v310, 0.0
  %v312 = vadd.f32 %v309, %v311
  %314 = vrot.lane.b32.xlu0 %v298, 96
  %v315 = vpop.permute.xlu0 %314
  %v317 = vmul.f32 %v68, %v315
  %v318 = vadd.f32 %v317, %v311
  %v319 = vrot.slane %v217, 2
  %v321 = vadd.f32 %v155, %v319
  %v322 = vpack.c.bf16 %v312, %v312
  %v324 = vsel %vm236, %v322, 0
  %326 = vmatprep.subr.bf16.mxu0 0
  %327 = vmatpush1.bf16.msra.mxu0 %v232
  %328 = vmatprep.subr.bf16.mxu0 0
  %329 = vmatpush1.bf16.msra.mxu0 %v233
  %330 = vmatprep.subr.bf16.mxu0 0
  %331 = vmatpush1.bf16.msra.mxu0 0
  %332 = vmatprep.subr.bf16.mxu0 0
  %333 = vmatpush1.bf16.msra.mxu0 0
  %334 = vmatprep.subr.bf16.mxu0 0
  %335 = vmatpush1.bf16.msra.mxu0 0
  %336 = vmatprep.subr.bf16.mxu0 0
  %337 = vmatpush1.bf16.msra.mxu0 0
  %338 = vmatprep.subr.bf16.mxu0 0
  %339 = vmatpush1.bf16.msra.mxu0 0
  %340 = vmatprep.subr.bf16.mxu0 0
  %341 = vmatpush1.bf16.msra.mxu0 0
  %342 = vmatprep.subr.bf16.mxu0 0
  %343 = vmatpush1.bf16.msra.mxu0 0
  %344 = vmatprep.subr.bf16.mxu0 0
  %345 = vmatpush1.bf16.msra.mxu0 0
  %346 = vmatprep.subr.bf16.mxu0 0
  %347 = vmatpush1.bf16.msra.mxu0 0
  %348 = vmatprep.subr.bf16.mxu0 0
  %349 = vmatpush1.bf16.msra.mxu0 0
  %350 = vmatprep.subr.bf16.mxu0 0
  %351 = vmatpush1.bf16.msra.mxu0 0
  %352 = vmatprep.subr.bf16.mxu0 0
  %353 = vmatpush1.bf16.msra.mxu0 0
  %354 = vmatprep.subr.bf16.mxu0 0
  %355 = vmatpush1.bf16.msra.mxu0 0
  %356 = vmatprep.subr.bf16.mxu0 0
  %357 = vmatpush1.bf16.msra.mxu0 0
  %358 = vmatprep.mubr.bf16.mxu0 0
  %359 = vmatmul.mubr.bf16.gmra.mrb[0].mxu0 %v324
  %v360 = vpop.f32.mrb[0].mxu0
  %v361 = vadd.f32 0.0, %v360
  %v362 = vpop.f32.mrb[0].mxu0
  %v363 = vpop.f32.mrb[0].mxu0
  %v364 = vpop.f32.mrb[0].mxu0
  %365 = vdwg.mxu0
  %v367 = vrot.slane %v361, 6
  %v369 = vadd.f32 %v321, %v367
  %v370 = vxor.u32 %v369, 2147483648
  %v371 = vmul.f32 %v370, 1.442695
  %v372 = vpow.pop %v371
  %v373 = vadd.f32 %v372, 1.0
  %v374 = vrcp.pop %v373
  %v375 = vmul.f32 1.0, %v374
  %v376 = vtanh.pop %v369
  %v378 = vrot.slane %v318, 6
  %379 = vrot.lane.b32.xlu0 %v378, 32
  %v380 = vpop.permute.xlu0 %379
  %v382 = vmul.f32 %v375, %v380
  %384 = vrot.lane.b32.xlu0 %v376, 64
  %v385 = vpop.permute.xlu0 %384
  %v387 = vmul.f32 %v375, %v385
  %389 = vrot.lane.b32.xlu0 %v387, 32
  %v390 = vpop.permute.xlu0 %389
  %v392 = vadd.f32 %v382, %v390
  %v393 = vtanh.pop %v392
  %395 = vrot.lane.b32.xlu0 %v393, 64
  %v396 = vpop.permute.xlu0 %395
  %v398 = vmul.f32 %v375, %v396
  %400 = vrot.lane.b32.xlu0 %v398, 32
  %v401 = vpop.permute.xlu0 %400
  %v403 = vmul.f32 %v68, %v401
  %v405 = vrot.slane %v312, 6
  %v407 = vmul.f32 %v310, %v405
  %v408 = vadd.f32 %v403, %v407
  %410 = vrot.lane.b32.xlu0 %v392, 96
  %v411 = vpop.permute.xlu0 %410
  %v413 = vmul.f32 %v68, %v411
  %v415 = vmul.f32 %v310, %v378
  %v416 = vadd.f32 %v413, %v415
  %v417 = vpack.c.bf16 %v408, %v408
  %v419 = vrot.slane %v417, 1
  %v421 = vsel %vm236, %v419, 0
  %423 = vmatprep.subr.bf16.mxu0 0
  %424 = vmatpush1.bf16.msra.mxu0 %v232
  %425 = vmatprep.subr.bf16.mxu0 0
  %426 = vmatpush1.bf16.msra.mxu0 %v233
  %427 = vmatprep.subr.bf16.mxu0 0
  %428 = vmatpush1.bf16.msra.mxu0 0
  %429 = vmatprep.subr.bf16.mxu0 0
  %430 = vmatpush1.bf16.msra.mxu0 0
  %431 = vmatprep.subr.bf16.mxu0 0
  %432 = vmatpush1.bf16.msra.mxu0 0
  %433 = vmatprep.subr.bf16.mxu0 0
  %434 = vmatpush1.bf16.msra.mxu0 0
  %435 = vmatprep.subr.bf16.mxu0 0
  %436 = vmatpush1.bf16.msra.mxu0 0
  %437 = vmatprep.subr.bf16.mxu0 0
  %438 = vmatpush1.bf16.msra.mxu0 0
  %439 = vmatprep.subr.bf16.mxu0 0
  %440 = vmatpush1.bf16.msra.mxu0 0
  %441 = vmatprep.subr.bf16.mxu0 0
  %442 = vmatpush1.bf16.msra.mxu0 0
  %443 = vmatprep.subr.bf16.mxu0 0
  %444 = vmatpush1.bf16.msra.mxu0 0
  %445 = vmatprep.subr.bf16.mxu0 0
  %446 = vmatpush1.bf16.msra.mxu0 0
  %447 = vmatprep.subr.bf16.mxu0 0
  %448 = vmatpush1.bf16.msra.mxu0 0
  %449 = vmatprep.subr.bf16.mxu0 0
  %450 = vmatpush1.bf16.msra.mxu0 0
  %451 = vmatprep.subr.bf16.mxu0 0
  %452 = vmatpush1.bf16.msra.mxu0 0
  %453 = vmatprep.subr.bf16.mxu0 0
  %454 = vmatpush1.bf16.msra.mxu0 0
  %455 = vmatprep.mubr.bf16.mxu0 0
  %456 = vmatmul.mubr.bf16.gmra.mrb[0].mxu0 %v421
  %v457 = vpop.f32.mrb[0].mxu0
  %v458 = vadd.f32 0.0, %v457
  %v459 = vpop.f32.mrb[0].mxu0
  %v460 = vpop.f32.mrb[0].mxu0
  %v461 = vpop.f32.mrb[0].mxu0
  %462 = vdwg.mxu0
  %v464 = vrot.slane %v458, 4
  %v466 = vadd.f32 %v223, %v464
  %v467 = vxor.u32 %v466, 2147483648
  %v468 = vmul.f32 %v467, 1.442695
  %v469 = vpow.pop %v468
  %v470 = vadd.f32 %v469, 1.0
  %v471 = vrcp.pop %v470
  %v472 = vmul.f32 1.0, %v471
  %v473 = vtanh.pop %v466
  %v475 = vrot.slane %v416, 6
  %476 = vrot.lane.b32.xlu0 %v475, 32
  %v477 = vpop.permute.xlu0 %476
  %v479 = vmul.f32 %v472, %v477
  %481 = vrot.lane.b32.xlu0 %v473, 64
  %v482 = vpop.permute.xlu0 %481
  %v484 = vmul.f32 %v472, %v482
  %486 = vrot.lane.b32.xlu0 %v484, 32
  %v487 = vpop.permute.xlu0 %486
  %v489 = vadd.f32 %v479, %v487
  %v490 = vtanh.pop %v489
  %492 = vrot.lane.b32.xlu0 %v490, 64
  %v493 = vpop.permute.xlu0 %492
  %v495 = vmul.f32 %v472, %v493
  %497 = vrot.lane.b32.xlu0 %v495, 32
  %v498 = vpop.permute.xlu0 %497
  %v500 = vmul.f32 %v68, %v498
  %v502 = vrot.slane %v408, 6
  %v504 = vmul.f32 %v310, %v502
  %v505 = vadd.f32 %v500, %v504
  %507 = vrot.lane.b32.xlu0 %v489, 96
  %v508 = vpop.permute.xlu0 %507
  %v510 = vmul.f32 %v68, %v508
  %v512 = vmul.f32 %v310, %v475
  %v513 = vadd.f32 %v510, %v512
  %v514 = vpack.c.bf16 %v505, %v505
  %v516 = vrot.slane %v514, 2
  %v518 = vsel %vm236, %v516, 0
  %520 = vmatprep.subr.bf16.mxu0 0
  %521 = vmatpush1.bf16.msra.mxu0 %v232
  %522 = vmatprep.subr.bf16.mxu0 0
  %523 = vmatpush1.bf16.msra.mxu0 %v233
  %524 = vmatprep.subr.bf16.mxu0 0
  %525 = vmatpush1.bf16.msra.mxu0 0
  %526 = vmatprep.subr.bf16.mxu0 0
  %527 = vmatpush1.bf16.msra.mxu0 0
  %528 = vmatprep.subr.bf16.mxu0 0
  %529 = vmatpush1.bf16.msra.mxu0 0
  %530 = vmatprep.subr.bf16.mxu0 0
  %531 = vmatpush1.bf16.msra.mxu0 0
  %532 = vmatprep.subr.bf16.mxu0 0
  %533 = vmatpush1.bf16.msra.mxu0 0
  %534 = vmatprep.subr.bf16.mxu0 0
  %535 = vmatpush1.bf16.msra.mxu0 0
  %536 = vmatprep.subr.bf16.mxu0 0
  %537 = vmatpush1.bf16.msra.mxu0 0
  %538 = vmatprep.subr.bf16.mxu0 0
  %539 = vmatpush1.bf16.msra.mxu0 0
  %540 = vmatprep.subr.bf16.mxu0 0
  %541 = vmatpush1.bf16.msra.mxu0 0
  %542 = vmatprep.subr.bf16.mxu0 0
  %543 = vmatpush1.bf16.msra.mxu0 0
  %544 = vmatprep.subr.bf16.mxu0 0
  %545 = vmatpush1.bf16.msra.mxu0 0
  %546 = vmatprep.subr.bf16.mxu0 0
  %547 = vmatpush1.bf16.msra.mxu0 0
  %548 = vmatprep.subr.bf16.mxu0 0
  %549 = vmatpush1.bf16.msra.mxu0 0
  %550 = vmatprep.subr.bf16.mxu0 0
  %551 = vmatpush1.bf16.msra.mxu0 0
  %552 = vmatprep.mubr.bf16.mxu0 0
  %553 = vmatmul.mubr.bf16.gmra.mrb[0].mxu0 %v518
  %v554 = vpop.f32.mrb[0].mxu0
  %v555 = vadd.f32 0.0, %v554
  %v556 = vpop.f32.mrb[0].mxu0
  %v557 = vpop.f32.mrb[0].mxu0
  %v558 = vpop.f32.mrb[0].mxu0
  %559 = vdwg.mxu0
  %v561 = vrot.slane %v555, 2
  %v563 = vadd.f32 %v321, %v561
  %v564 = vxor.u32 %v563, 2147483648
  %v565 = vmul.f32 %v564, 1.442695
  %v566 = vpow.pop %v565
  %v567 = vadd.f32 %v566, 1.0
  %v568 = vrcp.pop %v567
  %v569 = vmul.f32 1.0, %v568
  %v570 = vtanh.pop %v563
  %v572 = vrot.slane %v513, 6
  %573 = vrot.lane.b32.xlu0 %v572, 32
  %v574 = vpop.permute.xlu0 %573
  %v576 = vmul.f32 %v569, %v574
  %578 = vrot.lane.b32.xlu0 %v570, 64
  %v579 = vpop.permute.xlu0 %578
  %v581 = vmul.f32 %v569, %v579
  %583 = vrot.lane.b32.xlu0 %v581, 32
  %v584 = vpop.permute.xlu0 %583
  %v586 = vadd.f32 %v576, %v584
  %v587 = vtanh.pop %v586
  %589 = vrot.lane.b32.xlu0 %v587, 64
  %v590 = vpop.permute.xlu0 %589
  %v592 = vmul.f32 %v569, %v590
  %594 = vrot.lane.b32.xlu0 %v592, 32
  %v595 = vpop.permute.xlu0 %594
  %v597 = vmul.f32 %v68, %v595
  %v599 = vrot.slane %v505, 6
  %v601 = vmul.f32 %v310, %v599
  %v602 = vadd.f32 %v597, %v601
  %604 = vrot.lane.b32.xlu0 %v586, 96
  %v605 = vpop.permute.xlu0 %604
  %v607 = vmul.f32 %v68, %v605
  %v609 = vmul.f32 %v310, %v572
  %v610 = vadd.f32 %v607, %v609
  %v612 = vrot.slane %v214, 6
  %v614 = vadd.f32 %v158, %v612
  %v615 = vpack.c.bf16 %v602, %v602
  %v617 = vrot.slane %v615, 3
  %v619 = vsel %vm236, %v617, 0
  %621 = vmatprep.subr.bf16.mxu0 0
  %622 = vmatpush1.bf16.msra.mxu0 %v232
  %623 = vmatprep.subr.bf16.mxu0 0
  %624 = vmatpush1.bf16.msra.mxu0 %v233
  %625 = vmatprep.subr.bf16.mxu0 0
  %626 = vmatpush1.bf16.msra.mxu0 0
  %627 = vmatprep.subr.bf16.mxu0 0
  %628 = vmatpush1.bf16.msra.mxu0 0
  %629 = vmatprep.subr.bf16.mxu0 0
  %630 = vmatpush1.bf16.msra.mxu0 0
  %631 = vmatprep.subr.bf16.mxu0 0
  %632 = vmatpush1.bf16.msra.mxu0 0
  %633 = vmatprep.subr.bf16.mxu0 0
  %634 = vmatpush1.bf16.msra.mxu0 0
  %635 = vmatprep.subr.bf16.mxu0 0
  %636 = vmatpush1.bf16.msra.mxu0 0
  %637 = vmatprep.subr.bf16.mxu0 0
  %638 = vmatpush1.bf16.msra.mxu0 0
  %639 = vmatprep.subr.bf16.mxu0 0
  %640 = vmatpush1.bf16.msra.mxu0 0
  %641 = vmatprep.subr.bf16.mxu0 0
  %642 = vmatpush1.bf16.msra.mxu0 0
  %643 = vmatprep.subr.bf16.mxu0 0
  %644 = vmatpush1.bf16.msra.mxu0 0
  %645 = vmatprep.subr.bf16.mxu0 0
  %646 = vmatpush1.bf16.msra.mxu0 0
  %647 = vmatprep.subr.bf16.mxu0 0
  %648 = vmatpush1.bf16.msra.mxu0 0
  %649 = vmatprep.subr.bf16.mxu0 0
  %650 = vmatpush1.bf16.msra.mxu0 0
  %651 = vmatprep.subr.bf16.mxu0 0
  %652 = vmatpush1.bf16.msra.mxu0 0
  %653 = vmatprep.mubr.bf16.mxu0 0
  %654 = vmatmul.mubr.bf16.gmra.mrb[0].mxu0 %v619
  %v655 = vpop.f32.mrb[0].mxu0
  %v656 = vadd.f32 0.0, %v655
  %v657 = vpop.f32.mrb[0].mxu0
  %v658 = vpop.f32.mrb[0].mxu0
  %v659 = vpop.f32.mrb[0].mxu0
  %660 = vdwg.mxu0
  %v661 = vadd.f32 %v614, %v656
  %v662 = vxor.u32 %v661, 2147483648
  %v663 = vmul.f32 %v662, 1.442695
  %v664 = vpow.pop %v663
  %v665 = vadd.f32 %v664, 1.0
  %v666 = vrcp.pop %v665
  %v667 = vmul.f32 1.0, %v666
  %v668 = vtanh.pop %v661
  %v670 = vrot.slane %v610, 6
  %671 = vrot.lane.b32.xlu0 %v670, 32
  %v672 = vpop.permute.xlu0 %671
  %v674 = vmul.f32 %v667, %v672
  %676 = vrot.lane.b32.xlu0 %v668, 64
  %v677 = vpop.permute.xlu0 %676
  %v679 = vmul.f32 %v667, %v677
  %681 = vrot.lane.b32.xlu0 %v679, 32
  %v682 = vpop.permute.xlu0 %681
  %v684 = vadd.f32 %v674, %v682
  %v685 = vtanh.pop %v684
  %687 = vrot.lane.b32.xlu0 %v685, 64
  %v688 = vpop.permute.xlu0 %687
  %v690 = vmul.f32 %v667, %v688
  %692 = vrot.lane.b32.xlu0 %v690, 32
  %v693 = vpop.permute.xlu0 %692
  %v695 = vmul.f32 %v69, %v693
  %v696 = vsub.f32 1.0, %v69
  %v698 = vrot.slane %v602, 6
  %v700 = vmul.f32 %v696, %v698
  %v701 = vadd.f32 %v695, %v700
  %703 = vrot.lane.b32.xlu0 %v684, 96
  %v704 = vpop.permute.xlu0 %703
  %v706 = vmul.f32 %v69, %v704
  %v708 = vmul.f32 %v696, %v670
  %v709 = vadd.f32 %v706, %v708
  %v710 = vrot.slane %v214, 2
  %v712 = vadd.f32 %v158, %v710
  %v713 = vpack.c.bf16 %v701, %v701
  %v715 = vsel %vm236, %v713, 0
  %717 = vmatprep.subr.bf16.mxu0 0
  %718 = vmatpush1.bf16.msra.mxu0 %v232
  %719 = vmatprep.subr.bf16.mxu0 0
  %720 = vmatpush1.bf16.msra.mxu0 %v233
  %721 = vmatprep.subr.bf16.mxu0 0
  %722 = vmatpush1.bf16.msra.mxu0 0
  %723 = vmatprep.subr.bf16.mxu0 0
  %724 = vmatpush1.bf16.msra.mxu0 0
  %725 = vmatprep.subr.bf16.mxu0 0
  %726 = vmatpush1.bf16.msra.mxu0 0
  %727 = vmatprep.subr.bf16.mxu0 0
  %728 = vmatpush1.bf16.msra.mxu0 0
  %729 = vmatprep.subr.bf16.mxu0 0
  %730 = vmatpush1.bf16.msra.mxu0 0
  %731 = vmatprep.subr.bf16.mxu0 0
  %732 = vmatpush1.bf16.msra.mxu0 0
  %733 = vmatprep.subr.bf16.mxu0 0
  %734 = vmatpush1.bf16.msra.mxu0 0
  %735 = vmatprep.subr.bf16.mxu0 0
  %736 = vmatpush1.bf16.msra.mxu0 0
  %737 = vmatprep.subr.bf16.mxu0 0
  %738 = vmatpush1.bf16.msra.mxu0 0
  %739 = vmatprep.subr.bf16.mxu0 0
  %740 = vmatpush1.bf16.msra.mxu0 0
  %741 = vmatprep.subr.bf16.mxu0 0
  %742 = vmatpush1.bf16.msra.mxu0 0
  %743 = vmatprep.subr.bf16.mxu0 0
  %744 = vmatpush1.bf16.msra.mxu0 0
  %745 = vmatprep.subr.bf16.mxu0 0
  %746 = vmatpush1.bf16.msra.mxu0 0
  %747 = vmatprep.subr.bf16.mxu0 0
  %748 = vmatpush1.bf16.msra.mxu0 0
  %749 = vmatprep.mubr.bf16.mxu0 0
  %750 = vmatmul.mubr.bf16.gmra.mrb[0].mxu0 %v715
  %v751 = vpop.f32.mrb[0].mxu0
  %v752 = vadd.f32 0.0, %v751
  %v753 = vpop.f32.mrb[0].mxu0
  %v754 = vpop.f32.mrb[0].mxu0
  %v755 = vpop.f32.mrb[0].mxu0
  %756 = vdwg.mxu0
  %v758 = vrot.slane %v752, 6
  %v760 = vadd.f32 %v712, %v758
  %v761 = vxor.u32 %v760, 2147483648
  %v762 = vmul.f32 %v761, 1.442695
  %v763 = vpow.pop %v762
  %v764 = vadd.f32 %v763, 1.0
  %v765 = vrcp.pop %v764
  %v766 = vmul.f32 1.0, %v765
  %v767 = vtanh.pop %v760
  %v769 = vrot.slane %v709, 6
  %770 = vrot.lane.b32.xlu0 %v769, 32
  %v771 = vpop.permute.xlu0 %770
  %v773 = vmul.f32 %v766, %v771
  %775 = vrot.lane.b32.xlu0 %v767, 64
  %v776 = vpop.permute.xlu0 %775
  %v778 = vmul.f32 %v766, %v776
  %780 = vrot.lane.b32.xlu0 %v778, 32
  %v781 = vpop.permute.xlu0 %780
  %v783 = vadd.f32 %v773, %v781
  %v784 = vtanh.pop %v783
  %786 = vrot.lane.b32.xlu0 %v784, 64
  %v787 = vpop.permute.xlu0 %786
  %v789 = vmul.f32 %v766, %v787
  %791 = vrot.lane.b32.xlu0 %v789, 32
  %v792 = vpop.permute.xlu0 %791
  %v794 = vmul.f32 %v69, %v792
  %v796 = vrot.slane %v701, 6
  %v798 = vmul.f32 %v696, %v796
  %v799 = vadd.f32 %v794, %v798
  %801 = vrot.lane.b32.xlu0 %v783, 96
  %v802 = vpop.permute.xlu0 %801
  %v804 = vmul.f32 %v69, %v802
  %v806 = vmul.f32 %v696, %v769
  %v807 = vadd.f32 %v804, %v806
  %v808 = vpack.c.bf16 %v799, %v799
  %v810 = vrot.slane %v808, 1
  %v812 = vsel %vm236, %v810, 0
  %814 = vmatprep.subr.bf16.mxu0 0
  %815 = vmatpush1.bf16.msra.mxu0 %v232
  %816 = vmatprep.subr.bf16.mxu0 0
  %817 = vmatpush1.bf16.msra.mxu0 %v233
  %818 = vmatprep.subr.bf16.mxu0 0
  %819 = vmatpush1.bf16.msra.mxu0 0
  %820 = vmatprep.subr.bf16.mxu0 0
  %821 = vmatpush1.bf16.msra.mxu0 0
  %822 = vmatprep.subr.bf16.mxu0 0
  %823 = vmatpush1.bf16.msra.mxu0 0
  %824 = vmatprep.subr.bf16.mxu0 0
  %825 = vmatpush1.bf16.msra.mxu0 0
  %826 = vmatprep.subr.bf16.mxu0 0
  %827 = vmatpush1.bf16.msra.mxu0 0
  %828 = vmatprep.subr.bf16.mxu0 0
  %829 = vmatpush1.bf16.msra.mxu0 0
  %830 = vmatprep.subr.bf16.mxu0 0
  %831 = vmatpush1.bf16.msra.mxu0 0
  %832 = vmatprep.subr.bf16.mxu0 0
  %833 = vmatpush1.bf16.msra.mxu0 0
  %834 = vmatprep.subr.bf16.mxu0 0
  %835 = vmatpush1.bf16.msra.mxu0 0
  %836 = vmatprep.subr.bf16.mxu0 0
  %837 = vmatpush1.bf16.msra.mxu0 0
  %838 = vmatprep.subr.bf16.mxu0 0
  %839 = vmatpush1.bf16.msra.mxu0 0
  %840 = vmatprep.subr.bf16.mxu0 0
  %841 = vmatpush1.bf16.msra.mxu0 0
  %842 = vmatprep.subr.bf16.mxu0 0
  %843 = vmatpush1.bf16.msra.mxu0 0
  %844 = vmatprep.subr.bf16.mxu0 0
  %845 = vmatpush1.bf16.msra.mxu0 0
  %846 = vmatprep.mubr.bf16.mxu0 0
  %847 = vmatmul.mubr.bf16.gmra.mrb[0].mxu0 %v812
  %v848 = vpop.f32.mrb[0].mxu0
  %v849 = vadd.f32 0.0, %v848
  %v850 = vpop.f32.mrb[0].mxu0
  %v851 = vpop.f32.mrb[0].mxu0
  %v852 = vpop.f32.mrb[0].mxu0
  %853 = vdwg.mxu0
  %v855 = vrot.slane %v849, 4
  %v857 = vadd.f32 %v614, %v855
  %v858 = vxor.u32 %v857, 2147483648
  %v859 = vmul.f32 %v858, 1.442695
  %v860 = vpow.pop %v859
  %v861 = vadd.f32 %v860, 1.0
  %v862 = vrcp.pop %v861
  %v863 = vmul.f32 1.0, %v862
  %v864 = vtanh.pop %v857
  %v866 = vrot.slane %v807, 6
  %867 = vrot.lane.b32.xlu0 %v866, 32
  %v868 = vpop.permute.xlu0 %867
  %v870 = vmul.f32 %v863, %v868
  %872 = vrot.lane.b32.xlu0 %v864, 64
  %v873 = vpop.permute.xlu0 %872
  %v875 = vmul.f32 %v863, %v873
  %877 = vrot.lane.b32.xlu0 %v875, 32
  %v878 = vpop.permute.xlu0 %877
  %v880 = vadd.f32 %v870, %v878
  %v881 = vtanh.pop %v880
  %883 = vrot.lane.b32.xlu0 %v881, 64
  %v884 = vpop.permute.xlu0 %883
  %v886 = vmul.f32 %v863, %v884
  %888 = vrot.lane.b32.xlu0 %v886, 32
  %v889 = vpop.permute.xlu0 %888
  %v891 = vmul.f32 %v69, %v889
  %v893 = vrot.slane %v799, 6
  %v895 = vmul.f32 %v696, %v893
  %v896 = vadd.f32 %v891, %v895
  %898 = vrot.lane.b32.xlu0 %v880, 96
  %v899 = vpop.permute.xlu0 %898
  %v901 = vmul.f32 %v69, %v899
  %v903 = vmul.f32 %v696, %v866
  %v904 = vadd.f32 %v901, %v903
  %v905 = vpack.c.bf16 %v896, %v896
  %v907 = vrot.slane %v905, 2
  %v909 = vsel %vm236, %v907, 0
  %911 = vmatprep.subr.bf16.mxu0 0
  %912 = vmatpush1.bf16.msra.mxu0 %v232
  %913 = vmatprep.subr.bf16.mxu0 0
  %914 = vmatpush1.bf16.msra.mxu0 %v233
  %915 = vmatprep.subr.bf16.mxu0 0
  %916 = vmatpush1.bf16.msra.mxu0 0
  %917 = vmatprep.subr.bf16.mxu0 0
  %918 = vmatpush1.bf16.msra.mxu0 0
  %919 = vmatprep.subr.bf16.mxu0 0
  %920 = vmatpush1.bf16.msra.mxu0 0
  %921 = vmatprep.subr.bf16.mxu0 0
  %922 = vmatpush1.bf16.msra.mxu0 0
  %923 = vmatprep.subr.bf16.mxu0 0
  %924 = vmatpush1.bf16.msra.mxu0 0
  %925 = vmatprep.subr.bf16.mxu0 0
  %926 = vmatpush1.bf16.msra.mxu0 0
  %927 = vmatprep.subr.bf16.mxu0 0
  %928 = vmatpush1.bf16.msra.mxu0 0
  %929 = vmatprep.subr.bf16.mxu0 0
  %930 = vmatpush1.bf16.msra.mxu0 0
  %931 = vmatprep.subr.bf16.mxu0 0
  %932 = vmatpush1.bf16.msra.mxu0 0
  %933 = vmatprep.subr.bf16.mxu0 0
  %934 = vmatpush1.bf16.msra.mxu0 0
  %935 = vmatprep.subr.bf16.mxu0 0
  %936 = vmatpush1.bf16.msra.mxu0 0
  %937 = vmatprep.subr.bf16.mxu0 0
  %938 = vmatpush1.bf16.msra.mxu0 0
  %939 = vmatprep.subr.bf16.mxu0 0
  %940 = vmatpush1.bf16.msra.mxu0 0
  %941 = vmatprep.subr.bf16.mxu0 0
  %942 = vmatpush1.bf16.msra.mxu0 0
  %943 = vmatprep.mubr.bf16.mxu0 0
  %944 = vmatmul.mubr.bf16.gmra.mrb[0].mxu0 %v909
  %v945 = vpop.f32.mrb[0].mxu0
  %v946 = vadd.f32 0.0, %v945
  %v947 = vpop.f32.mrb[0].mxu0
  %v948 = vpop.f32.mrb[0].mxu0
  %v949 = vpop.f32.mrb[0].mxu0
  %950 = vdwg.mxu0
  %v952 = vrot.slane %v946, 2
  %v954 = vadd.f32 %v712, %v952
  %v955 = vxor.u32 %v954, 2147483648
  %v956 = vmul.f32 %v955, 1.442695
  %v957 = vpow.pop %v956
  %v958 = vadd.f32 %v957, 1.0
  %v959 = vrcp.pop %v958
  %v960 = vmul.f32 1.0, %v959
  %v961 = vtanh.pop %v954
  %v963 = vrot.slane %v904, 6
  %964 = vrot.lane.b32.xlu0 %v963, 32
  %v965 = vpop.permute.xlu0 %964
  %v967 = vmul.f32 %v960, %v965
  %969 = vrot.lane.b32.xlu0 %v961, 64
  %v970 = vpop.permute.xlu0 %969
  %v972 = vmul.f32 %v960, %v970
  %974 = vrot.lane.b32.xlu0 %v972, 32
  %v975 = vpop.permute.xlu0 %974
  %v977 = vadd.f32 %v967, %v975
  %v978 = vtanh.pop %v977
  %980 = vrot.lane.b32.xlu0 %v978, 64
  %v981 = vpop.permute.xlu0 %980
  %v983 = vmul.f32 %v960, %v981
  %985 = vrot.lane.b32.xlu0 %v983, 32
  %v986 = vpop.permute.xlu0 %985
  %v988 = vmul.f32 %v69, %v986
  %v990 = vrot.slane %v896, 6
  %v992 = vmul.f32 %v696, %v990
  %v993 = vadd.f32 %v988, %v992
  %vm994 = vcmask 1041408
  %v995 = vsel %vm994, %v312, %v408
  %vm996 = vcmask 1043456
  %v997 = vsel %vm996, %v995, %v505
  %vm998 = vcmask 1045504
  %v999 = vsel %vm998, %v997, %v602
  %v1000 = vsel %vm994, %v701, %v799
  %v1001 = vsel %vm996, %v1000, %v896
  %v1002 = vsel %vm998, %v1001, %v993
  %v1003 = vpack.c.bf16 %v1002, %v999
  %v1005 = vrot.slane %v993, 6
  %v1007 = vrot.slane %v896, 2
  %v1009 = vrot.slane %v701, 2
  %v1011 = vrot.slane %v505, 2
  %v1013 = vrot.slane %v312, 2
  %v1015 = vsel %vm994, %v1005, %v1007
  %v1016 = vsel %vm996, %v1015, %v893
  %v1017 = vsel %vm998, %v1016, %v1009
  %v1018 = vsel %vm994, %v698, %v1011
  %v1019 = vsel %vm996, %v1018, %v502
  %v1020 = vsel %vm998, %v1019, %v1013
  %v1021 = vpack.c.bf16 %v1020, %v1017
  %1023 = vrot.lane.b32.xlu0 %v1021, 112
  %v1024 = vpop.permute.xlu0 %1023
  %v1027 = vunpack.c.l.b16 %v89
  %v1028 = vunpack.c.l.b16 %v90
  %v1029 = vpack.c.b16 %v1028, %v1027
  %vm1031 = vcmask 130048
  %v1033 = vsel %vm1031, %v1024, 0
  %1035 = vmatprep.subr.bf16.mxu0 0
  %1036 = vmatpush1.bf16.msra.mxu0 %v1029
  %1037 = vmatprep.subr.bf16.mxu0 0
  %1038 = vmatpush1.bf16.msra.mxu0 0
  %1039 = vmatprep.subr.bf16.mxu0 0
  %1040 = vmatpush1.bf16.msra.mxu0 0
  %1041 = vmatprep.subr.bf16.mxu0 0
  %1042 = vmatpush1.bf16.msra.mxu0 0
  %1043 = vmatprep.subr.bf16.mxu0 0
  %1044 = vmatpush1.bf16.msra.mxu0 0
  %1045 = vmatprep.subr.bf16.mxu0 0
  %1046 = vmatpush1.bf16.msra.mxu0 0
  %1047 = vmatprep.subr.bf16.mxu0 0
  %1048 = vmatpush1.bf16.msra.mxu0 0
  %1049 = vmatprep.subr.bf16.mxu0 0
  %1050 = vmatpush1.bf16.msra.mxu0 0
  %1051 = vmatprep.subr.bf16.mxu0 0
  %1052 = vmatpush1.bf16.msra.mxu0 0
  %1053 = vmatprep.subr.bf16.mxu0 0
  %1054 = vmatpush1.bf16.msra.mxu0 0
  %1055 = vmatprep.subr.bf16.mxu0 0
  %1056 = vmatpush1.bf16.msra.mxu0 0
  %1057 = vmatprep.subr.bf16.mxu0 0
  %1058 = vmatpush1.bf16.msra.mxu0 0
  %1059 = vmatprep.subr.bf16.mxu0 0
  %1060 = vmatpush1.bf16.msra.mxu0 0
  %1061 = vmatprep.subr.bf16.mxu0 0
  %1062 = vmatpush1.bf16.msra.mxu0 0
  %1063 = vmatprep.subr.bf16.mxu0 0
  %1064 = vmatpush1.bf16.msra.mxu0 0
  %1065 = vmatprep.subr.bf16.mxu0 0
  %1066 = vmatpush1.bf16.msra.mxu0 0
  %1067 = vmatprep.mubr.bf16.mxu0 0
  %1068 = vmatmul.mubr.bf16.gmra.mrb[0].mxu0 %v1033
  %v1069 = vpop.f32.mrb[0].mxu0
  %v1070 = vadd.f32 0.0, %v1069
  %v1071 = vpop.f32.mrb[0].mxu0
  %v1072 = vpop.f32.mrb[0].mxu0
  %v1073 = vadd.f32 0.0, %v1072
  %v1074 = vpop.f32.mrb[0].mxu0
  %1075 = vdwg.mxu0
  %v1078 = vunpack.c.l.b16 %v87
  %v1079 = vunpack.c.l.b16 %v88
  %v1080 = vpack.c.b16 %v1079, %v1078
  %v1083 = vsel %vm1031, %v1003, 0
  %1085 = vmatprep.subr.bf16.mxu0 0
  %1086 = vmatpush1.bf16.msra.mxu0 %v1080
  %1087 = vmatprep.subr.bf16.mxu0 0
  %1088 = vmatpush1.bf16.msra.mxu0 0
  %1089 = vmatprep.subr.bf16.mxu0 0
  %1090 = vmatpush1.bf16.msra.mxu0 0
  %1091 = vmatprep.subr.bf16.mxu0 0
  %1092 = vmatpush1.bf16.msra.mxu0 0
  %1093 = vmatprep.subr.bf16.mxu0 0
  %1094 = vmatpush1.bf16.msra.mxu0 0
  %1095 = vmatprep.subr.bf16.mxu0 0
  %1096 = vmatpush1.bf16.msra.mxu0 0
  %1097 = vmatprep.subr.bf16.mxu0 0
  %1098 = vmatpush1.bf16.msra.mxu0 0
  %1099 = vmatprep.subr.bf16.mxu0 0
  %1100 = vmatpush1.bf16.msra.mxu0 0
  %1101 = vmatprep.subr.bf16.mxu0 0
  %1102 = vmatpush1.bf16.msra.mxu0 0
  %1103 = vmatprep.subr.bf16.mxu0 0
  %1104 = vmatpush1.bf16.msra.mxu0 0
  %1105 = vmatprep.subr.bf16.mxu0 0
  %1106 = vmatpush1.bf16.msra.mxu0 0
  %1107 = vmatprep.subr.bf16.mxu0 0
  %1108 = vmatpush1.bf16.msra.mxu0 0
  %1109 = vmatprep.subr.bf16.mxu0 0
  %1110 = vmatpush1.bf16.msra.mxu0 0
  %1111 = vmatprep.subr.bf16.mxu0 0
  %1112 = vmatpush1.bf16.msra.mxu0 0
  %1113 = vmatprep.subr.bf16.mxu0 0
  %1114 = vmatpush1.bf16.msra.mxu0 0
  %1115 = vmatprep.subr.bf16.mxu0 0
  %1116 = vmatpush1.bf16.msra.mxu0 0
  %1117 = vmatprep.mubr.bf16.mxu0 0
  %1118 = vmatmul.mubr.bf16.gmra.mrb[0].mxu0 %v1083
  %v1119 = vpop.f32.mrb[0].mxu0
  %v1120 = vadd.f32 %v1070, %v1119
  %v1121 = vpop.f32.mrb[0].mxu0
  %v1122 = vpop.f32.mrb[0].mxu0
  %v1123 = vadd.f32 %v1073, %v1122
  %v1124 = vpop.f32.mrb[0].mxu0
  %1125 = vdwg.mxu0
  %v1127 = vlaneseq
  %v1128 = vshrl.u32 %v1127, 7
  %v1129 = vsub.s32 0, %v1128
  %v1130 = vrot.slane %v91, %v1129
  %v1132 = vadd.f32 %v1120, %v1130
  %v1133 = vadd.f32 %v1123, %v1130
  %1134 = vst [vmem:[%s19] sm:$0xff] %v1132
  %1135 = vst [vmem:[%s19 + $0x8] sm:$0xff] %v1133
  %v1136 = vld [vmem:[%s9] sm:$0xf]
  %v1137 = vld [vmem:[%s9 + $0x4] sm:$0xf]
  %v1138 = vld [vmem:[%s9 + $0x8] sm:$0xf]
  %v1139 = vld [vmem:[%s9 + $0xc] sm:$0xf]
  %v1140 = vld [vmem:[%s9 + $0x10] sm:$0xf]
  %v1141 = vld [vmem:[%s9 + $0x14] sm:$0xf]
  %v1142 = vpack.c.bf16 %v1133, %v1132
  %v1143 = vld [vmem:[%s10] sm:$0xf]
  %v1144 = vld [vmem:[%s10 + $0x4] sm:$0xf]
  %v1145 = vld [vmem:[%s10 + $0x8] sm:$0xf]
  %v1146 = vld [vmem:[%s10 + $0xc] sm:$0xf]
  %v1147 = vld [vmem:[%s10 + $0x10] sm:$0xf]
  %v1148 = vld [vmem:[%s10 + $0x14] sm:$0xf]
  %v1149 = vld [vmem:[%s10 + $0x18] sm:$0xf]
  %v1150 = vld [vmem:[%s10 + $0x1c] sm:$0xf]
  %v1151 = vld [vmem:[%s10 + $0x20] sm:$0xf]
  %v1152 = vld [vmem:[%s10 + $0x24] sm:$0xf]
  %v1153 = vld [vmem:[%s10 + $0x28] sm:$0xf]
  %v1154 = vld [vmem:[%s10 + $0x2c] sm:$0xf]
  %v1155 = vld [vmem:[%s10 + $0x30] sm:$0xf]
  %v1156 = vld [vmem:[%s10 + $0x34] sm:$0xf]
  %v1157 = vld [vmem:[%s10 + $0x38] sm:$0xf]
  %v1158 = vld [vmem:[%s10 + $0x3c] sm:$0xf]
  %v1175 = vunpack.c.l.b16 %v1143
  %v1176 = vunpack.c.l.b16 %v1144
  %v1177 = vunpack.c.l.b16 %v1145
  %v1178 = vunpack.c.l.b16 %v1146
  %v1179 = vunpack.c.l.b16 %v1147
  %v1180 = vunpack.c.l.b16 %v1148
  %v1181 = vunpack.c.l.b16 %v1149
  %v1182 = vunpack.c.l.b16 %v1150
  %v1183 = vunpack.c.l.b16 %v1151
  %v1184 = vunpack.c.l.b16 %v1152
  %v1185 = vunpack.c.l.b16 %v1153
  %v1186 = vunpack.c.l.b16 %v1154
  %v1187 = vunpack.c.l.b16 %v1155
  %v1188 = vunpack.c.l.b16 %v1156
  %v1189 = vunpack.c.l.b16 %v1157
  %v1190 = vunpack.c.l.b16 %v1158
  %v1191 = vpack.c.b16 %v1176, %v1175
  %v1192 = vpack.c.b16 %v1178, %v1177
  %v1193 = vpack.c.b16 %v1180, %v1179
  %v1194 = vpack.c.b16 %v1182, %v1181
  %v1195 = vpack.c.b16 %v1184, %v1183
  %v1196 = vpack.c.b16 %v1186, %v1185
  %v1197 = vpack.c.b16 %v1188, %v1187
  %v1198 = vpack.c.b16 %v1190, %v1189
  %1207 = vmatprep.subr.bf16.mxu0 0
  %1208 = vmatpush1.bf16.msra.mxu0 %v1191
  %1209 = vmatprep.subr.bf16.mxu0 0
  %1210 = vmatpush1.bf16.msra.mxu0 %v1192
  %1211 = vmatprep.subr.bf16.mxu0 0
  %1212 = vmatpush1.bf16.msra.mxu0 %v1193
  %1213 = vmatprep.subr.bf16.mxu0 0
  %1214 = vmatpush1.bf16.msra.mxu0 %v1194
  %1215 = vmatprep.subr.bf16.mxu0 0
  %1216 = vmatpush1.bf16.msra.mxu0 %v1195
  %1217 = vmatprep.subr.bf16.mxu0 0
  %1218 = vmatpush1.bf16.msra.mxu0 %v1196
  %1219 = vmatprep.subr.bf16.mxu0 0
  %1220 = vmatpush1.bf16.msra.mxu0 %v1197
  %1221 = vmatprep.subr.bf16.mxu0 0
  %1222 = vmatpush1.bf16.msra.mxu0 %v1198
  %1223 = vmatprep.subr.bf16.mxu0 0
  %1224 = vmatpush1.bf16.msra.mxu0 0
  %1225 = vmatprep.subr.bf16.mxu0 0
  %1226 = vmatpush1.bf16.msra.mxu0 0
  %1227 = vmatprep.subr.bf16.mxu0 0
  %1228 = vmatpush1.bf16.msra.mxu0 0
  %1229 = vmatprep.subr.bf16.mxu0 0
  %1230 = vmatpush1.bf16.msra.mxu0 0
  %1231 = vmatprep.subr.bf16.mxu0 0
  %1232 = vmatpush1.bf16.msra.mxu0 0
  %1233 = vmatprep.subr.bf16.mxu0 0
  %1234 = vmatpush1.bf16.msra.mxu0 0
  %1235 = vmatprep.subr.bf16.mxu0 0
  %1236 = vmatpush1.bf16.msra.mxu0 0
  %1237 = vmatprep.subr.bf16.mxu0 0
  %1238 = vmatpush1.bf16.msra.mxu0 0
  %1239 = vmatprep.mubr.bf16.mxu0 0
  %1240 = vmatmul.mubr.bf16.gmra.mrb[0].mxu0 %v1142
  %v1241 = vpop.f32.mrb[0].mxu0
  %v1242 = vadd.f32 0.0, %v1241
  %v1243 = vpop.f32.mrb[0].mxu0
  %v1244 = vpop.f32.mrb[0].mxu0
  %v1245 = vadd.f32 0.0, %v1244
  %v1246 = vpop.f32.mrb[0].mxu0
  %1247 = vdwg.mxu0
  %v1254 = vunpack.c.l.b16 %v1136
  %v1255 = vunpack.c.l.b16 %v1137
  %v1256 = vunpack.c.l.b16 %v1138
  %v1257 = vunpack.c.l.b16 %v1139
  %v1258 = vunpack.c.l.b16 %v1140
  %v1259 = vunpack.c.l.b16 %v1141
  %v1260 = vpack.c.b16 %v1255, %v1254
  %v1261 = vpack.c.b16 %v1257, %v1256
  %v1262 = vpack.c.b16 %v1259, %v1258
  %1266 = vmatprep.subr.bf16.mxu0 0
  %1267 = vmatpush1.bf16.msra.mxu0 %v1260
  %1268 = vmatprep.subr.bf16.mxu0 0
  %1269 = vmatpush1.bf16.msra.mxu0 %v1261
  %1270 = vmatprep.subr.bf16.mxu0 0
  %1271 = vmatpush1.bf16.msra.mxu0 %v1262
  %1272 = vmatprep.subr.bf16.mxu0 0
  %1273 = vmatpush1.bf16.msra.mxu0 0
  %1274 = vmatprep.subr.bf16.mxu0 0
  %1275 = vmatpush1.bf16.msra.mxu0 0
  %1276 = vmatprep.subr.bf16.mxu0 0
  %1277 = vmatpush1.bf16.msra.mxu0 0
  %1278 = vmatprep.subr.bf16.mxu0 0
  %1279 = vmatpush1.bf16.msra.mxu0 0
  %1280 = vmatprep.subr.bf16.mxu0 0
  %1281 = vmatpush1.bf16.msra.mxu0 0
  %1282 = vmatprep.subr.bf16.mxu0 0
  %1283 = vmatpush1.bf16.msra.mxu0 0
  %1284 = vmatprep.subr.bf16.mxu0 0
  %1285 = vmatpush1.bf16.msra.mxu0 0
  %1286 = vmatprep.subr.bf16.mxu0 0
  %1287 = vmatpush1.bf16.msra.mxu0 0
  %1288 = vmatprep.subr.bf16.mxu0 0
  %1289 = vmatpush1.bf16.msra.mxu0 0
  %1290 = vmatprep.subr.bf16.mxu0 0
  %1291 = vmatpush1.bf16.msra.mxu0 0
  %1292 = vmatprep.subr.bf16.mxu0 0
  %1293 = vmatpush1.bf16.msra.mxu0 0
  %1294 = vmatprep.subr.bf16.mxu0 0
  %1295 = vmatpush1.bf16.msra.mxu0 0
  %1296 = vmatprep.subr.bf16.mxu0 0
  %1297 = vmatpush1.bf16.msra.mxu0 0
  %1298 = vmatprep.mubr.bf16.mxu0 0
  %1299 = vmatmul.mubr.bf16.gmra.mrb[0].mxu0 %v118
  %v1300 = vpop.f32.mrb[0].mxu0
  %v1301 = vadd.f32 %v1242, %v1300
  %v1302 = vpop.f32.mrb[0].mxu0
  %v1303 = vpop.f32.mrb[0].mxu0
  %v1304 = vadd.f32 %v1245, %v1303
  %v1305 = vpop.f32.mrb[0].mxu0
  %1306 = vdwg.mxu0
  %v1307 = vld [vmem:[%s11] sm:$0x1]
  %v1309 = vlaneseq
  %v1310 = vshrl.u32 %v1309, 7
  %v1311 = vsub.s32 0, %v1310
  %v1312 = vrot.slane %v1307, %v1311
  %v1314 = vadd.f32 %v1301, %v1312
  %v1315 = vadd.f32 %v1304, %v1312
  %v1316 = vmax.f32 %v1314, 0.0
  %v1317 = vmax.f32 %v1315, 0.0
  %v1318 = vpack.c.bf16 %v1317, %v1316
  %v1319 = vld [vmem:[%s12] sm:$0xf]
  %v1320 = vld [vmem:[%s12 + $0x4] sm:$0xf]
  %v1321 = vld [vmem:[%s12 + $0x8] sm:$0xf]
  %v1322 = vld [vmem:[%s12 + $0xc] sm:$0xf]
  %v1323 = vld [vmem:[%s12 + $0x10] sm:$0xf]
  %v1324 = vld [vmem:[%s12 + $0x14] sm:$0xf]
  %v1325 = vld [vmem:[%s13] sm:$0xf]
  %v1326 = vld [vmem:[%s13 + $0x4] sm:$0xf]
  %v1327 = vld [vmem:[%s13 + $0x8] sm:$0xf]
  %v1328 = vld [vmem:[%s13 + $0xc] sm:$0xf]
  %v1329 = vld [vmem:[%s13 + $0x10] sm:$0xf]
  %v1330 = vld [vmem:[%s13 + $0x14] sm:$0xf]
  %v1331 = vld [vmem:[%s14] sm:$0x1]
  %v1332 = vld [vmem:[%s15] sm:$0xf]
  %v1333 = vld [vmem:[%s15 + $0x4] sm:$0xf]
  %v1334 = vld [vmem:[%s15 + $0x8] sm:$0xf]
  %v1335 = vld [vmem:[%s15 + $0xc] sm:$0xf]
  %v1336 = vld [vmem:[%s16] sm:$0xf]
  %v1337 = vld [vmem:[%s16 + $0x4] sm:$0xf]
  %v1338 = vld [vmem:[%s17] sm:$0xf]
  %v1339 = vld [vmem:[%s17 + $0x4] sm:$0xf]
  %v1340 = vld [vmem:[%s18] sm:$0x1]
  %v1342 = vlaneseq
  %v1343 = vshrl.u32 %v1342, 7
  %v1344 = vsub.s32 0, %v1343
  %v1345 = vrot.slane %v1331, %v1344
  %v1353 = vunpack.c.l.b16 %v1319
  %v1354 = vunpack.c.l.b16 %v1320
  %v1355 = vunpack.c.l.b16 %v1321
  %v1356 = vunpack.c.l.b16 %v1322
  %v1357 = vunpack.c.l.b16 %v1323
  %v1358 = vunpack.c.l.b16 %v1324
  %v1359 = vpack.c.b16 %v1354, %v1353
  %v1360 = vpack.c.b16 %v1356, %v1355
  %v1361 = vpack.c.b16 %v1358, %v1357
  %v1366 = vsel %vm116, %v1318, 0
  %1368 = vmatprep.subr.bf16.mxu0 0
  %1369 = vmatpush1.bf16.msra.mxu0 %v1359
  %1370 = vmatprep.subr.bf16.mxu0 0
  %1371 = vmatpush1.bf16.msra.mxu0 %v1360
  %1372 = vmatprep.subr.bf16.mxu0 0
  %1373 = vmatpush1.bf16.msra.mxu0 %v1361
  %1374 = vmatprep.subr.bf16.mxu0 0
  %1375 = vmatpush1.bf16.msra.mxu0 0
  %1376 = vmatprep.subr.bf16.mxu0 0
  %1377 = vmatpush1.bf16.msra.mxu0 0
  %1378 = vmatprep.subr.bf16.mxu0 0
  %1379 = vmatpush1.bf16.msra.mxu0 0
  %1380 = vmatprep.subr.bf16.mxu0 0
  %1381 = vmatpush1.bf16.msra.mxu0 0
  %1382 = vmatprep.subr.bf16.mxu0 0
  %1383 = vmatpush1.bf16.msra.mxu0 0
  %1384 = vmatprep.subr.bf16.mxu0 0
  %1385 = vmatpush1.bf16.msra.mxu0 0
  %1386 = vmatprep.subr.bf16.mxu0 0
  %1387 = vmatpush1.bf16.msra.mxu0 0
  %1388 = vmatprep.subr.bf16.mxu0 0
  %1389 = vmatpush1.bf16.msra.mxu0 0
  %1390 = vmatprep.subr.bf16.mxu0 0
  %1391 = vmatpush1.bf16.msra.mxu0 0
  %1392 = vmatprep.subr.bf16.mxu0 0
  %1393 = vmatpush1.bf16.msra.mxu0 0
  %1394 = vmatprep.subr.bf16.mxu0 0
  %1395 = vmatpush1.bf16.msra.mxu0 0
  %1396 = vmatprep.subr.bf16.mxu0 0
  %1397 = vmatpush1.bf16.msra.mxu0 0
  %1398 = vmatprep.subr.bf16.mxu0 0
  %1399 = vmatpush1.bf16.msra.mxu0 0
  %1400 = vmatprep.mubr.bf16.mxu0 0
  %1401 = vmatmul.mubr.bf16.gmra.mrb[0].mxu0 %v1366
  %v1402 = vpop.f32.mrb[0].mxu0
  %v1403 = vadd.f32 %v1345, %v1402
  %v1404 = vpop.f32.mrb[0].mxu0
  %v1405 = vpop.f32.mrb[0].mxu0
  %v1406 = vadd.f32 %v1345, %v1405
  %v1407 = vpop.f32.mrb[0].mxu0
  %1408 = vdwg.mxu0
  %v1415 = vunpack.c.l.b16 %v1325
  %v1416 = vunpack.c.l.b16 %v1326
  %v1417 = vunpack.c.l.b16 %v1327
  %v1418 = vunpack.c.l.b16 %v1328
  %v1419 = vunpack.c.l.b16 %v1329
  %v1420 = vunpack.c.l.b16 %v1330
  %v1421 = vpack.c.b16 %v1416, %v1415
  %v1422 = vpack.c.b16 %v1418, %v1417
  %v1423 = vpack.c.b16 %v1420, %v1419
  %1427 = vmatprep.subr.bf16.mxu0 0
  %1428 = vmatpush1.bf16.msra.mxu0 %v1421
  %1429 = vmatprep.subr.bf16.mxu0 0
  %1430 = vmatpush1.bf16.msra.mxu0 %v1422
  %1431 = vmatprep.subr.bf16.mxu0 0
  %1432 = vmatpush1.bf16.msra.mxu0 %v1423
  %1433 = vmatprep.subr.bf16.mxu0 0
  %1434 = vmatpush1.bf16.msra.mxu0 0
  %1435 = vmatprep.subr.bf16.mxu0 0
  %1436 = vmatpush1.bf16.msra.mxu0 0
  %1437 = vmatprep.subr.bf16.mxu0 0
  %1438 = vmatpush1.bf16.msra.mxu0 0
  %1439 = vmatprep.subr.bf16.mxu0 0
  %1440 = vmatpush1.bf16.msra.mxu0 0
  %1441 = vmatprep.subr.bf16.mxu0 0
  %1442 = vmatpush1.bf16.msra.mxu0 0
  %1443 = vmatprep.subr.bf16.mxu0 0
  %1444 = vmatpush1.bf16.msra.mxu0 0
  %1445 = vmatprep.subr.bf16.mxu0 0
  %1446 = vmatpush1.bf16.msra.mxu0 0
  %1447 = vmatprep.subr.bf16.mxu0 0
  %1448 = vmatpush1.bf16.msra.mxu0 0
  %1449 = vmatprep.subr.bf16.mxu0 0
  %1450 = vmatpush1.bf16.msra.mxu0 0
  %1451 = vmatprep.subr.bf16.mxu0 0
  %1452 = vmatpush1.bf16.msra.mxu0 0
  %1453 = vmatprep.subr.bf16.mxu0 0
  %1454 = vmatpush1.bf16.msra.mxu0 0
  %1455 = vmatprep.subr.bf16.mxu0 0
  %1456 = vmatpush1.bf16.msra.mxu0 0
  %1457 = vmatprep.subr.bf16.mxu0 0
  %1458 = vmatpush1.bf16.msra.mxu0 0
  %1459 = vmatprep.mubr.bf16.mxu0 0
  %1460 = vmatmul.mubr.bf16.gmra.mrb[0].mxu0 %v1366
  %v1461 = vpop.f32.mrb[0].mxu0
  %v1462 = vadd.f32 0.0, %v1461
  %v1463 = vpop.f32.mrb[0].mxu0
  %v1464 = vpop.f32.mrb[0].mxu0
  %v1465 = vadd.f32 0.0, %v1464
  %v1466 = vpop.f32.mrb[0].mxu0
  %1467 = vdwg.mxu0
  %v1469 = vrot.slane %v1465, 6
  %v1471 = vadd.f32 %v1403, %v1469
  %v1476 = vunpack.c.l.b16 %v1332
  %v1477 = vunpack.c.l.b16 %v1333
  %v1478 = vunpack.c.l.b16 %v1334
  %v1479 = vunpack.c.l.b16 %v1335
  %v1480 = vpack.c.b16 %v1477, %v1476
  %v1481 = vpack.c.b16 %v1479, %v1478
  %1484 = vmatprep.subr.bf16.mxu0 0
  %1485 = vmatpush1.bf16.msra.mxu0 %v1480
  %1486 = vmatprep.subr.bf16.mxu0 0
  %1487 = vmatpush1.bf16.msra.mxu0 %v1481
  %1488 = vmatprep.subr.bf16.mxu0 0
  %1489 = vmatpush1.bf16.msra.mxu0 0
  %1490 = vmatprep.subr.bf16.mxu0 0
  %1491 = vmatpush1.bf16.msra.mxu0 0
  %1492 = vmatprep.subr.bf16.mxu0 0
  %1493 = vmatpush1.bf16.msra.mxu0 0
  %1494 = vmatprep.subr.bf16.mxu0 0
  %1495 = vmatpush1.bf16.msra.mxu0 0
  %1496 = vmatprep.subr.bf16.mxu0 0
  %1497 = vmatpush1.bf16.msra.mxu0 0
  %1498 = vmatprep.subr.bf16.mxu0 0
  %1499 = vmatpush1.bf16.msra.mxu0 0
  %1500 = vmatprep.subr.bf16.mxu0 0
  %1501 = vmatpush1.bf16.msra.mxu0 0
  %1502 = vmatprep.subr.bf16.mxu0 0
  %1503 = vmatpush1.bf16.msra.mxu0 0
  %1504 = vmatprep.subr.bf16.mxu0 0
  %1505 = vmatpush1.bf16.msra.mxu0 0
  %1506 = vmatprep.subr.bf16.mxu0 0
  %1507 = vmatpush1.bf16.msra.mxu0 0
  %1508 = vmatprep.subr.bf16.mxu0 0
  %1509 = vmatpush1.bf16.msra.mxu0 0
  %1510 = vmatprep.subr.bf16.mxu0 0
  %1511 = vmatpush1.bf16.msra.mxu0 0
  %1512 = vmatprep.subr.bf16.mxu0 0
  %1513 = vmatpush1.bf16.msra.mxu0 0
  %1514 = vmatprep.subr.bf16.mxu0 0
  %1515 = vmatpush1.bf16.msra.mxu0 0
  %1516 = vmatprep.mubr.bf16.mxu0 0
  %1517 = vmatmul.mubr.bf16.gmra.mrb[0].mxu0 %v238
  %v1518 = vpop.f32.mrb[0].mxu0
  %v1519 = vadd.f32 0.0, %v1518
  %v1520 = vpop.f32.mrb[0].mxu0
  %v1521 = vpop.f32.mrb[0].mxu0
  %v1522 = vpop.f32.mrb[0].mxu0
  %1523 = vdwg.mxu0
  %v1524 = vadd.f32 %v1471, %v1519
  %v1525 = vxor.u32 %v1524, 2147483648
  %v1526 = vmul.f32 %v1525, 1.442695
  %v1527 = vpow.pop %v1526
  %v1528 = vadd.f32 %v1527, 1.0
  %v1529 = vrcp.pop %v1528
  %v1530 = vmul.f32 1.0, %v1529
  %v1531 = vtanh.pop %v1524
  %v1532 = vmul.f32 %v1530, 0.0
  %1534 = vrot.lane.b32.xlu0 %v1531, 64
  %v1535 = vpop.permute.xlu0 %1534
  %v1537 = vmul.f32 %v1530, %v1535
  %1539 = vrot.lane.b32.xlu0 %v1537, 32
  %v1540 = vpop.permute.xlu0 %1539
  %v1542 = vadd.f32 %v1532, %v1540
  %v1543 = vtanh.pop %v1542
  %1545 = vrot.lane.b32.xlu0 %v1543, 64
  %v1546 = vpop.permute.xlu0 %1545
  %v1548 = vmul.f32 %v1530, %v1546
  %1550 = vrot.lane.b32.xlu0 %v1548, 32
  %v1551 = vpop.permute.xlu0 %1550
  %v1553 = vmul.f32 %v68, %v1551
  %v1554 = vadd.f32 %v1553, %v311
  %1556 = vrot.lane.b32.xlu0 %v1542, 96
  %v1557 = vpop.permute.xlu0 %1556
  %v1559 = vmul.f32 %v68, %v1557
  %v1560 = vadd.f32 %v1559, %v311
  %v1561 = vrot.slane %v1465, 2
  %v1563 = vadd.f32 %v1403, %v1561
  %v1564 = vpack.c.bf16 %v1554, %v1554
  %v1566 = vsel %vm236, %v1564, 0
  %1568 = vmatprep.subr.bf16.mxu0 0
  %1569 = vmatpush1.bf16.msra.mxu0 %v1480
  %1570 = vmatprep.subr.bf16.mxu0 0
  %1571 = vmatpush1.bf16.msra.mxu0 %v1481
  %1572 = vmatprep.subr.bf16.mxu0 0
  %1573 = vmatpush1.bf16.msra.mxu0 0
  %1574 = vmatprep.subr.bf16.mxu0 0
  %1575 = vmatpush1.bf16.msra.mxu0 0
  %1576 = vmatprep.subr.bf16.mxu0 0
  %1577 = vmatpush1.bf16.msra.mxu0 0
  %1578 = vmatprep.subr.bf16.mxu0 0
  %1579 = vmatpush1.bf16.msra.mxu0 0
  %1580 = vmatprep.subr.bf16.mxu0 0
  %1581 = vmatpush1.bf16.msra.mxu0 0
  %1582 = vmatprep.subr.bf16.mxu0 0
  %1583 = vmatpush1.bf16.msra.mxu0 0
  %1584 = vmatprep.subr.bf16.mxu0 0
  %1585 = vmatpush1.bf16.msra.mxu0 0
  %1586 = vmatprep.subr.bf16.mxu0 0
  %1587 = vmatpush1.bf16.msra.mxu0 0
  %1588 = vmatprep.subr.bf16.mxu0 0
  %1589 = vmatpush1.bf16.msra.mxu0 0
  %1590 = vmatprep.subr.bf16.mxu0 0
  %1591 = vmatpush1.bf16.msra.mxu0 0
  %1592 = vmatprep.subr.bf16.mxu0 0
  %1593 = vmatpush1.bf16.msra.mxu0 0
  %1594 = vmatprep.subr.bf16.mxu0 0
  %1595 = vmatpush1.bf16.msra.mxu0 0
  %1596 = vmatprep.subr.bf16.mxu0 0
  %1597 = vmatpush1.bf16.msra.mxu0 0
  %1598 = vmatprep.subr.bf16.mxu0 0
  %1599 = vmatpush1.bf16.msra.mxu0 0
  %1600 = vmatprep.mubr.bf16.mxu0 0
  %1601 = vmatmul.mubr.bf16.gmra.mrb[0].mxu0 %v1566
  %v1602 = vpop.f32.mrb[0].mxu0
  %v1603 = vadd.f32 0.0, %v1602
  %v1604 = vpop.f32.mrb[0].mxu0
  %v1605 = vpop.f32.mrb[0].mxu0
  %v1606 = vpop.f32.mrb[0].mxu0
  %1607 = vdwg.mxu0
  %v1609 = vrot.slane %v1603, 6
  %v1611 = vadd.f32 %v1563, %v1609
  %v1612 = vxor.u32 %v1611, 2147483648
  %v1613 = vmul.f32 %v1612, 1.442695
  %v1614 = vpow.pop %v1613
  %v1615 = vadd.f32 %v1614, 1.0
  %v1616 = vrcp.pop %v1615
  %v1617 = vmul.f32 1.0, %v1616
  %v1618 = vtanh.pop %v1611
  %v1620 = vrot.slane %v1560, 6
  %1621 = vrot.lane.b32.xlu0 %v1620, 32
  %v1622 = vpop.permute.xlu0 %1621
  %v1624 = vmul.f32 %v1617, %v1622
  %1626 = vrot.lane.b32.xlu0 %v1618, 64
  %v1627 = vpop.permute.xlu0 %1626
  %v1629 = vmul.f32 %v1617, %v1627
  %1631 = vrot.lane.b32.xlu0 %v1629, 32
  %v1632 = vpop.permute.xlu0 %1631
  %v1634 = vadd.f32 %v1624, %v1632
  %v1635 = vtanh.pop %v1634
  %1637 = vrot.lane.b32.xlu0 %v1635, 64
  %v1638 = vpop.permute.xlu0 %1637
  %v1640 = vmul.f32 %v1617, %v1638
  %1642 = vrot.lane.b32.xlu0 %v1640, 32
  %v1643 = vpop.permute.xlu0 %1642
  %v1645 = vmul.f32 %v68, %v1643
  %v1647 = vrot.slane %v1554, 6
  %v1649 = vmul.f32 %v310, %v1647
  %v1650 = vadd.f32 %v1645, %v1649
  %1652 = vrot.lane.b32.xlu0 %v1634, 96
  %v1653 = vpop.permute.xlu0 %1652
  %v1655 = vmul.f32 %v68, %v1653
  %v1657 = vmul.f32 %v310, %v1620
  %v1658 = vadd.f32 %v1655, %v1657
  %v1659 = vpack.c.bf16 %v1650, %v1650
  %v1661 = vrot.slane %v1659, 1
  %v1663 = vsel %vm236, %v1661, 0
  %1665 = vmatprep.subr.bf16.mxu0 0
  %1666 = vmatpush1.bf16.msra.mxu0 %v1480
  %1667 = vmatprep.subr.bf16.mxu0 0
  %1668 = vmatpush1.bf16.msra.mxu0 %v1481
  %1669 = vmatprep.subr.bf16.mxu0 0
  %1670 = vmatpush1.bf16.msra.mxu0 0
  %1671 = vmatprep.subr.bf16.mxu0 0
  %1672 = vmatpush1.bf16.msra.mxu0 0
  %1673 = vmatprep.subr.bf16.mxu0 0
  %1674 = vmatpush1.bf16.msra.mxu0 0
  %1675 = vmatprep.subr.bf16.mxu0 0
  %1676 = vmatpush1.bf16.msra.mxu0 0
  %1677 = vmatprep.subr.bf16.mxu0 0
  %1678 = vmatpush1.bf16.msra.mxu0 0
  %1679 = vmatprep.subr.bf16.mxu0 0
  %1680 = vmatpush1.bf16.msra.mxu0 0
  %1681 = vmatprep.subr.bf16.mxu0 0
  %1682 = vmatpush1.bf16.msra.mxu0 0
  %1683 = vmatprep.subr.bf16.mxu0 0
  %1684 = vmatpush1.bf16.msra.mxu0 0
  %1685 = vmatprep.subr.bf16.mxu0 0
  %1686 = vmatpush1.bf16.msra.mxu0 0
  %1687 = vmatprep.subr.bf16.mxu0 0
  %1688 = vmatpush1.bf16.msra.mxu0 0
  %1689 = vmatprep.subr.bf16.mxu0 0
  %1690 = vmatpush1.bf16.msra.mxu0 0
  %1691 = vmatprep.subr.bf16.mxu0 0
  %1692 = vmatpush1.bf16.msra.mxu0 0
  %1693 = vmatprep.subr.bf16.mxu0 0
  %1694 = vmatpush1.bf16.msra.mxu0 0
  %1695 = vmatprep.subr.bf16.mxu0 0
  %1696 = vmatpush1.bf16.msra.mxu0 0
  %1697 = vmatprep.mubr.bf16.mxu0 0
  %1698 = vmatmul.mubr.bf16.gmra.mrb[0].mxu0 %v1663
  %v1699 = vpop.f32.mrb[0].mxu0
  %v1700 = vadd.f32 0.0, %v1699
  %v1701 = vpop.f32.mrb[0].mxu0
  %v1702 = vpop.f32.mrb[0].mxu0
  %v1703 = vpop.f32.mrb[0].mxu0
  %1704 = vdwg.mxu0
  %v1706 = vrot.slane %v1700, 4
  %v1708 = vadd.f32 %v1471, %v1706
  %v1709 = vxor.u32 %v1708, 2147483648
  %v1710 = vmul.f32 %v1709, 1.442695
  %v1711 = vpow.pop %v1710
  %v1712 = vadd.f32 %v1711, 1.0
  %v1713 = vrcp.pop %v1712
  %v1714 = vmul.f32 1.0, %v1713
  %v1715 = vtanh.pop %v1708
  %v1717 = vrot.slane %v1658, 6
  %1718 = vrot.lane.b32.xlu0 %v1717, 32
  %v1719 = vpop.permute.xlu0 %1718
  %v1721 = vmul.f32 %v1714, %v1719
  %1723 = vrot.lane.b32.xlu0 %v1715, 64
  %v1724 = vpop.permute.xlu0 %1723
  %v1726 = vmul.f32 %v1714, %v1724
  %1728 = vrot.lane.b32.xlu0 %v1726, 32
  %v1729 = vpop.permute.xlu0 %1728
  %v1731 = vadd.f32 %v1721, %v1729
  %v1732 = vtanh.pop %v1731
  %1734 = vrot.lane.b32.xlu0 %v1732, 64
  %v1735 = vpop.permute.xlu0 %1734
  %v1737 = vmul.f32 %v1714, %v1735
  %1739 = vrot.lane.b32.xlu0 %v1737, 32
  %v1740 = vpop.permute.xlu0 %1739
  %v1742 = vmul.f32 %v68, %v1740
  %v1744 = vrot.slane %v1650, 6
  %v1746 = vmul.f32 %v310, %v1744
  %v1747 = vadd.f32 %v1742, %v1746
  %1749 = vrot.lane.b32.xlu0 %v1731, 96
  %v1750 = vpop.permute.xlu0 %1749
  %v1752 = vmul.f32 %v68, %v1750
  %v1754 = vmul.f32 %v310, %v1717
  %v1755 = vadd.f32 %v1752, %v1754
  %v1756 = vpack.c.bf16 %v1747, %v1747
  %v1758 = vrot.slane %v1756, 2
  %v1760 = vsel %vm236, %v1758, 0
  %1762 = vmatprep.subr.bf16.mxu0 0
  %1763 = vmatpush1.bf16.msra.mxu0 %v1480
  %1764 = vmatprep.subr.bf16.mxu0 0
  %1765 = vmatpush1.bf16.msra.mxu0 %v1481
  %1766 = vmatprep.subr.bf16.mxu0 0
  %1767 = vmatpush1.bf16.msra.mxu0 0
  %1768 = vmatprep.subr.bf16.mxu0 0
  %1769 = vmatpush1.bf16.msra.mxu0 0
  %1770 = vmatprep.subr.bf16.mxu0 0
  %1771 = vmatpush1.bf16.msra.mxu0 0
  %1772 = vmatprep.subr.bf16.mxu0 0
  %1773 = vmatpush1.bf16.msra.mxu0 0
  %1774 = vmatprep.subr.bf16.mxu0 0
  %1775 = vmatpush1.bf16.msra.mxu0 0
  %1776 = vmatprep.subr.bf16.mxu0 0
  %1777 = vmatpush1.bf16.msra.mxu0 0
  %1778 = vmatprep.subr.bf16.mxu0 0
  %1779 = vmatpush1.bf16.msra.mxu0 0
  %1780 = vmatprep.subr.bf16.mxu0 0
  %1781 = vmatpush1.bf16.msra.mxu0 0
  %1782 = vmatprep.subr.bf16.mxu0 0
  %1783 = vmatpush1.bf16.msra.mxu0 0
  %1784 = vmatprep.subr.bf16.mxu0 0
  %1785 = vmatpush1.bf16.msra.mxu0 0
  %1786 = vmatprep.subr.bf16.mxu0 0
  %1787 = vmatpush1.bf16.msra.mxu0 0
  %1788 = vmatprep.subr.bf16.mxu0 0
  %1789 = vmatpush1.bf16.msra.mxu0 0
  %1790 = vmatprep.subr.bf16.mxu0 0
  %1791 = vmatpush1.bf16.msra.mxu0 0
  %1792 = vmatprep.subr.bf16.mxu0 0
  %1793 = vmatpush1.bf16.msra.mxu0 0
  %1794 = vmatprep.mubr.bf16.mxu0 0
  %1795 = vmatmul.mubr.bf16.gmra.mrb[0].mxu0 %v1760
  %v1796 = vpop.f32.mrb[0].mxu0
  %v1797 = vadd.f32 0.0, %v1796
  %v1798 = vpop.f32.mrb[0].mxu0
  %v1799 = vpop.f32.mrb[0].mxu0
  %v1800 = vpop.f32.mrb[0].mxu0
  %1801 = vdwg.mxu0
  %v1803 = vrot.slane %v1797, 2
  %v1805 = vadd.f32 %v1563, %v1803
  %v1806 = vxor.u32 %v1805, 2147483648
  %v1807 = vmul.f32 %v1806, 1.442695
  %v1808 = vpow.pop %v1807
  %v1809 = vadd.f32 %v1808, 1.0
  %v1810 = vrcp.pop %v1809
  %v1811 = vmul.f32 1.0, %v1810
  %v1812 = vtanh.pop %v1805
  %v1814 = vrot.slane %v1755, 6
  %1815 = vrot.lane.b32.xlu0 %v1814, 32
  %v1816 = vpop.permute.xlu0 %1815
  %v1818 = vmul.f32 %v1811, %v1816
  %1820 = vrot.lane.b32.xlu0 %v1812, 64
  %v1821 = vpop.permute.xlu0 %1820
  %v1823 = vmul.f32 %v1811, %v1821
  %1825 = vrot.lane.b32.xlu0 %v1823, 32
  %v1826 = vpop.permute.xlu0 %1825
  %v1828 = vadd.f32 %v1818, %v1826
  %v1829 = vtanh.pop %v1828
  %1831 = vrot.lane.b32.xlu0 %v1829, 64
  %v1832 = vpop.permute.xlu0 %1831
  %v1834 = vmul.f32 %v1811, %v1832
  %1836 = vrot.lane.b32.xlu0 %v1834, 32
  %v1837 = vpop.permute.xlu0 %1836
  %v1839 = vmul.f32 %v68, %v1837
  %v1841 = vrot.slane %v1747, 6
  %v1843 = vmul.f32 %v310, %v1841
  %v1844 = vadd.f32 %v1839, %v1843
  %1846 = vrot.lane.b32.xlu0 %v1828, 96
  %v1847 = vpop.permute.xlu0 %1846
  %v1849 = vmul.f32 %v68, %v1847
  %v1851 = vmul.f32 %v310, %v1814
  %v1852 = vadd.f32 %v1849, %v1851
  %v1854 = vrot.slane %v1462, 6
  %v1856 = vadd.f32 %v1406, %v1854
  %v1857 = vpack.c.bf16 %v1844, %v1844
  %v1859 = vrot.slane %v1857, 3
  %v1861 = vsel %vm236, %v1859, 0
  %1863 = vmatprep.subr.bf16.mxu0 0
  %1864 = vmatpush1.bf16.msra.mxu0 %v1480
  %1865 = vmatprep.subr.bf16.mxu0 0
  %1866 = vmatpush1.bf16.msra.mxu0 %v1481
  %1867 = vmatprep.subr.bf16.mxu0 0
  %1868 = vmatpush1.bf16.msra.mxu0 0
  %1869 = vmatprep.subr.bf16.mxu0 0
  %1870 = vmatpush1.bf16.msra.mxu0 0
  %1871 = vmatprep.subr.bf16.mxu0 0
  %1872 = vmatpush1.bf16.msra.mxu0 0
  %1873 = vmatprep.subr.bf16.mxu0 0
  %1874 = vmatpush1.bf16.msra.mxu0 0
  %1875 = vmatprep.subr.bf16.mxu0 0
  %1876 = vmatpush1.bf16.msra.mxu0 0
  %1877 = vmatprep.subr.bf16.mxu0 0
  %1878 = vmatpush1.bf16.msra.mxu0 0
  %1879 = vmatprep.subr.bf16.mxu0 0
  %1880 = vmatpush1.bf16.msra.mxu0 0
  %1881 = vmatprep.subr.bf16.mxu0 0
  %1882 = vmatpush1.bf16.msra.mxu0 0
  %1883 = vmatprep.subr.bf16.mxu0 0
  %1884 = vmatpush1.bf16.msra.mxu0 0
  %1885 = vmatprep.subr.bf16.mxu0 0
  %1886 = vmatpush1.bf16.msra.mxu0 0
  %1887 = vmatprep.subr.bf16.mxu0 0
  %1888 = vmatpush1.bf16.msra.mxu0 0
  %1889 = vmatprep.subr.bf16.mxu0 0
  %1890 = vmatpush1.bf16.msra.mxu0 0
  %1891 = vmatprep.subr.bf16.mxu0 0
  %1892 = vmatpush1.bf16.msra.mxu0 0
  %1893 = vmatprep.subr.bf16.mxu0 0
  %1894 = vmatpush1.bf16.msra.mxu0 0
  %1895 = vmatprep.mubr.bf16.mxu0 0
  %1896 = vmatmul.mubr.bf16.gmra.mrb[0].mxu0 %v1861
  %v1897 = vpop.f32.mrb[0].mxu0
  %v1898 = vadd.f32 0.0, %v1897
  %v1899 = vpop.f32.mrb[0].mxu0
  %v1900 = vpop.f32.mrb[0].mxu0
  %v1901 = vpop.f32.mrb[0].mxu0
  %1902 = vdwg.mxu0
  %v1903 = vadd.f32 %v1856, %v1898
  %v1904 = vxor.u32 %v1903, 2147483648
  %v1905 = vmul.f32 %v1904, 1.442695
  %v1906 = vpow.pop %v1905
  %v1907 = vadd.f32 %v1906, 1.0
  %v1908 = vrcp.pop %v1907
  %v1909 = vmul.f32 1.0, %v1908
  %v1910 = vtanh.pop %v1903
  %v1912 = vrot.slane %v1852, 6
  %1913 = vrot.lane.b32.xlu0 %v1912, 32
  %v1914 = vpop.permute.xlu0 %1913
  %v1916 = vmul.f32 %v1909, %v1914
  %1918 = vrot.lane.b32.xlu0 %v1910, 64
  %v1919 = vpop.permute.xlu0 %1918
  %v1921 = vmul.f32 %v1909, %v1919
  %1923 = vrot.lane.b32.xlu0 %v1921, 32
  %v1924 = vpop.permute.xlu0 %1923
  %v1926 = vadd.f32 %v1916, %v1924
  %v1927 = vtanh.pop %v1926
  %1929 = vrot.lane.b32.xlu0 %v1927, 64
  %v1930 = vpop.permute.xlu0 %1929
  %v1932 = vmul.f32 %v1909, %v1930
  %1934 = vrot.lane.b32.xlu0 %v1932, 32
  %v1935 = vpop.permute.xlu0 %1934
  %v1937 = vmul.f32 %v69, %v1935
  %v1939 = vrot.slane %v1844, 6
  %v1941 = vmul.f32 %v696, %v1939
  %v1942 = vadd.f32 %v1937, %v1941
  %1944 = vrot.lane.b32.xlu0 %v1926, 96
  %v1945 = vpop.permute.xlu0 %1944
  %v1947 = vmul.f32 %v69, %v1945
  %v1949 = vmul.f32 %v696, %v1912
  %v1950 = vadd.f32 %v1947, %v1949
  %v1951 = vrot.slane %v1462, 2
  %v1953 = vadd.f32 %v1406, %v1951
  %v1954 = vpack.c.bf16 %v1942, %v1942
  %v1956 = vsel %vm236, %v1954, 0
  %1958 = vmatprep.subr.bf16.mxu0 0
  %1959 = vmatpush1.bf16.msra.mxu0 %v1480
  %1960 = vmatprep.subr.bf16.mxu0 0
  %1961 = vmatpush1.bf16.msra.mxu0 %v1481
  %1962 = vmatprep.subr.bf16.mxu0 0
  %1963 = vmatpush1.bf16.msra.mxu0 0
  %1964 = vmatprep.subr.bf16.mxu0 0
  %1965 = vmatpush1.bf16.msra.mxu0 0
  %1966 = vmatprep.subr.bf16.mxu0 0
  %1967 = vmatpush1.bf16.msra.mxu0 0
  %1968 = vmatprep.subr.bf16.mxu0 0
  %1969 = vmatpush1.bf16.msra.mxu0 0
  %1970 = vmatprep.subr.bf16.mxu0 0
  %1971 = vmatpush1.bf16.msra.mxu0 0
  %1972 = vmatprep.subr.bf16.mxu0 0
  %1973 = vmatpush1.bf16.msra.mxu0 0
  %1974 = vmatprep.subr.bf16.mxu0 0
  %1975 = vmatpush1.bf16.msra.mxu0 0
  %1976 = vmatprep.subr.bf16.mxu0 0
  %1977 = vmatpush1.bf16.msra.mxu0 0
  %1978 = vmatprep.subr.bf16.mxu0 0
  %1979 = vmatpush1.bf16.msra.mxu0 0
  %1980 = vmatprep.subr.bf16.mxu0 0
  %1981 = vmatpush1.bf16.msra.mxu0 0
  %1982 = vmatprep.subr.bf16.mxu0 0
  %1983 = vmatpush1.bf16.msra.mxu0 0
  %1984 = vmatprep.subr.bf16.mxu0 0
  %1985 = vmatpush1.bf16.msra.mxu0 0
  %1986 = vmatprep.subr.bf16.mxu0 0
  %1987 = vmatpush1.bf16.msra.mxu0 0
  %1988 = vmatprep.subr.bf16.mxu0 0
  %1989 = vmatpush1.bf16.msra.mxu0 0
  %1990 = vmatprep.mubr.bf16.mxu0 0
  %1991 = vmatmul.mubr.bf16.gmra.mrb[0].mxu0 %v1956
  %v1992 = vpop.f32.mrb[0].mxu0
  %v1993 = vadd.f32 0.0, %v1992
  %v1994 = vpop.f32.mrb[0].mxu0
  %v1995 = vpop.f32.mrb[0].mxu0
  %v1996 = vpop.f32.mrb[0].mxu0
  %1997 = vdwg.mxu0
  %v1999 = vrot.slane %v1993, 6
  %v2001 = vadd.f32 %v1953, %v1999
  %v2002 = vxor.u32 %v2001, 2147483648
  %v2003 = vmul.f32 %v2002, 1.442695
  %v2004 = vpow.pop %v2003
  %v2005 = vadd.f32 %v2004, 1.0
  %v2006 = vrcp.pop %v2005
  %v2007 = vmul.f32 1.0, %v2006
  %v2008 = vtanh.pop %v2001
  %v2010 = vrot.slane %v1950, 6
  %2011 = vrot.lane.b32.xlu0 %v2010, 32
  %v2012 = vpop.permute.xlu0 %2011
  %v2014 = vmul.f32 %v2007, %v2012
  %2016 = vrot.lane.b32.xlu0 %v2008, 64
  %v2017 = vpop.permute.xlu0 %2016
  %v2019 = vmul.f32 %v2007, %v2017
  %2021 = vrot.lane.b32.xlu0 %v2019, 32
  %v2022 = vpop.permute.xlu0 %2021
  %v2024 = vadd.f32 %v2014, %v2022
  %v2025 = vtanh.pop %v2024
  %2027 = vrot.lane.b32.xlu0 %v2025, 64
  %v2028 = vpop.permute.xlu0 %2027
  %v2030 = vmul.f32 %v2007, %v2028
  %2032 = vrot.lane.b32.xlu0 %v2030, 32
  %v2033 = vpop.permute.xlu0 %2032
  %v2035 = vmul.f32 %v69, %v2033
  %v2037 = vrot.slane %v1942, 6
  %v2039 = vmul.f32 %v696, %v2037
  %v2040 = vadd.f32 %v2035, %v2039
  %2042 = vrot.lane.b32.xlu0 %v2024, 96
  %v2043 = vpop.permute.xlu0 %2042
  %v2045 = vmul.f32 %v69, %v2043
  %v2047 = vmul.f32 %v696, %v2010
  %v2048 = vadd.f32 %v2045, %v2047
  %v2049 = vpack.c.bf16 %v2040, %v2040
  %v2051 = vrot.slane %v2049, 1
  %v2053 = vsel %vm236, %v2051, 0
  %2055 = vmatprep.subr.bf16.mxu0 0
  %2056 = vmatpush1.bf16.msra.mxu0 %v1480
  %2057 = vmatprep.subr.bf16.mxu0 0
  %2058 = vmatpush1.bf16.msra.mxu0 %v1481
  %2059 = vmatprep.subr.bf16.mxu0 0
  %2060 = vmatpush1.bf16.msra.mxu0 0
  %2061 = vmatprep.subr.bf16.mxu0 0
  %2062 = vmatpush1.bf16.msra.mxu0 0
  %2063 = vmatprep.subr.bf16.mxu0 0
  %2064 = vmatpush1.bf16.msra.mxu0 0
  %2065 = vmatprep.subr.bf16.mxu0 0
  %2066 = vmatpush1.bf16.msra.mxu0 0
  %2067 = vmatprep.subr.bf16.mxu0 0
  %2068 = vmatpush1.bf16.msra.mxu0 0
  %2069 = vmatprep.subr.bf16.mxu0 0
  %2070 = vmatpush1.bf16.msra.mxu0 0
  %2071 = vmatprep.subr.bf16.mxu0 0
  %2072 = vmatpush1.bf16.msra.mxu0 0
  %2073 = vmatprep.subr.bf16.mxu0 0
  %2074 = vmatpush1.bf16.msra.mxu0 0
  %2075 = vmatprep.subr.bf16.mxu0 0
  %2076 = vmatpush1.bf16.msra.mxu0 0
  %2077 = vmatprep.subr.bf16.mxu0 0
  %2078 = vmatpush1.bf16.msra.mxu0 0
  %2079 = vmatprep.subr.bf16.mxu0 0
  %2080 = vmatpush1.bf16.msra.mxu0 0
  %2081 = vmatprep.subr.bf16.mxu0 0
  %2082 = vmatpush1.bf16.msra.mxu0 0
  %2083 = vmatprep.subr.bf16.mxu0 0
  %2084 = vmatpush1.bf16.msra.mxu0 0
  %2085 = vmatprep.subr.bf16.mxu0 0
  %2086 = vmatpush1.bf16.msra.mxu0 0
  %2087 = vmatprep.mubr.bf16.mxu0 0
  %2088 = vmatmul.mubr.bf16.gmra.mrb[0].mxu0 %v2053
  %v2089 = vpop.f32.mrb[0].mxu0
  %v2090 = vadd.f32 0.0, %v2089
  %v2091 = vpop.f32.mrb[0].mxu0
  %v2092 = vpop.f32.mrb[0].mxu0
  %v2093 = vpop.f32.mrb[0].mxu0
  %2094 = vdwg.mxu0
  %v2096 = vrot.slane %v2090, 4
  %v2098 = vadd.f32 %v1856, %v2096
  %v2099 = vxor.u32 %v2098, 2147483648
  %v2100 = vmul.f32 %v2099, 1.442695
  %v2101 = vpow.pop %v2100
  %v2102 = vadd.f32 %v2101, 1.0
  %v2103 = vrcp.pop %v2102
  %v2104 = vmul.f32 1.0, %v2103
  %v2105 = vtanh.pop %v2098
  %v2107 = vrot.slane %v2048, 6
  %2108 = vrot.lane.b32.xlu0 %v2107, 32
  %v2109 = vpop.permute.xlu0 %2108
  %v2111 = vmul.f32 %v2104, %v2109
  %2113 = vrot.lane.b32.xlu0 %v2105, 64
  %v2114 = vpop.permute.xlu0 %2113
  %v2116 = vmul.f32 %v2104, %v2114
  %2118 = vrot.lane.b32.xlu0 %v2116, 32
  %v2119 = vpop.permute.xlu0 %2118
  %v2121 = vadd.f32 %v2111, %v2119
  %v2122 = vtanh.pop %v2121
  %2124 = vrot.lane.b32.xlu0 %v2122, 64
  %v2125 = vpop.permute.xlu0 %2124
  %v2127 = vmul.f32 %v2104, %v2125
  %2129 = vrot.lane.b32.xlu0 %v2127, 32
  %v2130 = vpop.permute.xlu0 %2129
  %v2132 = vmul.f32 %v69, %v2130
  %v2134 = vrot.slane %v2040, 6
  %v2136 = vmul.f32 %v696, %v2134
  %v2137 = vadd.f32 %v2132, %v2136
  %2139 = vrot.lane.b32.xlu0 %v2121, 96
  %v2140 = vpop.permute.xlu0 %2139
  %v2142 = vmul.f32 %v69, %v2140
  %v2144 = vmul.f32 %v696, %v2107
  %v2145 = vadd.f32 %v2142, %v2144
  %v2146 = vpack.c.bf16 %v2137, %v2137
  %v2148 = vrot.slane %v2146, 2
  %v2150 = vsel %vm236, %v2148, 0
  %2152 = vmatprep.subr.bf16.mxu0 0
  %2153 = vmatpush1.bf16.msra.mxu0 %v1480
  %2154 = vmatprep.subr.bf16.mxu0 0
  %2155 = vmatpush1.bf16.msra.mxu0 %v1481
  %2156 = vmatprep.subr.bf16.mxu0 0
  %2157 = vmatpush1.bf16.msra.mxu0 0
  %2158 = vmatprep.subr.bf16.mxu0 0
  %2159 = vmatpush1.bf16.msra.mxu0 0
  %2160 = vmatprep.subr.bf16.mxu0 0
  %2161 = vmatpush1.bf16.msra.mxu0 0
  %2162 = vmatprep.subr.bf16.mxu0 0
  %2163 = vmatpush1.bf16.msra.mxu0 0
  %2164 = vmatprep.subr.bf16.mxu0 0
  %2165 = vmatpush1.bf16.msra.mxu0 0
  %2166 = vmatprep.subr.bf16.mxu0 0
  %2167 = vmatpush1.bf16.msra.mxu0 0
  %2168 = vmatprep.subr.bf16.mxu0 0
  %2169 = vmatpush1.bf16.msra.mxu0 0
  %2170 = vmatprep.subr.bf16.mxu0 0
  %2171 = vmatpush1.bf16.msra.mxu0 0
  %2172 = vmatprep.subr.bf16.mxu0 0
  %2173 = vmatpush1.bf16.msra.mxu0 0
  %2174 = vmatprep.subr.bf16.mxu0 0
  %2175 = vmatpush1.bf16.msra.mxu0 0
  %2176 = vmatprep.subr.bf16.mxu0 0
  %2177 = vmatpush1.bf16.msra.mxu0 0
  %2178 = vmatprep.subr.bf16.mxu0 0
  %2179 = vmatpush1.bf16.msra.mxu0 0
  %2180 = vmatprep.subr.bf16.mxu0 0
  %2181 = vmatpush1.bf16.msra.mxu0 0
  %2182 = vmatprep.subr.bf16.mxu0 0
  %2183 = vmatpush1.bf16.msra.mxu0 0
  %2184 = vmatprep.mubr.bf16.mxu0 0
  %2185 = vmatmul.mubr.bf16.gmra.mrb[0].mxu0 %v2150
  %v2186 = vpop.f32.mrb[0].mxu0
  %v2187 = vadd.f32 0.0, %v2186
  %v2188 = vpop.f32.mrb[0].mxu0
  %v2189 = vpop.f32.mrb[0].mxu0
  %v2190 = vpop.f32.mrb[0].mxu0
  %2191 = vdwg.mxu0
  %v2193 = vrot.slane %v2187, 2
  %v2195 = vadd.f32 %v1953, %v2193
  %v2196 = vxor.u32 %v2195, 2147483648
  %v2197 = vmul.f32 %v2196, 1.442695
  %v2198 = vpow.pop %v2197
  %v2199 = vadd.f32 %v2198, 1.0
  %v2200 = vrcp.pop %v2199
  %v2201 = vmul.f32 1.0, %v2200
  %v2202 = vtanh.pop %v2195
  %v2204 = vrot.slane %v2145, 6
  %2205 = vrot.lane.b32.xlu0 %v2204, 32
  %v2206 = vpop.permute.xlu0 %2205
  %v2208 = vmul.f32 %v2201, %v2206
  %2210 = vrot.lane.b32.xlu0 %v2202, 64
  %v2211 = vpop.permute.xlu0 %2210
  %v2213 = vmul.f32 %v2201, %v2211
  %2215 = vrot.lane.b32.xlu0 %v2213, 32
  %v2216 = vpop.permute.xlu0 %2215
  %v2218 = vadd.f32 %v2208, %v2216
  %v2219 = vtanh.pop %v2218
  %2221 = vrot.lane.b32.xlu0 %v2219, 64
  %v2222 = vpop.permute.xlu0 %2221
  %v2224 = vmul.f32 %v2201, %v2222
  %2226 = vrot.lane.b32.xlu0 %v2224, 32
  %v2227 = vpop.permute.xlu0 %2226
  %v2229 = vmul.f32 %v69, %v2227
  %v2231 = vrot.slane %v2137, 6
  %v2233 = vmul.f32 %v696, %v2231
  %v2234 = vadd.f32 %v2229, %v2233
  %v2235 = vsel %vm994, %v1554, %v1650
  %v2236 = vsel %vm996, %v2235, %v1747
  %v2237 = vsel %vm998, %v2236, %v1844
  %v2238 = vsel %vm994, %v1942, %v2040
  %v2239 = vsel %vm996, %v2238, %v2137
  %v2240 = vsel %vm998, %v2239, %v2234
  %v2241 = vpack.c.bf16 %v2240, %v2237
  %v2243 = vrot.slane %v2234, 6
  %v2245 = vrot.slane %v2137, 2
  %v2247 = vrot.slane %v1942, 2
  %v2249 = vrot.slane %v1747, 2
  %v2251 = vrot.slane %v1554, 2
  %v2253 = vsel %vm994, %v2243, %v2245
  %v2254 = vsel %vm996, %v2253, %v2134
  %v2255 = vsel %vm998, %v2254, %v2247
  %v2256 = vsel %vm994, %v1939, %v2249
  %v2257 = vsel %vm996, %v2256, %v1744
  %v2258 = vsel %vm998, %v2257, %v2251
  %v2259 = vpack.c.bf16 %v2258, %v2255
  %2261 = vrot.lane.b32.xlu0 %v2259, 112
  %v2262 = vpop.permute.xlu0 %2261
  %v2265 = vunpack.c.l.b16 %v1338
  %v2266 = vunpack.c.l.b16 %v1339
  %v2267 = vpack.c.b16 %v2266, %v2265
  %v2270 = vsel %vm1031, %v2262, 0
  %2272 = vmatprep.subr.bf16.mxu0 0
  %2273 = vmatpush1.bf16.msra.mxu0 %v2267
  %2274 = vmatprep.subr.bf16.mxu0 0
  %2275 = vmatpush1.bf16.msra.mxu0 0
  %2276 = vmatprep.subr.bf16.mxu0 0
  %2277 = vmatpush1.bf16.msra.mxu0 0
  %2278 = vmatprep.subr.bf16.mxu0 0
  %2279 = vmatpush1.bf16.msra.mxu0 0
  %2280 = vmatprep.subr.bf16.mxu0 0
  %2281 = vmatpush1.bf16.msra.mxu0 0
  %2282 = vmatprep.subr.bf16.mxu0 0
  %2283 = vmatpush1.bf16.msra.mxu0 0
  %2284 = vmatprep.subr.bf16.mxu0 0
  %2285 = vmatpush1.bf16.msra.mxu0 0
  %2286 = vmatprep.subr.bf16.mxu0 0
  %2287 = vmatpush1.bf16.msra.mxu0 0
  %2288 = vmatprep.subr.bf16.mxu0 0
  %2289 = vmatpush1.bf16.msra.mxu0 0
  %2290 = vmatprep.subr.bf16.mxu0 0
  %2291 = vmatpush1.bf16.msra.mxu0 0
  %2292 = vmatprep.subr.bf16.mxu0 0
  %2293 = vmatpush1.bf16.msra.mxu0 0
  %2294 = vmatprep.subr.bf16.mxu0 0
  %2295 = vmatpush1.bf16.msra.mxu0 0
  %2296 = vmatprep.subr.bf16.mxu0 0
  %2297 = vmatpush1.bf16.msra.mxu0 0
  %2298 = vmatprep.subr.bf16.mxu0 0
  %2299 = vmatpush1.bf16.msra.mxu0 0
  %2300 = vmatprep.subr.bf16.mxu0 0
  %2301 = vmatpush1.bf16.msra.mxu0 0
  %2302 = vmatprep.subr.bf16.mxu0 0
  %2303 = vmatpush1.bf16.msra.mxu0 0
  %2304 = vmatprep.mubr.bf16.mxu0 0
  %2305 = vmatmul.mubr.bf16.gmra.mrb[0].mxu0 %v2270
  %v2306 = vpop.f32.mrb[0].mxu0
  %v2307 = vadd.f32 0.0, %v2306
  %v2308 = vpop.f32.mrb[0].mxu0
  %v2309 = vpop.f32.mrb[0].mxu0
  %v2310 = vadd.f32 0.0, %v2309
  %v2311 = vpop.f32.mrb[0].mxu0
  %2312 = vdwg.mxu0
  %v2315 = vunpack.c.l.b16 %v1336
  %v2316 = vunpack.c.l.b16 %v1337
  %v2317 = vpack.c.b16 %v2316, %v2315
  %v2320 = vsel %vm1031, %v2241, 0
  %2322 = vmatprep.subr.bf16.mxu0 0
  %2323 = vmatpush1.bf16.msra.mxu0 %v2317
  %2324 = vmatprep.subr.bf16.mxu0 0
  %2325 = vmatpush1.bf16.msra.mxu0 0
  %2326 = vmatprep.subr.bf16.mxu0 0
  %2327 = vmatpush1.bf16.msra.mxu0 0
  %2328 = vmatprep.subr.bf16.mxu0 0
  %2329 = vmatpush1.bf16.msra.mxu0 0
  %2330 = vmatprep.subr.bf16.mxu0 0
  %2331 = vmatpush1.bf16.msra.mxu0 0
  %2332 = vmatprep.subr.bf16.mxu0 0
  %2333 = vmatpush1.bf16.msra.mxu0 0
  %2334 = vmatprep.subr.bf16.mxu0 0
  %2335 = vmatpush1.bf16.msra.mxu0 0
  %2336 = vmatprep.subr.bf16.mxu0 0
  %2337 = vmatpush1.bf16.msra.mxu0 0
  %2338 = vmatprep.subr.bf16.mxu0 0
  %2339 = vmatpush1.bf16.msra.mxu0 0
  %2340 = vmatprep.subr.bf16.mxu0 0
  %2341 = vmatpush1.bf16.msra.mxu0 0
  %2342 = vmatprep.subr.bf16.mxu0 0
  %2343 = vmatpush1.bf16.msra.mxu0 0
  %2344 = vmatprep.subr.bf16.mxu0 0
  %2345 = vmatpush1.bf16.msra.mxu0 0
  %2346 = vmatprep.subr.bf16.mxu0 0
  %2347 = vmatpush1.bf16.msra.mxu0 0
  %2348 = vmatprep.subr.bf16.mxu0 0
  %2349 = vmatpush1.bf16.msra.mxu0 0
  %2350 = vmatprep.subr.bf16.mxu0 0
  %2351 = vmatpush1.bf16.msra.mxu0 0
  %2352 = vmatprep.subr.bf16.mxu0 0
  %2353 = vmatpush1.bf16.msra.mxu0 0
  %2354 = vmatprep.mubr.bf16.mxu0 0
  %2355 = vmatmul.mubr.bf16.gmra.mrb[0].mxu0 %v2320
  %v2356 = vpop.f32.mrb[0].mxu0
  %v2357 = vadd.f32 %v2307, %v2356
  %v2358 = vpop.f32.mrb[0].mxu0
  %v2359 = vpop.f32.mrb[0].mxu0
  %v2360 = vadd.f32 %v2310, %v2359
  %v2361 = vpop.f32.mrb[0].mxu0
  %2362 = vdwg.mxu0
  %v2364 = vlaneseq
  %v2365 = vshrl.u32 %v2364, 7
  %v2366 = vsub.s32 0, %v2365
  %v2367 = vrot.slane %v1340, %v2366
  %v2369 = vadd.f32 %v2357, %v2367
  %v2370 = vadd.f32 %v2360, %v2367
  %2371 = vst [vmem:[%s20] sm:$0xff] %v2369
  %2372 = vst [vmem:[%s20 + $0x8] sm:$0xff] %v2370
  // Predicated region
  $region78: #{_lambda_.1} parent=0 // pred_check
    _
  $region79: #{_lambda_.1} parent=0 // pred_check_branch
    %2374 = sbr.rel (0) target = $region81
  $region80: #{_lambda_.1} parent=0 // pred_region
    _
  $region81: #{_lambda_.1} parent=0 // pred_fallthru
    _
  // Predicated region
  $region82: #{_lambda_.1} parent=0 // pred_check
    _
  $region83: #{_lambda_.1} parent=0 // pred_check_branch
    %2376 = sbr.rel (0) target = $region85
  $region84: #{_lambda_.1} parent=0 // pred_region
    _
  $region85: #{_lambda_.1} parent=0 // pred_fallthru
    _
  // Predicated region
  $region86: #{_lambda_.1} parent=0 // pred_check
    _
  $region87: #{_lambda_.1} parent=0 // pred_check_branch
    %2378 = sbr.rel (0) target = $region89
  $region88: #{_lambda_.1} parent=0 // pred_region
    _
  $region89: #{_lambda_.1} parent=0 // pred_fallthru
    _
  // Predicated region
  $region90: #{_lambda_.1} parent=0 // pred_check
    _
  $region91: #{_lambda_.1} parent=0 // pred_check_branch
    %2380 = sbr.rel (0) target = $region93
  $region92: #{_lambda_.1} parent=0 // pred_region
    _
  $region93: #{_lambda_.1} parent=0 // pred_fallthru
    _

</llo_original>
